<compile_context>
chip_gen: v5e
topology: v5e:2x2
jax: 0.10.0
libtpu: 0.0.40
codegen_flags: <defaults>
</compile_context>

<pallas_src>
import functools
import math

import jax
import jax.numpy as jnp
import numpy as np
from jax.experimental import pallas as pl
from jax.experimental.pallas import tpu as pltpu


def _round_up(x, m):
    return ((x + m - 1) // m) * m


# ------------------------------------------------------------------ kernel ---
def kan_stack_kernel(*refs, num_layers, spline_order, num_coeff, compute_dtype):
    """Fused forward of the whole KAN stack for one batch tile.

    refs layout (inputs, output, scratch):
      refs[0]                      x_ref      (TB, Ip0)   f32 activations
      refs[1 + 3l .. 3 + 3l]       grid_ref   (n_knots, Ip_l)   f32
                                   inv_ref    (sum_k(n_knots-k), Ip_l) f32
                                   w_ref      ((T+1)*Ip_l, Op_l) compute_dtype
      refs[1 + 3*num_layers]       o_ref      (TB, Op_last) f32
      refs[2 + 3*num_layers ...]   feats_ref  (TB, (T+1)*Ip_l) compute_dtype
    """
    x_ref = refs[0]
    o_ref = refs[1 + 3 * num_layers]
    feats_refs = refs[2 + 3 * num_layers:]

    x = x_ref[...].astype(jnp.float32)                     # (TB, Ip0)

    for layer in range(num_layers):
        g_ref, inv_ref, w_ref = refs[1 + 3 * layer: 4 + 3 * layer]
        feats_ref = feats_refs[layer]

        g = g_ref[...]                                     # (n_knots, Ip)
        inv = inv_ref[...]                                 # (rows, Ip)
        n_knots, i_p = g.shape

        xg = x[None, :, :]                                 # (1, TB, Ip)
        gb = g[:, None, :]                                 # (n_knots, 1, Ip)

        # Order-0 bases: interval indicator (strict `x < right_knot`, same as
        # the PyTorch reference).
        bases = jnp.logical_and(xg >= gb[:-1], xg < gb[1:]).astype(jnp.float32)

        # Cox-de Boor recursion with hoisted reciprocals and the identity
        # right_i = 1 - left_{i+1}: one L slab per level feeds both terms.
        off = 0
        for k in range(1, spline_order + 1):
            nrow = n_knots - k
            inv_k = inv[off:off + nrow][:, None, :]        # (nrow, 1, Ip)
            off += nrow
            L = (xg - gb[:-k]) * inv_k                     # (nrow, TB, Ip)
            bases = L[:-1] * bases[:-1] + (1.0 - L[1:]) * bases[1:]

        # bases: (T, TB, Ip).  Store SiLU(x) and each basis slab straight into
        # the compute-dtype scratch that is the fused matmul operand.
        feats_ref[:, :i_p] = jax.nn.silu(x).astype(compute_dtype)
        for t in range(num_coeff):
            feats_ref[:, (t + 1) * i_p:(t + 2) * i_p] = bases[t].astype(compute_dtype)

        # ONE wide-K MXU matmul: [SiLU(x) | bases_0 | ... | bases_{T-1}] @ W.
        x = jnp.dot(feats_ref[...], w_ref[...],
                    preferred_element_type=jnp.float32)     # (TB, Op) -> next x

    o_ref[...] = x.astype(o_ref.dtype)


# -------------------------------------------------------------- parameters ---
def init_kan_params(key, layers_hidden, grid_size=8, spline_order=4,
                    grid_range=(-1.0, 1.0)):
    """Deterministic synthetic init (shapes match the torch module).

    # TODO(synk): reference init uses kaiming_uniform + lstsq curve2coeff; we
    # use uniform values of comparable scale (forward math is identical).
    """
    h = (grid_range[1] - grid_range[0]) / grid_size
    n_knots = grid_size + 2 * spline_order + 1
    grid_1d = (jnp.arange(-spline_order, grid_size + spline_order + 1,
                          dtype=jnp.float32) * h + grid_range[0])
    params = []
    for (in_f, out_f) in zip(layers_hidden, layers_hidden[1:]):
        key, k1, k2, k3 = jax.random.split(key, 4)
        bound = 1.0 / math.sqrt(in_f)
        base_weight = jax.random.uniform(k1, (out_f, in_f), jnp.float32,
                                         minval=-bound, maxval=bound)
        spline_weight = 0.1 * jax.random.uniform(
            k2, (out_f, in_f, grid_size + spline_order), jnp.float32,
            minval=-1.0, maxval=1.0)
        spline_scaler = jax.random.uniform(k3, (out_f, in_f), jnp.float32,
                                           minval=-bound, maxval=bound)
        grid = jnp.broadcast_to(grid_1d[None, :], (in_f, n_knots))
        params.append(dict(grid=grid, base_weight=base_weight,
                           spline_weight=spline_weight,
                           spline_scaler=spline_scaler))
    return params


def prepare_kan_params(params, *, grid_size, spline_order,
                       compute_dtype=jnp.bfloat16):
    """One-time packing hoisted out of the forward: scaler multiply,
    transposes, base+spline fusion, 128-lane padding, the MXU dtype cast and
    the per-level Cox-de Boor reciprocals."""
    num_coeff = grid_size + spline_order
    prepped = []
    for p in params:
        out_f, in_f = p["base_weight"].shape
        n_knots = p["grid"].shape[1]
        i_pad = _round_up(in_f, 128)
        o_pad = _round_up(out_f, 128)

        scaled = p["spline_weight"] * p["spline_scaler"][:, :, None]   # (O,I,T)
        w_spline = jnp.transpose(scaled, (2, 1, 0))                    # (T,I,O)
        w_base = p["base_weight"].T                                    # (I,O)
        w_stack = jnp.concatenate([w_base[None], w_spline], axis=0)    # (T+1,I,O)
        w_pad = jnp.zeros((num_coeff + 1, i_pad, o_pad), jnp.float32)
        w_pad = w_pad.at[:, :in_f, :out_f].set(w_stack)
        w_fused = w_pad.reshape((num_coeff + 1) * i_pad,
                                o_pad).astype(compute_dtype)

        grid_t = p["grid"].T.astype(jnp.float32)                       # (knots,I)
        if i_pad > in_f:
            # Pad with the real knot vector (NOT zeros): padded lanes see a
            # valid grid, so the recursion can never produce 0/0 NaNs; their
            # weight rows are zero so they never contribute.
            pad = jnp.broadcast_to(grid_t[:, :1], (n_knots, i_pad - in_f))
            grid_t = jnp.concatenate([grid_t, pad], axis=1)

        # Hoisted batch-independent reciprocals: level k uses
        # 1 / (grid[k:] - grid[:-k]), rows = n_knots - k, concatenated.
        inv_rows = [1.0 / (grid_t[k:] - grid_t[:-k])
                    for k in range(1, spline_order + 1)]
        inv_all = jnp.concatenate(inv_rows, axis=0)                    # (rows,I)

        prepped.append(dict(grid_t=grid_t, inv_all=inv_all, w_fused=w_fused,
                            in_features=in_f, out_features=out_f,
                            i_pad=i_pad, o_pad=o_pad))
    return prepped


# ------------------------------------------------------------- tile planning
def _plan_tiles(batch, prepped, num_coeff, compute_dtype):
    """Batch tile + padded batch + explicit vmem limit.

    Per-row model counts (per layer): order-0/recursion bases + L temporaries
    (f32), the compute-dtype feats scratch, plus double-buffered x/out blocks.
    Budget is conservative so the working set fits v7x's 64 MiB physical VMEM
    while v5e/v6e (128 MiB) still get large tiles.
    """
    cbytes = jnp.dtype(compute_dtype).itemsize
    b8 = _round_up(max(batch, 1), 8)

    per_row = 0
    for p in prepped:
        n_knots = p["grid_t"].shape[0]
        i_pad = p["i_pad"]
        per_row += (2 * (n_knots - 1) + 6) * i_pad * 4        # bases + L + misc
        per_row += (num_coeff + 1) * i_pad * cbytes           # feats scratch
        per_row += p["o_pad"] * 4                              # layer output
    per_row += 2 * (prepped[0]["i_pad"] + prepped[-1]["o_pad"]) * 4  # IO dbl-buf

    resident = 0
    for p in prepped:
        resident += 2 * (p["grid_t"].size + p["inv_all"].size) * 4
        resident += 2 * p["w_fused"].size * cbytes

    budget = 20 << 20
    tb = 8
    for cand in (1024, 512, 256, 128, 64, 32, 16, 8):
        if cand <= b8 and cand * per_row <= budget:
            tb = cand
            break
    b_pad = _round_up(b8, tb)
    # v7x megacore: prefer >= 2 grid steps when the padded batch allows it.
    if b_pad // tb == 1 and tb >= 16:
        tb //= 2
    vmem_limit = int(min(48 << 20,
                         max(32 << 20, resident + tb * per_row + (4 << 20))))
    return tb, b_pad, vmem_limit


# ----------------------------------------------------------------- forward ---
def kan_forward(x, prepped, *, grid_size, spline_order):
    """Fused KAN forward: one pallas_call for the whole layer stack."""
    num_layers = len(prepped)
    num_coeff = grid_size + spline_order
    compute_dtype = prepped[0]["w_fused"].dtype

    batch = x.shape[0]
    x2 = x.reshape(batch, -1).astype(jnp.float32)
    in_f0 = prepped[0]["in_features"]
    assert x2.shape[1] == in_f0, (x2.shape, in_f0)
    i_pad0 = prepped[0]["i_pad"]
    o_pad_last = prepped[-1]["o_pad"]
    out_f_last = prepped[-1]["out_features"]

    tb, b_pad, vmem_limit = _plan_tiles(batch, prepped, num_coeff, compute_dtype)
    assert b_pad % tb == 0

    # Pad once: batch rows to the tile multiple, feature lanes to 128.  Padded
    # weight rows/cols are zero so padded lanes stay zero through the stack.
    x_p = jnp.zeros((b_pad, i_pad0), jnp.float32).at[:batch, :in_f0].set(x2)

    operands = [x_p]
    in_specs = [pl.BlockSpec((tb, i_pad0), lambda b: (b, 0))]
    for p in prepped:
        for name in ("grid_t", "inv_all", "w_fused"):
            arr = p[name]
            operands.append(arr)
            in_specs.append(pl.BlockSpec(arr.shape, lambda b: (0, 0)))  # resident

    scratch_shapes = [
        pltpu.VMEM((tb, (num_coeff + 1) * p["i_pad"]), compute_dtype)
        for p in prepped
    ]

    kernel = functools.partial(kan_stack_kernel, num_layers=num_layers,
                               spline_order=spline_order, num_coeff=num_coeff,
                               compute_dtype=compute_dtype)

    out = pl.pallas_call(
        kernel,
        out_shape=jax.ShapeDtypeStruct((b_pad, o_pad_last), jnp.float32),
        grid=(b_pad // tb,),
        in_specs=in_specs,
        out_specs=pl.BlockSpec((tb, o_pad_last), lambda b: (b, 0)),
        scratch_shapes=scratch_shapes,
        compiler_params=pltpu.CompilerParams(
            dimension_semantics=("parallel",),
            vmem_limit_bytes=vmem_limit),
    )(*operands)

    return out[:batch, :out_f_last]


# --------------------------------------------------------- pure-JAX reference
def _ref_kan_linear(x, grid, base_w, spline_w, scaler, grid_size, spline_order,
                    compute_dtype=jnp.float32):
    xg = x[:, :, None]
    g = grid[None, :, :]
    bases = jnp.logical_and(xg >= g[:, :, :-1], xg < g[:, :, 1:]).astype(x.dtype)
    for k in range(1, spline_order + 1):
        left = ((xg - g[:, :, :-(k + 1)]) /
                (g[:, :, k:-1] - g[:, :, :-(k + 1)])) * bases[:, :, :-1]
        right = ((g[:, :, k + 1:] - xg) /
                 (g[:, :, k + 1:] - g[:, :, 1:-k])) * bases[:, :, 1:]
        bases = left + right
    scaled = spline_w * scaler[:, :, None]
    base_out = jnp.dot(jax.nn.silu(x).astype(compute_dtype),
                       base_w.T.astype(compute_dtype),
                       preferred_element_type=jnp.float32)
    spline_out = jnp.dot(bases.reshape(x.shape[0], -1).astype(compute_dtype),
                         scaled.reshape(scaled.shape[0], -1).T.astype(compute_dtype),
                         preferred_element_type=jnp.float32)
    return base_out + spline_out


def _ref_kan_forward(x, params, *, grid_size=8, spline_order=4,
                     compute_dtype=jnp.float32):
    x = x.reshape(x.shape[0], -1).astype(jnp.float32)
    for p in params:
        x = _ref_kan_linear(x, p["grid"], p["base_weight"], p["spline_weight"],
                            p["spline_scaler"], grid_size, spline_order,
                            compute_dtype=compute_dtype)
    return x


# -------------------------------------------------------------------- main ---
if __name__ == "__main__":
    key = jax.random.PRNGKey(0)
    k_x, k_p = jax.random.split(key)

    # KAN([64, 32, 16]); input (batch=4, 4, 16) -> flattened to (4, 64)
    layers_hidden = [64, 32, 16]
    grid_size, spline_order = 8, 4

    x = jax.random.uniform(k_x, (4, 4, 16), jnp.float32, minval=-1.0, maxval=1.0)
    params = init_kan_params(k_p, layers_hidden, grid_size=grid_size,
                             spline_order=spline_order)

    # --- f32 compute path: exact module semantics, tight check. -------------
    prepped_f32 = prepare_kan_params(params, grid_size=grid_size,
                                     spline_order=spline_order,
                                     compute_dtype=jnp.float32)
    out_f32 = kan_forward(x, prepped_f32, grid_size=grid_size,
                          spline_order=spline_order)
    out_f32 = jax.block_until_ready(out_f32)
    assert out_f32.shape == (4, layers_hidden[-1]), out_f32.shape
    ref_f32 = _ref_kan_forward(x, params, grid_size=grid_size,
                               spline_order=spline_order)
    np.testing.assert_allclose(np.asarray(out_f32), np.asarray(ref_f32),
                               rtol=1e-4, atol=1e-4)

    # --- bf16 MXU-operand path (v6e/v7x fast path, f32 accumulation). -------
    # Recursion stays f32; only the fused matmul operands are bf16, matching
    # the reference below, so only accumulation order differs.
    prepped_bf16 = prepare_kan_params(params, grid_size=grid_size,
                                      spline_order=spline_order,
                                      compute_dtype=jnp.bfloat16)
    out_bf16 = kan_forward(x, prepped_bf16, grid_size=grid_size,
                           spline_order=spline_order)
    out_bf16 = jax.block_until_ready(out_bf16)
    ref_bf16 = _ref_kan_forward(x, params, grid_size=grid_size,
                                spline_order=spline_order,
                                compute_dtype=jnp.bfloat16)
    np.testing.assert_allclose(np.asarray(out_bf16), np.asarray(ref_bf16),
                               rtol=1e-2, atol=1e-2)

    print("KERNEL_OK")
</pallas_src>

<mosaic_0001>
module attributes {stable_mosaic.version = 11 : i64} {
  func.func @kan_stack_kernel(%arg0: i32, %arg1: memref<8x128xf32, #tpu.memory_space<vmem>>, %arg2: memref<17x128xf32, #tpu.memory_space<vmem>>, %arg3: memref<58x128xf32, #tpu.memory_space<vmem>>, %arg4: memref<1664x128xf32, #tpu.memory_space<vmem>>, %arg5: memref<17x128xf32, #tpu.memory_space<vmem>>, %arg6: memref<58x128xf32, #tpu.memory_space<vmem>>, %arg7: memref<1664x128xf32, #tpu.memory_space<vmem>>, %arg8: memref<8x128xf32, #tpu.memory_space<vmem>>, %arg9: memref<8x1664xf32, #tpu.memory_space<vmem>>, %arg10: memref<8x1664xf32, #tpu.memory_space<vmem>>) attributes {dimension_semantics = [#tpu.dimension_semantics<parallel>], iteration_bounds = array<i64: 1>, scalar_prefetch = 0 : i64, scratch_operands = 2 : i64, tpu.core_type = #tpu.core_type<tc>, window_params = [{transform_indices = @transform_0, window_bounds = array<i64: 8, 128>}, {pipeline_mode = #tpu.pipeline_mode<synchronous>, transform_indices = @transform_1, window_bounds = array<i64: 17, 128>}, {pipeline_mode = #tpu.pipeline_mode<synchronous>, transform_indices = @transform_2, window_bounds = array<i64: 58, 128>}, {pipeline_mode = #tpu.pipeline_mode<synchronous>, transform_indices = @transform_3, window_bounds = array<i64: 1664, 128>}, {pipeline_mode = #tpu.pipeline_mode<synchronous>, transform_indices = @transform_4, window_bounds = array<i64: 17, 128>}, {pipeline_mode = #tpu.pipeline_mode<synchronous>, transform_indices = @transform_5, window_bounds = array<i64: 58, 128>}, {pipeline_mode = #tpu.pipeline_mode<synchronous>, transform_indices = @transform_6, window_bounds = array<i64: 1664, 128>}, {transform_indices = @transform_7, window_bounds = array<i64: 8, 128>}]} {
    %c0 = arith.constant 0 : index
    %c0_0 = arith.constant 0 : index
    %0 = vector.load %arg1[%c0, %c0_0] : memref<8x128xf32, #tpu.memory_space<vmem>>, vector<8x128xf32>
    %c0_1 = arith.constant 0 : index
    %c0_2 = arith.constant 0 : index
    %1 = vector.load %arg2[%c0_1, %c0_2] : memref<17x128xf32, #tpu.memory_space<vmem>>, vector<17x128xf32>
    %c0_3 = arith.constant 0 : index
    %c0_4 = arith.constant 0 : index
    %2 = vector.load %arg3[%c0_3, %c0_4] : memref<58x128xf32, #tpu.memory_space<vmem>>, vector<58x128xf32>
    %3 = vector.shape_cast %0 : vector<8x128xf32> to vector<1x8x128xf32>
    %4 = vector.shape_cast %1 : vector<17x128xf32> to vector<17x1x128xf32>
    %5 = vector.extract_strided_slice %4 {offsets = [0, 0, 0], sizes = [16, 1, 128], strides = [1, 1, 1]} : vector<17x1x128xf32> to vector<16x1x128xf32>
    %6 = vector.broadcast %3 : vector<1x8x128xf32> to vector<16x8x128xf32>
    %7 = vector.broadcast %5 : vector<16x1x128xf32> to vector<16x8x128xf32>
    %8 = arith.cmpf oge, %6, %7 : vector<16x8x128xf32>
    %9 = vector.extract_strided_slice %4 {offsets = [1, 0, 0], sizes = [16, 1, 128], strides = [1, 1, 1]} : vector<17x1x128xf32> to vector<16x1x128xf32>
    %10 = vector.broadcast %3 : vector<1x8x128xf32> to vector<16x8x128xf32>
    %11 = vector.broadcast %9 : vector<16x1x128xf32> to vector<16x8x128xf32>
    %12 = arith.cmpf olt, %10, %11 : vector<16x8x128xf32>
    %13 = arith.andi %8, %12 : vector<16x8x128xi1>
    %14 = arith.extui %13 : vector<16x8x128xi1> to vector<16x8x128xi32>
    %15 = arith.sitofp %14 : vector<16x8x128xi32> to vector<16x8x128xf32>
    %16 = vector.extract_strided_slice %2 {offsets = [0, 0], sizes = [16, 128], strides = [1, 1]} : vector<58x128xf32> to vector<16x128xf32>
    %17 = vector.shape_cast %16 : vector<16x128xf32> to vector<16x1x128xf32>
    %18 = vector.extract_strided_slice %4 {offsets = [0, 0, 0], sizes = [16, 1, 128], strides = [1, 1, 1]} : vector<17x1x128xf32> to vector<16x1x128xf32>
    %19 = vector.broadcast %3 : vector<1x8x128xf32> to vector<16x8x128xf32>
    %20 = vector.broadcast %18 : vector<16x1x128xf32> to vector<16x8x128xf32>
    %21 = arith.subf %19, %20 : vector<16x8x128xf32>
    %22 = vector.broadcast %17 : vector<16x1x128xf32> to vector<16x8x128xf32>
    %23 = arith.mulf %21, %22 : vector<16x8x128xf32>
    %24 = vector.extract_strided_slice %23 {offsets = [0, 0, 0], sizes = [15, 8, 128], strides = [1, 1, 1]} : vector<16x8x128xf32> to vector<15x8x128xf32>
    %25 = vector.extract_strided_slice %15 {offsets = [0, 0, 0], sizes = [15, 8, 128], strides = [1, 1, 1]} : vector<16x8x128xf32> to vector<15x8x128xf32>
    %26 = arith.mulf %24, %25 : vector<15x8x128xf32>
    %27 = vector.extract_strided_slice %23 {offsets = [1, 0, 0], sizes = [15, 8, 128], strides = [1, 1, 1]} : vector<16x8x128xf32> to vector<15x8x128xf32>
    %cst = arith.constant 1.000000e+00 : f32
    %28 = vector.broadcast %cst : f32 to vector<15x8x128xf32>
    %29 = arith.subf %28, %27 : vector<15x8x128xf32>
    %30 = vector.extract_strided_slice %15 {offsets = [1, 0, 0], sizes = [15, 8, 128], strides = [1, 1, 1]} : vector<16x8x128xf32> to vector<15x8x128xf32>
    %31 = arith.mulf %29, %30 : vector<15x8x128xf32>
    %32 = arith.addf %26, %31 : vector<15x8x128xf32>
    %33 = vector.extract_strided_slice %2 {offsets = [16, 0], sizes = [15, 128], strides = [1, 1]} : vector<58x128xf32> to vector<15x128xf32>
    %34 = vector.shape_cast %33 : vector<15x128xf32> to vector<15x1x128xf32>
    %35 = vector.extract_strided_slice %4 {offsets = [0, 0, 0], sizes = [15, 1, 128], strides = [1, 1, 1]} : vector<17x1x128xf32> to vector<15x1x128xf32>
    %36 = vector.broadcast %3 : vector<1x8x128xf32> to vector<15x8x128xf32>
    %37 = vector.broadcast %35 : vector<15x1x128xf32> to vector<15x8x128xf32>
    %38 = arith.subf %36, %37 : vector<15x8x128xf32>
    %39 = vector.broadcast %34 : vector<15x1x128xf32> to vector<15x8x128xf32>
    %40 = arith.mulf %38, %39 : vector<15x8x128xf32>
    %41 = vector.extract_strided_slice %40 {offsets = [0, 0, 0], sizes = [14, 8, 128], strides = [1, 1, 1]} : vector<15x8x128xf32> to vector<14x8x128xf32>
    %42 = vector.extract_strided_slice %32 {offsets = [0, 0, 0], sizes = [14, 8, 128], strides = [1, 1, 1]} : vector<15x8x128xf32> to vector<14x8x128xf32>
    %43 = arith.mulf %41, %42 : vector<14x8x128xf32>
    %44 = vector.extract_strided_slice %40 {offsets = [1, 0, 0], sizes = [14, 8, 128], strides = [1, 1, 1]} : vector<15x8x128xf32> to vector<14x8x128xf32>
    %cst_5 = arith.constant 1.000000e+00 : f32
    %45 = vector.broadcast %cst_5 : f32 to vector<14x8x128xf32>
    %46 = arith.subf %45, %44 : vector<14x8x128xf32>
    %47 = vector.extract_strided_slice %32 {offsets = [1, 0, 0], sizes = [14, 8, 128], strides = [1, 1, 1]} : vector<15x8x128xf32> to vector<14x8x128xf32>
    %48 = arith.mulf %46, %47 : vector<14x8x128xf32>
    %49 = arith.addf %43, %48 : vector<14x8x128xf32>
    %50 = vector.extract_strided_slice %2 {offsets = [31, 0], sizes = [14, 128], strides = [1, 1]} : vector<58x128xf32> to vector<14x128xf32>
    %51 = vector.shape_cast %50 : vector<14x128xf32> to vector<14x1x128xf32>
    %52 = vector.extract_strided_slice %4 {offsets = [0, 0, 0], sizes = [14, 1, 128], strides = [1, 1, 1]} : vector<17x1x128xf32> to vector<14x1x128xf32>
    %53 = vector.broadcast %3 : vector<1x8x128xf32> to vector<14x8x128xf32>
    %54 = vector.broadcast %52 : vector<14x1x128xf32> to vector<14x8x128xf32>
    %55 = arith.subf %53, %54 : vector<14x8x128xf32>
    %56 = vector.broadcast %51 : vector<14x1x128xf32> to vector<14x8x128xf32>
    %57 = arith.mulf %55, %56 : vector<14x8x128xf32>
    %58 = vector.extract_strided_slice %57 {offsets = [0, 0, 0], sizes = [13, 8, 128], strides = [1, 1, 1]} : vector<14x8x128xf32> to vector<13x8x128xf32>
    %59 = vector.extract_strided_slice %49 {offsets = [0, 0, 0], sizes = [13, 8, 128], strides = [1, 1, 1]} : vector<14x8x128xf32> to vector<13x8x128xf32>
    %60 = arith.mulf %58, %59 : vector<13x8x128xf32>
    %61 = vector.extract_strided_slice %57 {offsets = [1, 0, 0], sizes = [13, 8, 128], strides = [1, 1, 1]} : vector<14x8x128xf32> to vector<13x8x128xf32>
    %cst_6 = arith.constant 1.000000e+00 : f32
    %62 = vector.broadcast %cst_6 : f32 to vector<13x8x128xf32>
    %63 = arith.subf %62, %61 : vector<13x8x128xf32>
    %64 = vector.extract_strided_slice %49 {offsets = [1, 0, 0], sizes = [13, 8, 128], strides = [1, 1, 1]} : vector<14x8x128xf32> to vector<13x8x128xf32>
    %65 = arith.mulf %63, %64 : vector<13x8x128xf32>
    %66 = arith.addf %60, %65 : vector<13x8x128xf32>
    %67 = vector.extract_strided_slice %2 {offsets = [45, 0], sizes = [13, 128], strides = [1, 1]} : vector<58x128xf32> to vector<13x128xf32>
    %68 = vector.shape_cast %67 : vector<13x128xf32> to vector<13x1x128xf32>
    %69 = vector.extract_strided_slice %4 {offsets = [0, 0, 0], sizes = [13, 1, 128], strides = [1, 1, 1]} : vector<17x1x128xf32> to vector<13x1x128xf32>
    %70 = vector.broadcast %3 : vector<1x8x128xf32> to vector<13x8x128xf32>
    %71 = vector.broadcast %69 : vector<13x1x128xf32> to vector<13x8x128xf32>
    %72 = arith.subf %70, %71 : vector<13x8x128xf32>
    %73 = vector.broadcast %68 : vector<13x1x128xf32> to vector<13x8x128xf32>
    %74 = arith.mulf %72, %73 : vector<13x8x128xf32>
    %75 = vector.extract_strided_slice %74 {offsets = [0, 0, 0], sizes = [12, 8, 128], strides = [1, 1, 1]} : vector<13x8x128xf32> to vector<12x8x128xf32>
    %76 = vector.extract_strided_slice %66 {offsets = [0, 0, 0], sizes = [12, 8, 128], strides = [1, 1, 1]} : vector<13x8x128xf32> to vector<12x8x128xf32>
    %77 = arith.mulf %75, %76 : vector<12x8x128xf32>
    %78 = vector.extract_strided_slice %74 {offsets = [1, 0, 0], sizes = [12, 8, 128], strides = [1, 1, 1]} : vector<13x8x128xf32> to vector<12x8x128xf32>
    %cst_7 = arith.constant 1.000000e+00 : f32
    %79 = vector.broadcast %cst_7 : f32 to vector<12x8x128xf32>
    %80 = arith.subf %79, %78 : vector<12x8x128xf32>
    %81 = vector.extract_strided_slice %66 {offsets = [1, 0, 0], sizes = [12, 8, 128], strides = [1, 1, 1]} : vector<13x8x128xf32> to vector<12x8x128xf32>
    %82 = arith.mulf %80, %81 : vector<12x8x128xf32>
    %83 = arith.addf %77, %82 : vector<12x8x128xf32>
    %84 = arith.negf %0 : vector<8x128xf32>
    %85 = math.exp %84 : vector<8x128xf32>
    %cst_8 = arith.constant 1.000000e+00 : f32
    %86 = vector.broadcast %cst_8 : f32 to vector<8x128xf32>
    %87 = arith.addf %86, %85 : vector<8x128xf32>
    %88 = arith.divf %86, %87 : vector<8x128xf32>
    %89 = arith.mulf %0, %88 : vector<8x128xf32>
    %c0_9 = arith.constant 0 : index
    %c0_10 = arith.constant 0 : index
    %90 = vector.load %arg9[%c0_9, %c0_10] : memref<8x1664xf32, #tpu.memory_space<vmem>>, vector<8x128xf32>
    tpu.vector_store %arg9[%c0_9, %c0_10], %89 {strides = array<i32>} : memref<8x1664xf32, #tpu.memory_space<vmem>>, vector<8x128xf32>,
    %91 = vector.extract_strided_slice %83 {offsets = [0, 0, 0], sizes = [1, 8, 128], strides = [1, 1, 1]} : vector<12x8x128xf32> to vector<1x8x128xf32>
    %92 = vector.shape_cast %91 : vector<1x8x128xf32> to vector<8x128xf32>
    %c0_11 = arith.constant 0 : index
    %c128 = arith.constant 128 : index
    %93 = vector.load %arg9[%c0_11, %c128] : memref<8x1664xf32, #tpu.memory_space<vmem>>, vector<8x128xf32>
    tpu.vector_store %arg9[%c0_11, %c128], %92 {strides = array<i32>} : memref<8x1664xf32, #tpu.memory_space<vmem>>, vector<8x128xf32>,
    %94 = vector.extract_strided_slice %83 {offsets = [1, 0, 0], sizes = [1, 8, 128], strides = [1, 1, 1]} : vector<12x8x128xf32> to vector<1x8x128xf32>
    %95 = vector.shape_cast %94 : vector<1x8x128xf32> to vector<8x128xf32>
    %c0_12 = arith.constant 0 : index
    %c256 = arith.constant 256 : index
    %96 = vector.load %arg9[%c0_12, %c256] : memref<8x1664xf32, #tpu.memory_space<vmem>>, vector<8x128xf32>
    tpu.vector_store %arg9[%c0_12, %c256], %95 {strides = array<i32>} : memref<8x1664xf32, #tpu.memory_space<vmem>>, vector<8x128xf32>,
    %97 = vector.extract_strided_slice %83 {offsets = [2, 0, 0], sizes = [1, 8, 128], strides = [1, 1, 1]} : vector<12x8x128xf32> to vector<1x8x128xf32>
    %98 = vector.shape_cast %97 : vector<1x8x128xf32> to vector<8x128xf32>
    %c0_13 = arith.constant 0 : index
    %c384 = arith.constant 384 : index
    %99 = vector.load %arg9[%c0_13, %c384] : memref<8x1664xf32, #tpu.memory_space<vmem>>, vector<8x128xf32>
    tpu.vector_store %arg9[%c0_13, %c384], %98 {strides = array<i32>} : memref<8x1664xf32, #tpu.memory_space<vmem>>, vector<8x128xf32>,
    %100 = vector.extract_strided_slice %83 {offsets = [3, 0, 0], sizes = [1, 8, 128], strides = [1, 1, 1]} : vector<12x8x128xf32> to vector<1x8x128xf32>
    %101 = vector.shape_cast %100 : vector<1x8x128xf32> to vector<8x128xf32>
    %c0_14 = arith.constant 0 : index
    %c512 = arith.constant 512 : index
    %102 = vector.load %arg9[%c0_14, %c512] : memref<8x1664xf32, #tpu.memory_space<vmem>>, vector<8x128xf32>
    tpu.vector_store %arg9[%c0_14, %c512], %101 {strides = array<i32>} : memref<8x1664xf32, #tpu.memory_space<vmem>>, vector<8x128xf32>,
    %103 = vector.extract_strided_slice %83 {offsets = [4, 0, 0], sizes = [1, 8, 128], strides = [1, 1, 1]} : vector<12x8x128xf32> to vector<1x8x128xf32>
    %104 = vector.shape_cast %103 : vector<1x8x128xf32> to vector<8x128xf32>
    %c0_15 = arith.constant 0 : index
    %c640 = arith.constant 640 : index
    %105 = vector.load %arg9[%c0_15, %c640] : memref<8x1664xf32, #tpu.memory_space<vmem>>, vector<8x128xf32>
    tpu.vector_store %arg9[%c0_15, %c640], %104 {strides = array<i32>} : memref<8x1664xf32, #tpu.memory_space<vmem>>, vector<8x128xf32>,
    %106 = vector.extract_strided_slice %83 {offsets = [5, 0, 0], sizes = [1, 8, 128], strides = [1, 1, 1]} : vector<12x8x128xf32> to vector<1x8x128xf32>
    %107 = vector.shape_cast %106 : vector<1x8x128xf32> to vector<8x128xf32>
    %c0_16 = arith.constant 0 : index
    %c768 = arith.constant 768 : index
    %108 = vector.load %arg9[%c0_16, %c768] : memref<8x1664xf32, #tpu.memory_space<vmem>>, vector<8x128xf32>
    tpu.vector_store %arg9[%c0_16, %c768], %107 {strides = array<i32>} : memref<8x1664xf32, #tpu.memory_space<vmem>>, vector<8x128xf32>,
    %109 = vector.extract_strided_slice %83 {offsets = [6, 0, 0], sizes = [1, 8, 128], strides = [1, 1, 1]} : vector<12x8x128xf32> to vector<1x8x128xf32>
    %110 = vector.shape_cast %109 : vector<1x8x128xf32> to vector<8x128xf32>
    %c0_17 = arith.constant 0 : index
    %c896 = arith.constant 896 : index
    %111 = vector.load %arg9[%c0_17, %c896] : memref<8x1664xf32, #tpu.memory_space<vmem>>, vector<8x128xf32>
    tpu.vector_store %arg9[%c0_17, %c896], %110 {strides = array<i32>} : memref<8x1664xf32, #tpu.memory_space<vmem>>, vector<8x128xf32>,
    %112 = vector.extract_strided_slice %83 {offsets = [7, 0, 0], sizes = [1, 8, 128], strides = [1, 1, 1]} : vector<12x8x128xf32> to vector<1x8x128xf32>
    %113 = vector.shape_cast %112 : vector<1x8x128xf32> to vector<8x128xf32>
    %c0_18 = arith.constant 0 : index
    %c1024 = arith.constant 1024 : index
    %114 = vector.load %arg9[%c0_18, %c1024] : memref<8x1664xf32, #tpu.memory_space<vmem>>, vector<8x128xf32>
    tpu.vector_store %arg9[%c0_18, %c1024], %113 {strides = array<i32>} : memref<8x1664xf32, #tpu.memory_space<vmem>>, vector<8x128xf32>,
    %115 = vector.extract_strided_slice %83 {offsets = [8, 0, 0], sizes = [1, 8, 128], strides = [1, 1, 1]} : vector<12x8x128xf32> to vector<1x8x128xf32>
    %116 = vector.shape_cast %115 : vector<1x8x128xf32> to vector<8x128xf32>
    %c0_19 = arith.constant 0 : index
    %c1152 = arith.constant 1152 : index
    %117 = vector.load %arg9[%c0_19, %c1152] : memref<8x1664xf32, #tpu.memory_space<vmem>>, vector<8x128xf32>
    tpu.vector_store %arg9[%c0_19, %c1152], %116 {strides = array<i32>} : memref<8x1664xf32, #tpu.memory_space<vmem>>, vector<8x128xf32>,
    %118 = vector.extract_strided_slice %83 {offsets = [9, 0, 0], sizes = [1, 8, 128], strides = [1, 1, 1]} : vector<12x8x128xf32> to vector<1x8x128xf32>
    %119 = vector.shape_cast %118 : vector<1x8x128xf32> to vector<8x128xf32>
    %c0_20 = arith.constant 0 : index
    %c1280 = arith.constant 1280 : index
    %120 = vector.load %arg9[%c0_20, %c1280] : memref<8x1664xf32, #tpu.memory_space<vmem>>, vector<8x128xf32>
    tpu.vector_store %arg9[%c0_20, %c1280], %119 {strides = array<i32>} : memref<8x1664xf32, #tpu.memory_space<vmem>>, vector<8x128xf32>,
    %121 = vector.extract_strided_slice %83 {offsets = [10, 0, 0], sizes = [1, 8, 128], strides = [1, 1, 1]} : vector<12x8x128xf32> to vector<1x8x128xf32>
    %122 = vector.shape_cast %121 : vector<1x8x128xf32> to vector<8x128xf32>
    %c0_21 = arith.constant 0 : index
    %c1408 = arith.constant 1408 : index
    %123 = vector.load %arg9[%c0_21, %c1408] : memref<8x1664xf32, #tpu.memory_space<vmem>>, vector<8x128xf32>
    tpu.vector_store %arg9[%c0_21, %c1408], %122 {strides = array<i32>} : memref<8x1664xf32, #tpu.memory_space<vmem>>, vector<8x128xf32>,
    %124 = vector.extract_strided_slice %83 {offsets = [11, 0, 0], sizes = [1, 8, 128], strides = [1, 1, 1]} : vector<12x8x128xf32> to vector<1x8x128xf32>
    %125 = vector.shape_cast %124 : vector<1x8x128xf32> to vector<8x128xf32>
    %c0_22 = arith.constant 0 : index
    %c1536 = arith.constant 1536 : index
    %126 = vector.load %arg9[%c0_22, %c1536] : memref<8x1664xf32, #tpu.memory_space<vmem>>, vector<8x128xf32>
    tpu.vector_store %arg9[%c0_22, %c1536], %125 {strides = array<i32>} : memref<8x1664xf32, #tpu.memory_space<vmem>>, vector<8x128xf32>,
    %c0_23 = arith.constant 0 : index
    %c0_24 = arith.constant 0 : index
    %127 = vector.load %arg9[%c0_23, %c0_24] : memref<8x1664xf32, #tpu.memory_space<vmem>>, vector<8x1664xf32>
    %c0_25 = arith.constant 0 : index
    %c0_26 = arith.constant 0 : index
    %128 = vector.load %arg4[%c0_25, %c0_26] : memref<1664x128xf32, #tpu.memory_space<vmem>>, vector<1664x128xf32>
    %cst_27 = arith.constant dense<0.000000e+00> : vector<8x128xf32>
    %129 = tpu.matmul %127, %128, %cst_27 {dimension_numbers = #tpu.dot_dimension_numbers<[1], [0], [0], [1], [0, 0, 1, 1], [], []>} : vector<8x1664xf32>, vector<1664x128xf32>, vector<8x128xf32> -> vector<8x128xf32>
    %c0_28 = arith.constant 0 : index
    %c0_29 = arith.constant 0 : index
    %130 = vector.load %arg5[%c0_28, %c0_29] : memref<17x128xf32, #tpu.memory_space<vmem>>, vector<17x128xf32>
    %c0_30 = arith.constant 0 : index
    %c0_31 = arith.constant 0 : index
    %131 = vector.load %arg6[%c0_30, %c0_31] : memref<58x128xf32, #tpu.memory_space<vmem>>, vector<58x128xf32>
    %132 = vector.shape_cast %129 : vector<8x128xf32> to vector<1x8x128xf32>
    %133 = vector.shape_cast %130 : vector<17x128xf32> to vector<17x1x128xf32>
    %134 = vector.extract_strided_slice %133 {offsets = [0, 0, 0], sizes = [16, 1, 128], strides = [1, 1, 1]} : vector<17x1x128xf32> to vector<16x1x128xf32>
    %135 = vector.broadcast %132 : vector<1x8x128xf32> to vector<16x8x128xf32>
    %136 = vector.broadcast %134 : vector<16x1x128xf32> to vector<16x8x128xf32>
    %137 = arith.cmpf oge, %135, %136 : vector<16x8x128xf32>
    %138 = vector.extract_strided_slice %133 {offsets = [1, 0, 0], sizes = [16, 1, 128], strides = [1, 1, 1]} : vector<17x1x128xf32> to vector<16x1x128xf32>
    %139 = vector.broadcast %132 : vector<1x8x128xf32> to vector<16x8x128xf32>
    %140 = vector.broadcast %138 : vector<16x1x128xf32> to vector<16x8x128xf32>
    %141 = arith.cmpf olt, %139, %140 : vector<16x8x128xf32>
    %142 = arith.andi %137, %141 : vector<16x8x128xi1>
    %143 = arith.extui %142 : vector<16x8x128xi1> to vector<16x8x128xi32>
    %144 = arith.sitofp %143 : vector<16x8x128xi32> to vector<16x8x128xf32>
    %145 = vector.extract_strided_slice %131 {offsets = [0, 0], sizes = [16, 128], strides = [1, 1]} : vector<58x128xf32> to vector<16x128xf32>
    %146 = vector.shape_cast %145 : vector<16x128xf32> to vector<16x1x128xf32>
    %147 = vector.extract_strided_slice %133 {offsets = [0, 0, 0], sizes = [16, 1, 128], strides = [1, 1, 1]} : vector<17x1x128xf32> to vector<16x1x128xf32>
    %148 = vector.broadcast %132 : vector<1x8x128xf32> to vector<16x8x128xf32>
    %149 = vector.broadcast %147 : vector<16x1x128xf32> to vector<16x8x128xf32>
    %150 = arith.subf %148, %149 : vector<16x8x128xf32>
    %151 = vector.broadcast %146 : vector<16x1x128xf32> to vector<16x8x128xf32>
    %152 = arith.mulf %150, %151 : vector<16x8x128xf32>
    %153 = vector.extract_strided_slice %152 {offsets = [0, 0, 0], sizes = [15, 8, 128], strides = [1, 1, 1]} : vector<16x8x128xf32> to vector<15x8x128xf32>
    %154 = vector.extract_strided_slice %144 {offsets = [0, 0, 0], sizes = [15, 8, 128], strides = [1, 1, 1]} : vector<16x8x128xf32> to vector<15x8x128xf32>
    %155 = arith.mulf %153, %154 : vector<15x8x128xf32>
    %156 = vector.extract_strided_slice %152 {offsets = [1, 0, 0], sizes = [15, 8, 128], strides = [1, 1, 1]} : vector<16x8x128xf32> to vector<15x8x128xf32>
    %cst_32 = arith.constant 1.000000e+00 : f32
    %157 = vector.broadcast %cst_32 : f32 to vector<15x8x128xf32>
    %158 = arith.subf %157, %156 : vector<15x8x128xf32>
    %159 = vector.extract_strided_slice %144 {offsets = [1, 0, 0], sizes = [15, 8, 128], strides = [1, 1, 1]} : vector<16x8x128xf32> to vector<15x8x128xf32>
    %160 = arith.mulf %158, %159 : vector<15x8x128xf32>
    %161 = arith.addf %155, %160 : vector<15x8x128xf32>
    %162 = vector.extract_strided_slice %131 {offsets = [16, 0], sizes = [15, 128], strides = [1, 1]} : vector<58x128xf32> to vector<15x128xf32>
    %163 = vector.shape_cast %162 : vector<15x128xf32> to vector<15x1x128xf32>
    %164 = vector.extract_strided_slice %133 {offsets = [0, 0, 0], sizes = [15, 1, 128], strides = [1, 1, 1]} : vector<17x1x128xf32> to vector<15x1x128xf32>
    %165 = vector.broadcast %132 : vector<1x8x128xf32> to vector<15x8x128xf32>
    %166 = vector.broadcast %164 : vector<15x1x128xf32> to vector<15x8x128xf32>
    %167 = arith.subf %165, %166 : vector<15x8x128xf32>
    %168 = vector.broadcast %163 : vector<15x1x128xf32> to vector<15x8x128xf32>
    %169 = arith.mulf %167, %168 : vector<15x8x128xf32>
    %170 = vector.extract_strided_slice %169 {offsets = [0, 0, 0], sizes = [14, 8, 128], strides = [1, 1, 1]} : vector<15x8x128xf32> to vector<14x8x128xf32>
    %171 = vector.extract_strided_slice %161 {offsets = [0, 0, 0], sizes = [14, 8, 128], strides = [1, 1, 1]} : vector<15x8x128xf32> to vector<14x8x128xf32>
    %172 = arith.mulf %170, %171 : vector<14x8x128xf32>
    %173 = vector.extract_strided_slice %169 {offsets = [1, 0, 0], sizes = [14, 8, 128], strides = [1, 1, 1]} : vector<15x8x128xf32> to vector<14x8x128xf32>
    %cst_33 = arith.constant 1.000000e+00 : f32
    %174 = vector.broadcast %cst_33 : f32 to vector<14x8x128xf32>
    %175 = arith.subf %174, %173 : vector<14x8x128xf32>
    %176 = vector.extract_strided_slice %161 {offsets = [1, 0, 0], sizes = [14, 8, 128], strides = [1, 1, 1]} : vector<15x8x128xf32> to vector<14x8x128xf32>
    %177 = arith.mulf %175, %176 : vector<14x8x128xf32>
    %178 = arith.addf %172, %177 : vector<14x8x128xf32>
    %179 = vector.extract_strided_slice %131 {offsets = [31, 0], sizes = [14, 128], strides = [1, 1]} : vector<58x128xf32> to vector<14x128xf32>
    %180 = vector.shape_cast %179 : vector<14x128xf32> to vector<14x1x128xf32>
    %181 = vector.extract_strided_slice %133 {offsets = [0, 0, 0], sizes = [14, 1, 128], strides = [1, 1, 1]} : vector<17x1x128xf32> to vector<14x1x128xf32>
    %182 = vector.broadcast %132 : vector<1x8x128xf32> to vector<14x8x128xf32>
    %183 = vector.broadcast %181 : vector<14x1x128xf32> to vector<14x8x128xf32>
    %184 = arith.subf %182, %183 : vector<14x8x128xf32>
    %185 = vector.broadcast %180 : vector<14x1x128xf32> to vector<14x8x128xf32>
    %186 = arith.mulf %184, %185 : vector<14x8x128xf32>
    %187 = vector.extract_strided_slice %186 {offsets = [0, 0, 0], sizes = [13, 8, 128], strides = [1, 1, 1]} : vector<14x8x128xf32> to vector<13x8x128xf32>
    %188 = vector.extract_strided_slice %178 {offsets = [0, 0, 0], sizes = [13, 8, 128], strides = [1, 1, 1]} : vector<14x8x128xf32> to vector<13x8x128xf32>
    %189 = arith.mulf %187, %188 : vector<13x8x128xf32>
    %190 = vector.extract_strided_slice %186 {offsets = [1, 0, 0], sizes = [13, 8, 128], strides = [1, 1, 1]} : vector<14x8x128xf32> to vector<13x8x128xf32>
    %cst_34 = arith.constant 1.000000e+00 : f32
    %191 = vector.broadcast %cst_34 : f32 to vector<13x8x128xf32>
    %192 = arith.subf %191, %190 : vector<13x8x128xf32>
    %193 = vector.extract_strided_slice %178 {offsets = [1, 0, 0], sizes = [13, 8, 128], strides = [1, 1, 1]} : vector<14x8x128xf32> to vector<13x8x128xf32>
    %194 = arith.mulf %192, %193 : vector<13x8x128xf32>
    %195 = arith.addf %189, %194 : vector<13x8x128xf32>
    %196 = vector.extract_strided_slice %131 {offsets = [45, 0], sizes = [13, 128], strides = [1, 1]} : vector<58x128xf32> to vector<13x128xf32>
    %197 = vector.shape_cast %196 : vector<13x128xf32> to vector<13x1x128xf32>
    %198 = vector.extract_strided_slice %133 {offsets = [0, 0, 0], sizes = [13, 1, 128], strides = [1, 1, 1]} : vector<17x1x128xf32> to vector<13x1x128xf32>
    %199 = vector.broadcast %132 : vector<1x8x128xf32> to vector<13x8x128xf32>
    %200 = vector.broadcast %198 : vector<13x1x128xf32> to vector<13x8x128xf32>
    %201 = arith.subf %199, %200 : vector<13x8x128xf32>
    %202 = vector.broadcast %197 : vector<13x1x128xf32> to vector<13x8x128xf32>
    %203 = arith.mulf %201, %202 : vector<13x8x128xf32>
    %204 = vector.extract_strided_slice %203 {offsets = [0, 0, 0], sizes = [12, 8, 128], strides = [1, 1, 1]} : vector<13x8x128xf32> to vector<12x8x128xf32>
    %205 = vector.extract_strided_slice %195 {offsets = [0, 0, 0], sizes = [12, 8, 128], strides = [1, 1, 1]} : vector<13x8x128xf32> to vector<12x8x128xf32>
    %206 = arith.mulf %204, %205 : vector<12x8x128xf32>
    %207 = vector.extract_strided_slice %203 {offsets = [1, 0, 0], sizes = [12, 8, 128], strides = [1, 1, 1]} : vector<13x8x128xf32> to vector<12x8x128xf32>
    %cst_35 = arith.constant 1.000000e+00 : f32
    %208 = vector.broadcast %cst_35 : f32 to vector<12x8x128xf32>
    %209 = arith.subf %208, %207 : vector<12x8x128xf32>
    %210 = vector.extract_strided_slice %195 {offsets = [1, 0, 0], sizes = [12, 8, 128], strides = [1, 1, 1]} : vector<13x8x128xf32> to vector<12x8x128xf32>
    %211 = arith.mulf %209, %210 : vector<12x8x128xf32>
    %212 = arith.addf %206, %211 : vector<12x8x128xf32>
    %213 = arith.negf %129 : vector<8x128xf32>
    %214 = math.exp %213 : vector<8x128xf32>
    %cst_36 = arith.constant 1.000000e+00 : f32
    %215 = vector.broadcast %cst_36 : f32 to vector<8x128xf32>
    %216 = arith.addf %215, %214 : vector<8x128xf32>
    %217 = arith.divf %215, %216 : vector<8x128xf32>
    %218 = arith.mulf %129, %217 : vector<8x128xf32>
    %c0_37 = arith.constant 0 : index
    %c0_38 = arith.constant 0 : index
    %219 = vector.load %arg10[%c0_37, %c0_38] : memref<8x1664xf32, #tpu.memory_space<vmem>>, vector<8x128xf32>
    tpu.vector_store %arg10[%c0_37, %c0_38], %218 {strides = array<i32>} : memref<8x1664xf32, #tpu.memory_space<vmem>>, vector<8x128xf32>,
    %220 = vector.extract_strided_slice %212 {offsets = [0, 0, 0], sizes = [1, 8, 128], strides = [1, 1, 1]} : vector<12x8x128xf32> to vector<1x8x128xf32>
    %221 = vector.shape_cast %220 : vector<1x8x128xf32> to vector<8x128xf32>
    %c0_39 = arith.constant 0 : index
    %c128_40 = arith.constant 128 : index
    %222 = vector.load %arg10[%c0_39, %c128_40] : memref<8x1664xf32, #tpu.memory_space<vmem>>, vector<8x128xf32>
    tpu.vector_store %arg10[%c0_39, %c128_40], %221 {strides = array<i32>} : memref<8x1664xf32, #tpu.memory_space<vmem>>, vector<8x128xf32>,
    %223 = vector.extract_strided_slice %212 {offsets = [1, 0, 0], sizes = [1, 8, 128], strides = [1, 1, 1]} : vector<12x8x128xf32> to vector<1x8x128xf32>
    %224 = vector.shape_cast %223 : vector<1x8x128xf32> to vector<8x128xf32>
    %c0_41 = arith.constant 0 : index
    %c256_42 = arith.constant 256 : index
    %225 = vector.load %arg10[%c0_41, %c256_42] : memref<8x1664xf32, #tpu.memory_space<vmem>>, vector<8x128xf32>
    tpu.vector_store %arg10[%c0_41, %c256_42], %224 {strides = array<i32>} : memref<8x1664xf32, #tpu.memory_space<vmem>>, vector<8x128xf32>,
    %226 = vector.extract_strided_slice %212 {offsets = [2, 0, 0], sizes = [1, 8, 128], strides = [1, 1, 1]} : vector<12x8x128xf32> to vector<1x8x128xf32>
    %227 = vector.shape_cast %226 : vector<1x8x128xf32> to vector<8x128xf32>
    %c0_43 = arith.constant 0 : index
    %c384_44 = arith.constant 384 : index
    %228 = vector.load %arg10[%c0_43, %c384_44] : memref<8x1664xf32, #tpu.memory_space<vmem>>, vector<8x128xf32>
    tpu.vector_store %arg10[%c0_43, %c384_44], %227 {strides = array<i32>} : memref<8x1664xf32, #tpu.memory_space<vmem>>, vector<8x128xf32>,
    %229 = vector.extract_strided_slice %212 {offsets = [3, 0, 0], sizes = [1, 8, 128], strides = [1, 1, 1]} : vector<12x8x128xf32> to vector<1x8x128xf32>
    %230 = vector.shape_cast %229 : vector<1x8x128xf32> to vector<8x128xf32>
    %c0_45 = arith.constant 0 : index
    %c512_46 = arith.constant 512 : index
    %231 = vector.load %arg10[%c0_45, %c512_46] : memref<8x1664xf32, #tpu.memory_space<vmem>>, vector<8x128xf32>
    tpu.vector_store %arg10[%c0_45, %c512_46], %230 {strides = array<i32>} : memref<8x1664xf32, #tpu.memory_space<vmem>>, vector<8x128xf32>,
    %232 = vector.extract_strided_slice %212 {offsets = [4, 0, 0], sizes = [1, 8, 128], strides = [1, 1, 1]} : vector<12x8x128xf32> to vector<1x8x128xf32>
    %233 = vector.shape_cast %232 : vector<1x8x128xf32> to vector<8x128xf32>
    %c0_47 = arith.constant 0 : index
    %c640_48 = arith.constant 640 : index
    %234 = vector.load %arg10[%c0_47, %c640_48] : memref<8x1664xf32, #tpu.memory_space<vmem>>, vector<8x128xf32>
    tpu.vector_store %arg10[%c0_47, %c640_48], %233 {strides = array<i32>} : memref<8x1664xf32, #tpu.memory_space<vmem>>, vector<8x128xf32>,
    %235 = vector.extract_strided_slice %212 {offsets = [5, 0, 0], sizes = [1, 8, 128], strides = [1, 1, 1]} : vector<12x8x128xf32> to vector<1x8x128xf32>
    %236 = vector.shape_cast %235 : vector<1x8x128xf32> to vector<8x128xf32>
    %c0_49 = arith.constant 0 : index
    %c768_50 = arith.constant 768 : index
    %237 = vector.load %arg10[%c0_49, %c768_50] : memref<8x1664xf32, #tpu.memory_space<vmem>>, vector<8x128xf32>
    tpu.vector_store %arg10[%c0_49, %c768_50], %236 {strides = array<i32>} : memref<8x1664xf32, #tpu.memory_space<vmem>>, vector<8x128xf32>,
    %238 = vector.extract_strided_slice %212 {offsets = [6, 0, 0], sizes = [1, 8, 128], strides = [1, 1, 1]} : vector<12x8x128xf32> to vector<1x8x128xf32>
    %239 = vector.shape_cast %238 : vector<1x8x128xf32> to vector<8x128xf32>
    %c0_51 = arith.constant 0 : index
    %c896_52 = arith.constant 896 : index
    %240 = vector.load %arg10[%c0_51, %c896_52] : memref<8x1664xf32, #tpu.memory_space<vmem>>, vector<8x128xf32>
    tpu.vector_store %arg10[%c0_51, %c896_52], %239 {strides = array<i32>} : memref<8x1664xf32, #tpu.memory_space<vmem>>, vector<8x128xf32>,
    %241 = vector.extract_strided_slice %212 {offsets = [7, 0, 0], sizes = [1, 8, 128], strides = [1, 1, 1]} : vector<12x8x128xf32> to vector<1x8x128xf32>
    %242 = vector.shape_cast %241 : vector<1x8x128xf32> to vector<8x128xf32>
    %c0_53 = arith.constant 0 : index
    %c1024_54 = arith.constant 1024 : index
    %243 = vector.load %arg10[%c0_53, %c1024_54] : memref<8x1664xf32, #tpu.memory_space<vmem>>, vector<8x128xf32>
    tpu.vector_store %arg10[%c0_53, %c1024_54], %242 {strides = array<i32>} : memref<8x1664xf32, #tpu.memory_space<vmem>>, vector<8x128xf32>,
    %244 = vector.extract_strided_slice %212 {offsets = [8, 0, 0], sizes = [1, 8, 128], strides = [1, 1, 1]} : vector<12x8x128xf32> to vector<1x8x128xf32>
    %245 = vector.shape_cast %244 : vector<1x8x128xf32> to vector<8x128xf32>
    %c0_55 = arith.constant 0 : index
    %c1152_56 = arith.constant 1152 : index
    %246 = vector.load %arg10[%c0_55, %c1152_56] : memref<8x1664xf32, #tpu.memory_space<vmem>>, vector<8x128xf32>
    tpu.vector_store %arg10[%c0_55, %c1152_56], %245 {strides = array<i32>} : memref<8x1664xf32, #tpu.memory_space<vmem>>, vector<8x128xf32>,
    %247 = vector.extract_strided_slice %212 {offsets = [9, 0, 0], sizes = [1, 8, 128], strides = [1, 1, 1]} : vector<12x8x128xf32> to vector<1x8x128xf32>
    %248 = vector.shape_cast %247 : vector<1x8x128xf32> to vector<8x128xf32>
    %c0_57 = arith.constant 0 : index
    %c1280_58 = arith.constant 1280 : index
    %249 = vector.load %arg10[%c0_57, %c1280_58] : memref<8x1664xf32, #tpu.memory_space<vmem>>, vector<8x128xf32>
    tpu.vector_store %arg10[%c0_57, %c1280_58], %248 {strides = array<i32>} : memref<8x1664xf32, #tpu.memory_space<vmem>>, vector<8x128xf32>,
    %250 = vector.extract_strided_slice %212 {offsets = [10, 0, 0], sizes = [1, 8, 128], strides = [1, 1, 1]} : vector<12x8x128xf32> to vector<1x8x128xf32>
    %251 = vector.shape_cast %250 : vector<1x8x128xf32> to vector<8x128xf32>
    %c0_59 = arith.constant 0 : index
    %c1408_60 = arith.constant 1408 : index
    %252 = vector.load %arg10[%c0_59, %c1408_60] : memref<8x1664xf32, #tpu.memory_space<vmem>>, vector<8x128xf32>
    tpu.vector_store %arg10[%c0_59, %c1408_60], %251 {strides = array<i32>} : memref<8x1664xf32, #tpu.memory_space<vmem>>, vector<8x128xf32>,
    %253 = vector.extract_strided_slice %212 {offsets = [11, 0, 0], sizes = [1, 8, 128], strides = [1, 1, 1]} : vector<12x8x128xf32> to vector<1x8x128xf32>
    %254 = vector.shape_cast %253 : vector<1x8x128xf32> to vector<8x128xf32>
    %c0_61 = arith.constant 0 : index
    %c1536_62 = arith.constant 1536 : index
    %255 = vector.load %arg10[%c0_61, %c1536_62] : memref<8x1664xf32, #tpu.memory_space<vmem>>, vector<8x128xf32>
    tpu.vector_store %arg10[%c0_61, %c1536_62], %254 {strides = array<i32>} : memref<8x1664xf32, #tpu.memory_space<vmem>>, vector<8x128xf32>,
    %c0_63 = arith.constant 0 : index
    %c0_64 = arith.constant 0 : index
    %256 = vector.load %arg10[%c0_63, %c0_64] : memref<8x1664xf32, #tpu.memory_space<vmem>>, vector<8x1664xf32>
    %c0_65 = arith.constant 0 : index
    %c0_66 = arith.constant 0 : index
    %257 = vector.load %arg7[%c0_65, %c0_66] : memref<1664x128xf32, #tpu.memory_space<vmem>>, vector<1664x128xf32>
    %cst_67 = arith.constant dense<0.000000e+00> : vector<8x128xf32>
    %258 = tpu.matmul %256, %257, %cst_67 {dimension_numbers = #tpu.dot_dimension_numbers<[1], [0], [0], [1], [0, 0, 1, 1], [], []>} : vector<8x1664xf32>, vector<1664x128xf32>, vector<8x128xf32> -> vector<8x128xf32>
    %c0_68 = arith.constant 0 : index
    %c0_69 = arith.constant 0 : index
    %259 = vector.load %arg8[%c0_68, %c0_69] : memref<8x128xf32, #tpu.memory_space<vmem>>, vector<8x128xf32>
    tpu.vector_store %arg8[%c0_68, %c0_69], %258 {strides = array<i32>} : memref<8x128xf32, #tpu.memory_space<vmem>>, vector<8x128xf32>,
    return
  }
  func.func @transform_0(%arg0: i32) -> (i32, i32) {
    %c0_i32 = arith.constant 0 : i32
    %c0_i32_0 = arith.constant 0 : i32
    return %arg0, %c0_i32 : i32, i32
  }
  func.func @transform_1(%arg0: i32) -> (i32, i32) {
    %c0_i32 = arith.constant 0 : i32
    %c0_i32_0 = arith.constant 0 : i32
    %c0_i32_1 = arith.constant 0 : i32
    return %c0_i32, %c0_i32_0 : i32, i32
  }
  func.func @transform_2(%arg0: i32) -> (i32, i32) {
    %c0_i32 = arith.constant 0 : i32
    %c0_i32_0 = arith.constant 0 : i32
    %c0_i32_1 = arith.constant 0 : i32
    return %c0_i32, %c0_i32_0 : i32, i32
  }
  func.func @transform_3(%arg0: i32) -> (i32, i32) {
    %c0_i32 = arith.constant 0 : i32
    %c0_i32_0 = arith.constant 0 : i32
    %c0_i32_1 = arith.constant 0 : i32
    return %c0_i32, %c0_i32_0 : i32, i32
  }
  func.func @transform_4(%arg0: i32) -> (i32, i32) {
    %c0_i32 = arith.constant 0 : i32
    %c0_i32_0 = arith.constant 0 : i32
    %c0_i32_1 = arith.constant 0 : i32
    return %c0_i32, %c0_i32_0 : i32, i32
  }
  func.func @transform_5(%arg0: i32) -> (i32, i32) {
    %c0_i32 = arith.constant 0 : i32
    %c0_i32_0 = arith.constant 0 : i32
    %c0_i32_1 = arith.constant 0 : i32
    return %c0_i32, %c0_i32_0 : i32, i32
  }
  func.func @transform_6(%arg0: i32) -> (i32, i32) {
    %c0_i32 = arith.constant 0 : i32
    %c0_i32_0 = arith.constant 0 : i32
    %c0_i32_1 = arith.constant 0 : i32
    return %c0_i32, %c0_i32_0 : i32, i32
  }
  func.func @transform_7(%arg0: i32) -> (i32, i32) {
    %c0_i32 = arith.constant 0 : i32
    %c0_i32_0 = arith.constant 0 : i32
    return %arg0, %c0_i32 : i32, i32
  }
}

</mosaic_0001>

<llo_original>
// kernel: tpu_custom_call.1
$region0: #{tpu_custom_call.1}
  #allocation0 [shape = 'u32[]', space=smem, size = 0x4, offset = 0x4, fixed_abs, tag = 'smem constant byte address 0x4 - core index']
  #allocation1 [shape = 'u32[72,128]{1,0:T(1,128)}', space=vmem, size = 0x9000, scoped, tag = 'internal scratch']
  #allocation2 [shape = 'f32[8,1664]{1,0:T(8,128)}', space=vmem, size = 0xd000, scoped, tag = 'scratch operand']
  #allocation3 [shape = 'f32[8,1664]{1,0:T(8,128)}', space=vmem, size = 0xd000, scoped, tag = 'scratch operand']
  %s0 = inlined_call_operand.hbm [shape: f32[8,128], index: 0, kind: input, shape index: {}]
  %s1 = inlined_call_operand.hbm [shape: f32[17,128], index: 1, kind: input, shape index: {}]
  %s2 = inlined_call_operand.hbm [shape: f32[58,128], index: 2, kind: input, shape index: {}]
  %s3 = inlined_call_operand.hbm [shape: f32[1664,128], index: 3, kind: input, shape index: {}]
  %s4 = inlined_call_operand.hbm [shape: f32[17,128], index: 4, kind: input, shape index: {}]
  %s5 = inlined_call_operand.hbm [shape: f32[58,128], index: 5, kind: input, shape index: {}]
  %s6 = inlined_call_operand.hbm [shape: f32[1664,128], index: 6, kind: input, shape index: {}]
  %s7 = inlined_call_operand.hbm [shape: f32[8,128], index: 7, kind: output, shape index: {}]
  %s8 = sld [smem:[#allocation0]]
  $region66: #{tpu_custom_call.1} parent=0
    _
  %s10 = ssub.s32 1, %s8
  %s11 = scalar_select 0, %s10, %s8
  $region1: #{tpu_custom_call.1} parent=0
    #allocation4 [shape = 'u8[4096]{0}', space=vmem, size = 0x1000, scoped, tag = 'input window, operand 0, single buffered']
    #allocation5 [shape = 's32[1]{0}', space=sflag, size = 0x4, scoped, tag = 'scoped memory for tpu_custom_call.1']
    #allocation6 [shape = 's32[1]{0}', space=sflag, size = 0x4, scoped, tag = 'scoped memory for tpu_custom_call.1']
    #allocation7 [shape = 'u8[12288]{0}', space=vmem, size = 0x3000, scoped, tag = 'input window, operand 1, single buffered']
    #allocation8 [shape = 's32[1]{0}', space=sflag, size = 0x4, scoped, tag = 'scoped memory for tpu_custom_call.1']
    #allocation9 [shape = 'u8[32768]{0}', space=vmem, size = 0x8000, scoped, tag = 'input window, operand 2, single buffered']
    #allocation10 [shape = 'u8[851968]{0}', space=vmem, size = 0xd0000, scoped, tag = 'input window, operand 3, single buffered']
    #allocation11 [shape = 's32[1]{0}', space=sflag, size = 0x4, scoped, tag = 'scoped memory for tpu_custom_call.1']
    #allocation12 [shape = 'u8[12288]{0}', space=vmem, size = 0x3000, scoped, tag = 'input window, operand 4, single buffered']
    #allocation13 [shape = 'u8[32768]{0}', space=vmem, size = 0x8000, scoped, tag = 'input window, operand 5, single buffered']
    #allocation14 [shape = 's32[1]{0}', space=sflag, size = 0x4, scoped, tag = 'scoped memory for tpu_custom_call.1']
    #allocation15 [shape = 'u8[851968]{0}', space=vmem, size = 0xd0000, scoped, tag = 'input window, operand 6, single buffered']
    #allocation16 [shape = 'u8[4096]{0}', space=vmem, size = 0x1000, scoped, tag = 'output window, operand 0, single buffered']
    %12 = vsyncpa [#allocation5], 0
    %13 = vsyncpa [#allocation8], 0
    %14 = vsyncpa [#allocation11], 0
    %15 = vsyncpa [#allocation14], 0
    %16 = vsyncpa [#allocation6], 0
    // Predicated region
    $region2: #{tpu_custom_call.1} parent=1 // pred_check
      _
    $region3: #{tpu_custom_call.1} parent=1 // pred_check_branch
      %18 = sbr.rel (0) target = $region5
    $region4: #{tpu_custom_call.1} parent=1 // pred_region
      %20 = vsyncadd [#allocation5], 0
      %s22 = sshll.u32 %s0, 4
      %s23 = int_to_ptr.hbm [resolvable:$true] %s22
      %s24 = sshll.u32 [#allocation4], 4
      %s25 = int_to_ptr.vmem [resolvable:$true] %s24
      %27 = dma.hbm_to_vmem [thread:$0]  %s23, 128, %s25, [#allocation5]
    $region5: #{tpu_custom_call.1} parent=1 // pred_fallthru
      _
    // Predicated region
    $region6: #{tpu_custom_call.1} parent=1 // pred_check
      _
    $region7: #{tpu_custom_call.1} parent=1 // pred_check_branch
      %29 = sbr.rel (0) target = $region9
    $region8: #{tpu_custom_call.1} parent=1 // pred_region
      %31 = vsyncadd [#allocation8], 0
      %s32 = sshll.u32 %s1, 4
      %s33 = int_to_ptr.hbm [resolvable:$true] %s32
      %s34 = sshll.u32 [#allocation7], 4
      %s35 = int_to_ptr.vmem [resolvable:$true] %s34
      %40 = dma.hbm_to_vmem [thread:$0]  %s33, 384, %s35, [#allocation8], 128, 128, 8
    $region9: #{tpu_custom_call.1} parent=1 // pred_fallthru
      _
    // Predicated region
    $region10: #{tpu_custom_call.1} parent=1 // pred_check
      _
    $region11: #{tpu_custom_call.1} parent=1 // pred_check_branch
      %42 = sbr.rel (0) target = $region13
    $region12: #{tpu_custom_call.1} parent=1 // pred_region
      %44 = vsyncadd [#allocation8], 0
      %s45 = sshll.u32 %s2, 4
      %s46 = int_to_ptr.hbm [resolvable:$true] %s45
      %s47 = sshll.u32 [#allocation9], 4
      %s48 = int_to_ptr.vmem [resolvable:$true] %s47
      %53 = dma.hbm_to_vmem [thread:$0]  %s46, 1024, %s48, [#allocation8], 128, 128, 8
    $region13: #{tpu_custom_call.1} parent=1 // pred_fallthru
      _
    // Predicated region
    $region14: #{tpu_custom_call.1} parent=1 // pred_check
      _
    $region15: #{tpu_custom_call.1} parent=1 // pred_check_branch
      %55 = sbr.rel (0) target = $region17
    $region16: #{tpu_custom_call.1} parent=1 // pred_region
      %57 = vsyncadd [#allocation11], 0
      %s58 = sshll.u32 %s3, 4
      %s59 = int_to_ptr.hbm [resolvable:$true] %s58
      %s60 = sshll.u32 [#allocation10], 4
      %s61 = int_to_ptr.vmem [resolvable:$true] %s60
      %66 = dma.hbm_to_vmem [thread:$0]  %s59, 26624, %s61, [#allocation11], 128, 128, 8
    $region17: #{tpu_custom_call.1} parent=1 // pred_fallthru
      _
    // Predicated region
    $region18: #{tpu_custom_call.1} parent=1 // pred_check
      _
    $region19: #{tpu_custom_call.1} parent=1 // pred_check_branch
      %68 = sbr.rel (0) target = $region21
    $region20: #{tpu_custom_call.1} parent=1 // pred_region
      %70 = vsyncadd [#allocation11], 0
      %s71 = sshll.u32 %s4, 4
      %s72 = int_to_ptr.hbm [resolvable:$true] %s71
      %s73 = sshll.u32 [#allocation12], 4
      %s74 = int_to_ptr.vmem [resolvable:$true] %s73
      %79 = dma.hbm_to_vmem [thread:$0]  %s72, 384, %s74, [#allocation11], 128, 128, 8
    $region21: #{tpu_custom_call.1} parent=1 // pred_fallthru
      _
    // Predicated region
    $region22: #{tpu_custom_call.1} parent=1 // pred_check
      _
    $region23: #{tpu_custom_call.1} parent=1 // pred_check_branch
      %81 = sbr.rel (0) target = $region25
    $region24: #{tpu_custom_call.1} parent=1 // pred_region
      %83 = vsyncadd [#allocation14], 0
      %s84 = sshll.u32 %s5, 4
      %s85 = int_to_ptr.hbm [resolvable:$true] %s84
      %s86 = sshll.u32 [#allocation13], 4
      %s87 = int_to_ptr.vmem [resolvable:$true] %s86
      %92 = dma.hbm_to_vmem [thread:$0]  %s85, 1024, %s87, [#allocation14], 128, 128, 8
    $region25: #{tpu_custom_call.1} parent=1 // pred_fallthru
      _
    // Predicated region
    $region26: #{tpu_custom_call.1} parent=1 // pred_check
      _
    $region27: #{tpu_custom_call.1} parent=1 // pred_check_branch
      %94 = sbr.rel (0) target = $region29
    $region28: #{tpu_custom_call.1} parent=1 // pred_region
      %96 = vsyncadd [#allocation14], 0
      %s97 = sshll.u32 %s6, 4
      %s98 = int_to_ptr.hbm [resolvable:$true] %s97
      %s99 = sshll.u32 [#allocation15], 4
      %s100 = int_to_ptr.vmem [resolvable:$true] %s99
      %105 = dma.hbm_to_vmem [thread:$0]  %s98, 26624, %s100, [#allocation14], 128, 128, 8
    $region29: #{tpu_custom_call.1} parent=1 // pred_fallthru
      _
    // Predicated region
    $region30: #{tpu_custom_call.1} parent=1 // pred_check
      _
    $region31: #{tpu_custom_call.1} parent=1 // pred_check_branch
      %107 = sbr.rel (0) target = $region33
    $region32: #{tpu_custom_call.1} parent=1 // pred_region
      %109 = dma.done [#allocation5], 128
    $region33: #{tpu_custom_call.1} parent=1 // pred_fallthru
      _
    // Predicated region
    $region34: #{tpu_custom_call.1} parent=1 // pred_check
      _
    $region35: #{tpu_custom_call.1} parent=1 // pred_check_branch
      %111 = sbr.rel (0) target = $region37
    $region36: #{tpu_custom_call.1} parent=1 // pred_region
      %113 = dma.done [#allocation8], 384
    $region37: #{tpu_custom_call.1} parent=1 // pred_fallthru
      _
    // Predicated region
    $region38: #{tpu_custom_call.1} parent=1 // pred_check
      _
    $region39: #{tpu_custom_call.1} parent=1 // pred_check_branch
      %115 = sbr.rel (0) target = $region41
    $region40: #{tpu_custom_call.1} parent=1 // pred_region
      %117 = dma.done [#allocation8], 1024
    $region41: #{tpu_custom_call.1} parent=1 // pred_fallthru
      _
    // Predicated region
    $region42: #{tpu_custom_call.1} parent=1 // pred_check
      _
    $region43: #{tpu_custom_call.1} parent=1 // pred_check_branch
      %119 = sbr.rel (0) target = $region45
    $region44: #{tpu_custom_call.1} parent=1 // pred_region
      %121 = dma.done [#allocation11], 26624
    $region45: #{tpu_custom_call.1} parent=1 // pred_fallthru
      _
    // Predicated region
    $region46: #{tpu_custom_call.1} parent=1 // pred_check
      _
    $region47: #{tpu_custom_call.1} parent=1 // pred_check_branch
      %123 = sbr.rel (0) target = $region49
    $region48: #{tpu_custom_call.1} parent=1 // pred_region
      %125 = dma.done [#allocation11], 384
    $region49: #{tpu_custom_call.1} parent=1 // pred_fallthru
      _
    // Predicated region
    $region50: #{tpu_custom_call.1} parent=1 // pred_check
      _
    $region51: #{tpu_custom_call.1} parent=1 // pred_check_branch
      %127 = sbr.rel (0) target = $region53
    $region52: #{tpu_custom_call.1} parent=1 // pred_region
      %129 = dma.done [#allocation14], 1024
    $region53: #{tpu_custom_call.1} parent=1 // pred_fallthru
      _
    // Predicated region
    $region54: #{tpu_custom_call.1} parent=1 // pred_check
      _
    $region55: #{tpu_custom_call.1} parent=1 // pred_check_branch
      %131 = sbr.rel (0) target = $region57
    $region56: #{tpu_custom_call.1} parent=1 // pred_region
      %133 = dma.done [#allocation14], 26624
    $region57: #{tpu_custom_call.1} parent=1 // pred_fallthru
      _
    %v134 = vld [vmem:[#allocation4] sm:$0xff]
    %v135 = vld [vmem:[#allocation7] sm:$0xff]
    %v136 = vld [vmem:[#allocation7 + $0x8] sm:$0xff]
    %v137 = vld [vmem:[#allocation7 + $0x10] sm:$0x1]
    %v138 = vld [vmem:[#allocation9] sm:$0xff]
    %v139 = vld [vmem:[#allocation9 + $0x8] sm:$0xff]
    %v140 = vld [vmem:[#allocation9 + $0x10] sm:$0xff]
    %v141 = vld [vmem:[#allocation9 + $0x18] sm:$0xff]
    %v142 = vld [vmem:[#allocation9 + $0x20] sm:$0xff]
    %v143 = vld [vmem:[#allocation9 + $0x28] sm:$0xff]
    %v144 = vld [vmem:[#allocation9 + $0x30] sm:$0xff]
    %v145 = vld [vmem:[#allocation9 + $0x38] sm:$0x3]
    %v149 = vrot.slane %v135, 1
    %v150 = vrot.slane %v135, 2
    %v151 = vrot.slane %v135, 3
    %v152 = vrot.slane %v135, 4
    %v153 = vrot.slane %v135, 5
    %v154 = vrot.slane %v135, 6
    %v155 = vrot.slane %v135, 7
    %v156 = vrot.slane %v136, 1
    %v157 = vrot.slane %v136, 2
    %v158 = vrot.slane %v136, 3
    %v159 = vrot.slane %v136, 4
    %v160 = vrot.slane %v136, 5
    %v161 = vrot.slane %v136, 6
    %v162 = vrot.slane %v136, 7
    %v163 = vperm.slane %v135, 0
    %v164 = vperm.slane %v149, 0
    %v165 = vperm.slane %v150, 0
    %v166 = vperm.slane %v151, 0
    %v167 = vperm.slane %v152, 0
    %v168 = vperm.slane %v153, 0
    %v169 = vperm.slane %v154, 0
    %v170 = vperm.slane %v155, 0
    %v171 = vperm.slane %v136, 0
    %v172 = vperm.slane %v156, 0
    %v173 = vperm.slane %v157, 0
    %v174 = vperm.slane %v158, 0
    %v175 = vperm.slane %v159, 0
    %v176 = vperm.slane %v160, 0
    %v177 = vperm.slane %v161, 0
    %v178 = vperm.slane %v162, 0
    %vm195 = vcmp.ge.f32.partialorder %v134, %v163
    %vm196 = vcmp.ge.f32.partialorder %v134, %v164
    %vm197 = vcmp.ge.f32.partialorder %v134, %v165
    %vm198 = vcmp.ge.f32.partialorder %v134, %v166
    %vm199 = vcmp.ge.f32.partialorder %v134, %v167
    %vm200 = vcmp.ge.f32.partialorder %v134, %v168
    %vm201 = vcmp.ge.f32.partialorder %v134, %v169
    %vm202 = vcmp.ge.f32.partialorder %v134, %v170
    %vm203 = vcmp.ge.f32.partialorder %v134, %v171
    %vm204 = vcmp.ge.f32.partialorder %v134, %v172
    %vm205 = vcmp.ge.f32.partialorder %v134, %v173
    %vm206 = vcmp.ge.f32.partialorder %v134, %v174
    %vm207 = vcmp.ge.f32.partialorder %v134, %v175
    %vm208 = vcmp.ge.f32.partialorder %v134, %v176
    %vm209 = vcmp.ge.f32.partialorder %v134, %v177
    %vm210 = vcmp.ge.f32.partialorder %v134, %v178
    %v211 = vperm.slane %v137, 0
    %vm213 = vcmp.lt.f32.partialorder %v134, %v164
    %vm214 = vcmp.lt.f32.partialorder %v134, %v165
    %vm215 = vcmp.lt.f32.partialorder %v134, %v166
    %vm216 = vcmp.lt.f32.partialorder %v134, %v167
    %vm217 = vcmp.lt.f32.partialorder %v134, %v168
    %vm218 = vcmp.lt.f32.partialorder %v134, %v169
    %vm219 = vcmp.lt.f32.partialorder %v134, %v170
    %vm220 = vcmp.lt.f32.partialorder %v134, %v171
    %vm221 = vcmp.lt.f32.partialorder %v134, %v172
    %vm222 = vcmp.lt.f32.partialorder %v134, %v173
    %vm223 = vcmp.lt.f32.partialorder %v134, %v174
    %vm224 = vcmp.lt.f32.partialorder %v134, %v175
    %vm225 = vcmp.lt.f32.partialorder %v134, %v176
    %vm226 = vcmp.lt.f32.partialorder %v134, %v177
    %vm227 = vcmp.lt.f32.partialorder %v134, %v178
    %vm228 = vcmp.lt.f32.partialorder %v134, %v211
    %vm229 = vmand %vm195, %vm213
    %vm230 = vmand %vm196, %vm214
    %vm231 = vmand %vm197, %vm215
    %vm232 = vmand %vm198, %vm216
    %vm233 = vmand %vm199, %vm217
    %vm234 = vmand %vm200, %vm218
    %vm235 = vmand %vm201, %vm219
    %vm236 = vmand %vm202, %vm220
    %vm237 = vmand %vm203, %vm221
    %vm238 = vmand %vm204, %vm222
    %vm239 = vmand %vm205, %vm223
    %vm240 = vmand %vm206, %vm224
    %vm241 = vmand %vm207, %vm225
    %vm242 = vmand %vm208, %vm226
    %vm243 = vmand %vm209, %vm227
    %vm244 = vmand %vm210, %vm228
    %v245 = vsel %vm229, 1, 0
    %v246 = vsel %vm230, 1, 0
    %v247 = vsel %vm231, 1, 0
    %v248 = vsel %vm232, 1, 0
    %v249 = vsel %vm233, 1, 0
    %v250 = vsel %vm234, 1, 0
    %v251 = vsel %vm235, 1, 0
    %v252 = vsel %vm236, 1, 0
    %v253 = vsel %vm237, 1, 0
    %v254 = vsel %vm238, 1, 0
    %v255 = vsel %vm239, 1, 0
    %v256 = vsel %vm240, 1, 0
    %v257 = vsel %vm241, 1, 0
    %v258 = vsel %vm242, 1, 0
    %v259 = vsel %vm243, 1, 0
    %v260 = vsel %vm244, 1, 0
    %v261 = vcvt.s32.f32 %v245
    %v262 = vcvt.s32.f32 %v246
    %v263 = vcvt.s32.f32 %v247
    %v264 = vcvt.s32.f32 %v248
    %v265 = vcvt.s32.f32 %v249
    %v266 = vcvt.s32.f32 %v250
    %v267 = vcvt.s32.f32 %v251
    %v268 = vcvt.s32.f32 %v252
    %v269 = vcvt.s32.f32 %v253
    %v270 = vcvt.s32.f32 %v254
    %v271 = vcvt.s32.f32 %v255
    %v272 = vcvt.s32.f32 %v256
    %v273 = vcvt.s32.f32 %v257
    %v274 = vcvt.s32.f32 %v258
    %v275 = vcvt.s32.f32 %v259
    %v276 = vcvt.s32.f32 %v260
    %v279 = vrot.slane %v138, 1
    %v280 = vrot.slane %v138, 2
    %v281 = vrot.slane %v138, 3
    %v282 = vrot.slane %v138, 4
    %v283 = vrot.slane %v138, 5
    %v284 = vrot.slane %v138, 6
    %v285 = vrot.slane %v138, 7
    %v286 = vrot.slane %v139, 1
    %v287 = vrot.slane %v139, 2
    %v288 = vrot.slane %v139, 3
    %v289 = vrot.slane %v139, 4
    %v290 = vrot.slane %v139, 5
    %v291 = vrot.slane %v139, 6
    %v292 = vrot.slane %v139, 7
    %v293 = vsub.f32 %v134, %v163
    %v294 = vsub.f32 %v134, %v164
    %v295 = vsub.f32 %v134, %v165
    %v296 = vsub.f32 %v134, %v166
    %v297 = vsub.f32 %v134, %v167
    %v298 = vsub.f32 %v134, %v168
    %v299 = vsub.f32 %v134, %v169
    %v300 = vsub.f32 %v134, %v170
    %v301 = vsub.f32 %v134, %v171
    %v302 = vsub.f32 %v134, %v172
    %v303 = vsub.f32 %v134, %v173
    %v304 = vsub.f32 %v134, %v174
    %v305 = vsub.f32 %v134, %v175
    %v306 = vsub.f32 %v134, %v176
    %v307 = vsub.f32 %v134, %v177
    %v308 = vsub.f32 %v134, %v178
    %v309 = vperm.slane %v138, 0
    %v310 = vperm.slane %v279, 0
    %v311 = vperm.slane %v280, 0
    %v312 = vperm.slane %v281, 0
    %v313 = vperm.slane %v282, 0
    %v314 = vperm.slane %v283, 0
    %v315 = vperm.slane %v284, 0
    %v316 = vperm.slane %v285, 0
    %v317 = vperm.slane %v139, 0
    %v318 = vperm.slane %v286, 0
    %v319 = vperm.slane %v287, 0
    %v320 = vperm.slane %v288, 0
    %v321 = vperm.slane %v289, 0
    %v322 = vperm.slane %v290, 0
    %v323 = vperm.slane %v291, 0
    %v324 = vperm.slane %v292, 0
    %v341 = vmul.f32 %v293, %v309
    %v342 = vmul.f32 %v294, %v310
    %v343 = vmul.f32 %v295, %v311
    %v344 = vmul.f32 %v296, %v312
    %v345 = vmul.f32 %v297, %v313
    %v346 = vmul.f32 %v298, %v314
    %v347 = vmul.f32 %v299, %v315
    %v348 = vmul.f32 %v300, %v316
    %v349 = vmul.f32 %v301, %v317
    %v350 = vmul.f32 %v302, %v318
    %v351 = vmul.f32 %v303, %v319
    %v352 = vmul.f32 %v304, %v320
    %v353 = vmul.f32 %v305, %v321
    %v354 = vmul.f32 %v306, %v322
    %v355 = vmul.f32 %v307, %v323
    %v356 = vmul.f32 %v308, %v324
    %v357 = vmul.f32 %v341, %v261
    %v358 = vmul.f32 %v342, %v262
    %v359 = vmul.f32 %v343, %v263
    %v360 = vmul.f32 %v344, %v264
    %v361 = vmul.f32 %v345, %v265
    %v362 = vmul.f32 %v346, %v266
    %v363 = vmul.f32 %v347, %v267
    %v364 = vmul.f32 %v348, %v268
    %v365 = vmul.f32 %v349, %v269
    %v366 = vmul.f32 %v350, %v270
    %v367 = vmul.f32 %v351, %v271
    %v368 = vmul.f32 %v352, %v272
    %v369 = vmul.f32 %v353, %v273
    %v370 = vmul.f32 %v354, %v274
    %v371 = vmul.f32 %v355, %v275
    %v372 = vsub.f32 1.0, %v342
    %v373 = vsub.f32 1.0, %v343
    %v374 = vsub.f32 1.0, %v344
    %v375 = vsub.f32 1.0, %v345
    %v376 = vsub.f32 1.0, %v346
    %v377 = vsub.f32 1.0, %v347
    %v378 = vsub.f32 1.0, %v348
    %v379 = vsub.f32 1.0, %v349
    %v380 = vsub.f32 1.0, %v350
    %v381 = vsub.f32 1.0, %v351
    %v382 = vsub.f32 1.0, %v352
    %v383 = vsub.f32 1.0, %v353
    %v384 = vsub.f32 1.0, %v354
    %v385 = vsub.f32 1.0, %v355
    %v386 = vsub.f32 1.0, %v356
    %v387 = vmul.f32 %v372, %v262
    %v388 = vmul.f32 %v373, %v263
    %v389 = vmul.f32 %v374, %v264
    %v390 = vmul.f32 %v375, %v265
    %v391 = vmul.f32 %v376, %v266
    %v392 = vmul.f32 %v377, %v267
    %v393 = vmul.f32 %v378, %v268
    %v394 = vmul.f32 %v379, %v269
    %v395 = vmul.f32 %v380, %v270
    %v396 = vmul.f32 %v381, %v271
    %v397 = vmul.f32 %v382, %v272
    %v398 = vmul.f32 %v383, %v273
    %v399 = vmul.f32 %v384, %v274
    %v400 = vmul.f32 %v385, %v275
    %v401 = vmul.f32 %v386, %v276
    %v402 = vadd.f32 %v357, %v387
    %v403 = vadd.f32 %v358, %v388
    %v404 = vadd.f32 %v359, %v389
    %v405 = vadd.f32 %v360, %v390
    %v406 = vadd.f32 %v361, %v391
    %v407 = vadd.f32 %v362, %v392
    %v408 = vadd.f32 %v363, %v393
    %v409 = vadd.f32 %v364, %v394
    %v410 = vadd.f32 %v365, %v395
    %v411 = vadd.f32 %v366, %v396
    %v412 = vadd.f32 %v367, %v397
    %v413 = vadd.f32 %v368, %v398
    %v414 = vadd.f32 %v369, %v399
    %v415 = vadd.f32 %v370, %v400
    %v416 = vadd.f32 %v371, %v401
    %v419 = vrot.slane %v140, 1
    %v420 = vrot.slane %v140, 2
    %v421 = vrot.slane %v140, 3
    %v422 = vrot.slane %v140, 4
    %v423 = vrot.slane %v140, 5
    %v424 = vrot.slane %v140, 6
    %v425 = vrot.slane %v140, 7
    %v426 = vrot.slane %v141, 1
    %v427 = vrot.slane %v141, 2
    %v428 = vrot.slane %v141, 3
    %v429 = vrot.slane %v141, 4
    %v430 = vrot.slane %v141, 5
    %v431 = vrot.slane %v141, 6
    %v432 = vperm.slane %v140, 0
    %v433 = vperm.slane %v419, 0
    %v434 = vperm.slane %v420, 0
    %v435 = vperm.slane %v421, 0
    %v436 = vperm.slane %v422, 0
    %v437 = vperm.slane %v423, 0
    %v438 = vperm.slane %v424, 0
    %v439 = vperm.slane %v425, 0
    %v440 = vperm.slane %v141, 0
    %v441 = vperm.slane %v426, 0
    %v442 = vperm.slane %v427, 0
    %v443 = vperm.slane %v428, 0
    %v444 = vperm.slane %v429, 0
    %v445 = vperm.slane %v430, 0
    %v446 = vperm.slane %v431, 0
    %v462 = vmul.f32 %v293, %v432
    %v463 = vmul.f32 %v294, %v433
    %v464 = vmul.f32 %v295, %v434
    %v465 = vmul.f32 %v296, %v435
    %v466 = vmul.f32 %v297, %v436
    %v467 = vmul.f32 %v298, %v437
    %v468 = vmul.f32 %v299, %v438
    %v469 = vmul.f32 %v300, %v439
    %v470 = vmul.f32 %v301, %v440
    %v471 = vmul.f32 %v302, %v441
    %v472 = vmul.f32 %v303, %v442
    %v473 = vmul.f32 %v304, %v443
    %v474 = vmul.f32 %v305, %v444
    %v475 = vmul.f32 %v306, %v445
    %v476 = vmul.f32 %v307, %v446
    %v477 = vmul.f32 %v462, %v402
    %v478 = vmul.f32 %v463, %v403
    %v479 = vmul.f32 %v464, %v404
    %v480 = vmul.f32 %v465, %v405
    %v481 = vmul.f32 %v466, %v406
    %v482 = vmul.f32 %v467, %v407
    %v483 = vmul.f32 %v468, %v408
    %v484 = vmul.f32 %v469, %v409
    %v485 = vmul.f32 %v470, %v410
    %v486 = vmul.f32 %v471, %v411
    %v487 = vmul.f32 %v472, %v412
    %v488 = vmul.f32 %v473, %v413
    %v489 = vmul.f32 %v474, %v414
    %v490 = vmul.f32 %v475, %v415
    %v491 = vsub.f32 1.0, %v463
    %v492 = vsub.f32 1.0, %v464
    %v493 = vsub.f32 1.0, %v465
    %v494 = vsub.f32 1.0, %v466
    %v495 = vsub.f32 1.0, %v467
    %v496 = vsub.f32 1.0, %v468
    %v497 = vsub.f32 1.0, %v469
    %v498 = vsub.f32 1.0, %v470
    %v499 = vsub.f32 1.0, %v471
    %v500 = vsub.f32 1.0, %v472
    %v501 = vsub.f32 1.0, %v473
    %v502 = vsub.f32 1.0, %v474
    %v503 = vsub.f32 1.0, %v475
    %v504 = vsub.f32 1.0, %v476
    %v505 = vmul.f32 %v491, %v403
    %v506 = vmul.f32 %v492, %v404
    %v507 = vmul.f32 %v493, %v405
    %v508 = vmul.f32 %v494, %v406
    %v509 = vmul.f32 %v495, %v407
    %v510 = vmul.f32 %v496, %v408
    %v511 = vmul.f32 %v497, %v409
    %v512 = vmul.f32 %v498, %v410
    %v513 = vmul.f32 %v499, %v411
    %v514 = vmul.f32 %v500, %v412
    %v515 = vmul.f32 %v501, %v413
    %v516 = vmul.f32 %v502, %v414
    %v517 = vmul.f32 %v503, %v415
    %v518 = vmul.f32 %v504, %v416
    %v519 = vadd.f32 %v477, %v505
    %v520 = vadd.f32 %v478, %v506
    %v521 = vadd.f32 %v479, %v507
    %v522 = vadd.f32 %v480, %v508
    %v523 = vadd.f32 %v481, %v509
    %v524 = vadd.f32 %v482, %v510
    %v525 = vadd.f32 %v483, %v511
    %v526 = vadd.f32 %v484, %v512
    %v527 = vadd.f32 %v485, %v513
    %v528 = vadd.f32 %v486, %v514
    %v529 = vadd.f32 %v487, %v515
    %v530 = vadd.f32 %v488, %v516
    %v531 = vadd.f32 %v489, %v517
    %v532 = vadd.f32 %v490, %v518
    %535 = vst [vmem:[#allocation1] sm:$0xff] %v141
    %s536 = scalar_lea.vmem [#allocation1], 7
    %v537 = vld [vmem:[%s536] ss:$9 sm:$0xff]
    %538 = vst [vmem:[#allocation1] sm:$0xff] %v142
    %v539 = vld [vmem:[#allocation1] ss:$9 sm:$0xff]
    %s540 = scalar_lea.vmem [#allocation1], 1
    %v541 = vld [vmem:[%s540] ss:$9 sm:$0xff]
    %s542 = scalar_lea.vmem [#allocation1], 2
    %v543 = vld [vmem:[%s542] ss:$9 sm:$0xff]
    %s544 = scalar_lea.vmem [#allocation1], 3
    %v545 = vld [vmem:[%s544] ss:$9 sm:$0xff]
    %s546 = scalar_lea.vmem [#allocation1], 4
    %v547 = vld [vmem:[%s546] ss:$9 sm:$0xff]
    %s548 = scalar_lea.vmem [#allocation1], 5
    %v549 = vld [vmem:[%s548] ss:$9 sm:$0xff]
    %s550 = scalar_lea.vmem [#allocation1], 6
    %v551 = vld [vmem:[%s550] ss:$9 sm:$0xff]
    %v552 = vld [vmem:[%s536] ss:$9 sm:$0xff]
    %553 = vst [vmem:[#allocation1] sm:$0xff] %v143
    %v554 = vld [vmem:[#allocation1] ss:$9 sm:$0xff]
    %v555 = vld [vmem:[%s540] ss:$9 sm:$0xff]
    %v556 = vld [vmem:[%s542] ss:$9 sm:$0xff]
    %v557 = vld [vmem:[%s544] ss:$9 sm:$0xff]
    %v558 = vld [vmem:[%s546] ss:$9 sm:$0xff]
    %v559 = vperm.slane %v537, 0
    %v560 = vperm.slane %v539, 0
    %v561 = vperm.slane %v541, 0
    %v562 = vperm.slane %v543, 0
    %v563 = vperm.slane %v545, 0
    %v564 = vperm.slane %v547, 0
    %v565 = vperm.slane %v549, 0
    %v566 = vperm.slane %v551, 0
    %v567 = vperm.slane %v552, 0
    %v568 = vperm.slane %v554, 0
    %v569 = vperm.slane %v555, 0
    %v570 = vperm.slane %v556, 0
    %v571 = vperm.slane %v557, 0
    %v572 = vperm.slane %v558, 0
    %v587 = vmul.f32 %v293, %v559
    %v588 = vmul.f32 %v294, %v560
    %v589 = vmul.f32 %v295, %v561
    %v590 = vmul.f32 %v296, %v562
    %v591 = vmul.f32 %v297, %v563
    %v592 = vmul.f32 %v298, %v564
    %v593 = vmul.f32 %v299, %v565
    %v594 = vmul.f32 %v300, %v566
    %v595 = vmul.f32 %v301, %v567
    %v596 = vmul.f32 %v302, %v568
    %v597 = vmul.f32 %v303, %v569
    %v598 = vmul.f32 %v304, %v570
    %v599 = vmul.f32 %v305, %v571
    %v600 = vmul.f32 %v306, %v572
    %v601 = vmul.f32 %v587, %v519
    %v602 = vmul.f32 %v588, %v520
    %v603 = vmul.f32 %v589, %v521
    %v604 = vmul.f32 %v590, %v522
    %v605 = vmul.f32 %v591, %v523
    %v606 = vmul.f32 %v592, %v524
    %v607 = vmul.f32 %v593, %v525
    %v608 = vmul.f32 %v594, %v526
    %v609 = vmul.f32 %v595, %v527
    %v610 = vmul.f32 %v596, %v528
    %v611 = vmul.f32 %v597, %v529
    %v612 = vmul.f32 %v598, %v530
    %v613 = vmul.f32 %v599, %v531
    %v614 = vsub.f32 1.0, %v588
    %v615 = vsub.f32 1.0, %v589
    %v616 = vsub.f32 1.0, %v590
    %v617 = vsub.f32 1.0, %v591
    %v618 = vsub.f32 1.0, %v592
    %v619 = vsub.f32 1.0, %v593
    %v620 = vsub.f32 1.0, %v594
    %v621 = vsub.f32 1.0, %v595
    %v622 = vsub.f32 1.0, %v596
    %v623 = vsub.f32 1.0, %v597
    %v624 = vsub.f32 1.0, %v598
    %v625 = vsub.f32 1.0, %v599
    %v626 = vsub.f32 1.0, %v600
    %v627 = vmul.f32 %v614, %v520
    %v628 = vmul.f32 %v615, %v521
    %v629 = vmul.f32 %v616, %v522
    %v630 = vmul.f32 %v617, %v523
    %v631 = vmul.f32 %v618, %v524
    %v632 = vmul.f32 %v619, %v525
    %v633 = vmul.f32 %v620, %v526
    %v634 = vmul.f32 %v621, %v527
    %v635 = vmul.f32 %v622, %v528
    %v636 = vmul.f32 %v623, %v529
    %v637 = vmul.f32 %v624, %v530
    %v638 = vmul.f32 %v625, %v531
    %v639 = vmul.f32 %v626, %v532
    %v640 = vadd.f32 %v601, %v627
    %v641 = vadd.f32 %v602, %v628
    %v642 = vadd.f32 %v603, %v629
    %v643 = vadd.f32 %v604, %v630
    %v644 = vadd.f32 %v605, %v631
    %v645 = vadd.f32 %v606, %v632
    %v646 = vadd.f32 %v607, %v633
    %v647 = vadd.f32 %v608, %v634
    %v648 = vadd.f32 %v609, %v635
    %v649 = vadd.f32 %v610, %v636
    %v650 = vadd.f32 %v611, %v637
    %v651 = vadd.f32 %v612, %v638
    %v652 = vadd.f32 %v613, %v639
    %655 = vst [vmem:[#allocation1] sm:$0xff] %v143
    %s656 = scalar_lea.vmem [#allocation1], 5
    %v657 = vld [vmem:[%s656] ss:$9 sm:$0xff]
    %s658 = scalar_lea.vmem [#allocation1], 6
    %v659 = vld [vmem:[%s658] ss:$9 sm:$0xff]
    %s660 = scalar_lea.vmem [#allocation1], 7
    %v661 = vld [vmem:[%s660] ss:$9 sm:$0xff]
    %662 = vst [vmem:[#allocation1] sm:$0xff] %v144
    %v663 = vld [vmem:[#allocation1] ss:$9 sm:$0xff]
    %s664 = scalar_lea.vmem [#allocation1], 1
    %v665 = vld [vmem:[%s664] ss:$9 sm:$0xff]
    %s666 = scalar_lea.vmem [#allocation1], 2
    %v667 = vld [vmem:[%s666] ss:$9 sm:$0xff]
    %s668 = scalar_lea.vmem [#allocation1], 3
    %v669 = vld [vmem:[%s668] ss:$9 sm:$0xff]
    %s670 = scalar_lea.vmem [#allocation1], 4
    %v671 = vld [vmem:[%s670] ss:$9 sm:$0xff]
    %v672 = vld [vmem:[%s656] ss:$9 sm:$0xff]
    %v673 = vld [vmem:[%s658] ss:$9 sm:$0xff]
    %v674 = vld [vmem:[%s660] ss:$9 sm:$0xff]
    %675 = vst [vmem:[#allocation1] sm:$0xff] %v145
    %v676 = vld [vmem:[#allocation1] ss:$9 sm:$0xff]
    %v677 = vld [vmem:[%s664] ss:$9 sm:$0xff]
    %v678 = vperm.slane %v657, 0
    %v679 = vperm.slane %v659, 0
    %v680 = vperm.slane %v661, 0
    %v681 = vperm.slane %v663, 0
    %v682 = vperm.slane %v665, 0
    %v683 = vperm.slane %v667, 0
    %v684 = vperm.slane %v669, 0
    %v685 = vperm.slane %v671, 0
    %v686 = vperm.slane %v672, 0
    %v687 = vperm.slane %v673, 0
    %v688 = vperm.slane %v674, 0
    %v689 = vperm.slane %v676, 0
    %v690 = vperm.slane %v677, 0
    %v704 = vmul.f32 %v293, %v678
    %v705 = vmul.f32 %v294, %v679
    %v706 = vmul.f32 %v295, %v680
    %v707 = vmul.f32 %v296, %v681
    %v708 = vmul.f32 %v297, %v682
    %v709 = vmul.f32 %v298, %v683
    %v710 = vmul.f32 %v299, %v684
    %v711 = vmul.f32 %v300, %v685
    %v712 = vmul.f32 %v301, %v686
    %v713 = vmul.f32 %v302, %v687
    %v714 = vmul.f32 %v303, %v688
    %v715 = vmul.f32 %v304, %v689
    %v716 = vmul.f32 %v305, %v690
    %v717 = vmul.f32 %v704, %v640
    %v718 = vmul.f32 %v705, %v641
    %v719 = vmul.f32 %v706, %v642
    %v720 = vmul.f32 %v707, %v643
    %v721 = vmul.f32 %v708, %v644
    %v722 = vmul.f32 %v709, %v645
    %v723 = vmul.f32 %v710, %v646
    %v724 = vmul.f32 %v711, %v647
    %v725 = vmul.f32 %v712, %v648
    %v726 = vmul.f32 %v713, %v649
    %v727 = vmul.f32 %v714, %v650
    %v728 = vmul.f32 %v715, %v651
    %v729 = vsub.f32 1.0, %v705
    %v730 = vsub.f32 1.0, %v706
    %v731 = vsub.f32 1.0, %v707
    %v732 = vsub.f32 1.0, %v708
    %v733 = vsub.f32 1.0, %v709
    %v734 = vsub.f32 1.0, %v710
    %v735 = vsub.f32 1.0, %v711
    %v736 = vsub.f32 1.0, %v712
    %v737 = vsub.f32 1.0, %v713
    %v738 = vsub.f32 1.0, %v714
    %v739 = vsub.f32 1.0, %v715
    %v740 = vsub.f32 1.0, %v716
    %v741 = vmul.f32 %v729, %v641
    %v742 = vmul.f32 %v730, %v642
    %v743 = vmul.f32 %v731, %v643
    %v744 = vmul.f32 %v732, %v644
    %v745 = vmul.f32 %v733, %v645
    %v746 = vmul.f32 %v734, %v646
    %v747 = vmul.f32 %v735, %v647
    %v748 = vmul.f32 %v736, %v648
    %v749 = vmul.f32 %v737, %v649
    %v750 = vmul.f32 %v738, %v650
    %v751 = vmul.f32 %v739, %v651
    %v752 = vmul.f32 %v740, %v652
    %v753 = vadd.f32 %v717, %v741
    %v754 = vadd.f32 %v718, %v742
    %v755 = vadd.f32 %v719, %v743
    %v756 = vadd.f32 %v720, %v744
    %v757 = vadd.f32 %v721, %v745
    %v758 = vadd.f32 %v722, %v746
    %v759 = vadd.f32 %v723, %v747
    %v760 = vadd.f32 %v724, %v748
    %v761 = vadd.f32 %v725, %v749
    %v762 = vadd.f32 %v726, %v750
    %v763 = vadd.f32 %v727, %v751
    %v764 = vadd.f32 %v728, %v752
    %v765 = vxor.u32 %v134, 2147483648
    %v766 = vmul.f32 %v765, 1.442695
    %v767 = vpow.pop %v766
    %v768 = vadd.f32 %v767, 1.0
    %v769 = vrcp.pop %v768
    %v770 = vmul.f32 %v768, %v769
    %v771 = vsub.f32 1.0, %v770
    %v772 = vmul.f32 %v769, %v771
    %v773 = vadd.f32 %v769, %v772
    %vm774 = vweird.f32 %v768
    %vm775 = vweird.f32 %v769
    %vm776 = vmor %vm774, %vm775
    %v777 = vsel %vm776, %v769, %v773
    %v778 = vand.u32 2147483647, %v768
    %vm779 = vcmp.eq.f32.partialorder %v778, 8.507059e+37
    %v780 = vand.u32 %v768, 2147483648
    %v781 = vor.u32 1.1754944e-38, %v780
    %v782 = vsel %vm779, %v781, %v777
    %v783 = vmul.f32 1.0, %v782
    %v784 = vmul.f32 %v134, %v783
    %785 = vst [vmem:[#allocation2] sm:$0xff] %v784
    %786 = vst [vmem:[#allocation2 + $0x8] sm:$0xff] %v753
    %787 = vst [vmem:[#allocation2 + $0x10] sm:$0xff] %v754
    %788 = vst [vmem:[#allocation2 + $0x18] sm:$0xff] %v755
    %789 = vst [vmem:[#allocation2 + $0x20] sm:$0xff] %v756
    %790 = vst [vmem:[#allocation2 + $0x28] sm:$0xff] %v757
    %791 = vst [vmem:[#allocation2 + $0x30] sm:$0xff] %v758
    %792 = vst [vmem:[#allocation2 + $0x38] sm:$0xff] %v759
    %793 = vst [vmem:[#allocation2 + $0x40] sm:$0xff] %v760
    %794 = vst [vmem:[#allocation2 + $0x48] sm:$0xff] %v761
    %795 = vst [vmem:[#allocation2 + $0x50] sm:$0xff] %v762
    %796 = vst [vmem:[#allocation2 + $0x58] sm:$0xff] %v763
    %797 = vst [vmem:[#allocation2 + $0x60] sm:$0xff] %v764
    %v798 = vld [vmem:[#allocation2] sm:$0xff]
    %v799 = vld [vmem:[#allocation2 + $0x8] sm:$0xff]
    %v800 = vld [vmem:[#allocation2 + $0x10] sm:$0xff]
    %v801 = vld [vmem:[#allocation2 + $0x18] sm:$0xff]
    %v802 = vld [vmem:[#allocation2 + $0x20] sm:$0xff]
    %v803 = vld [vmem:[#allocation2 + $0x28] sm:$0xff]
    %v804 = vld [vmem:[#allocation2 + $0x30] sm:$0xff]
    %v805 = vld [vmem:[#allocation2 + $0x38] sm:$0xff]
    %v806 = vld [vmem:[#allocation2 + $0x40] sm:$0xff]
    %v807 = vld [vmem:[#allocation2 + $0x48] sm:$0xff]
    %v808 = vld [vmem:[#allocation2 + $0x50] sm:$0xff]
    %v809 = vld [vmem:[#allocation2 + $0x58] sm:$0xff]
    %v810 = vld [vmem:[#allocation2 + $0x60] sm:$0xff]
    %v811 = vld [vmem:[#allocation10] sm:$0xff]
    %v812 = vld [vmem:[#allocation10 + $0x8] sm:$0xff]
    %v813 = vld [vmem:[#allocation10 + $0x10] sm:$0xff]
    %v814 = vld [vmem:[#allocation10 + $0x18] sm:$0xff]
    %v815 = vld [vmem:[#allocation10 + $0x20] sm:$0xff]
    %v816 = vld [vmem:[#allocation10 + $0x28] sm:$0xff]
    %v817 = vld [vmem:[#allocation10 + $0x30] sm:$0xff]
    %v818 = vld [vmem:[#allocation10 + $0x38] sm:$0xff]
    %v819 = vld [vmem:[#allocation10 + $0x40] sm:$0xff]
    %v820 = vld [vmem:[#allocation10 + $0x48] sm:$0xff]
    %v821 = vld [vmem:[#allocation10 + $0x50] sm:$0xff]
    %v822 = vld [vmem:[#allocation10 + $0x58] sm:$0xff]
    %v823 = vld [vmem:[#allocation10 + $0x60] sm:$0xff]
    %v824 = vld [vmem:[#allocation10 + $0x68] sm:$0xff]
    %v825 = vld [vmem:[#allocation10 + $0x70] sm:$0xff]
    %v826 = vld [vmem:[#allocation10 + $0x78] sm:$0xff]
    %v827 = vld [vmem:[#allocation10 + $0x80] sm:$0xff]
    %v828 = vld [vmem:[#allocation10 + $0x88] sm:$0xff]
    %v829 = vld [vmem:[#allocation10 + $0x90] sm:$0xff]
    %v830 = vld [vmem:[#allocation10 + $0x98] sm:$0xff]
    %v831 = vld [vmem:[#allocation10 + $0xa0] sm:$0xff]
    %v832 = vld [vmem:[#allocation10 + $0xa8] sm:$0xff]
    %v833 = vld [vmem:[#allocation10 + $0xb0] sm:$0xff]
    %v834 = vld [vmem:[#allocation10 + $0xb8] sm:$0xff]
    %v835 = vld [vmem:[#allocation10 + $0xc0] sm:$0xff]
    %v836 = vld [vmem:[#allocation10 + $0xc8] sm:$0xff]
    %v837 = vld [vmem:[#allocation10 + $0xd0] sm:$0xff]
    %v838 = vld [vmem:[#allocation10 + $0xd8] sm:$0xff]
    %v839 = vld [vmem:[#allocation10 + $0xe0] sm:$0xff]
    %v840 = vld [vmem:[#allocation10 + $0xe8] sm:$0xff]
    %v841 = vld [vmem:[#allocation10 + $0xf0] sm:$0xff]
    %v842 = vld [vmem:[#allocation10 + $0xf8] sm:$0xff]
    %v843 = vld [vmem:[#allocation10 + $0x100] sm:$0xff]
    %v844 = vld [vmem:[#allocation10 + $0x108] sm:$0xff]
    %v845 = vld [vmem:[#allocation10 + $0x110] sm:$0xff]
    %v846 = vld [vmem:[#allocation10 + $0x118] sm:$0xff]
    %v847 = vld [vmem:[#allocation10 + $0x120] sm:$0xff]
    %v848 = vld [vmem:[#allocation10 + $0x128] sm:$0xff]
    %v849 = vld [vmem:[#allocation10 + $0x130] sm:$0xff]
    %v850 = vld [vmem:[#allocation10 + $0x138] sm:$0xff]
    %v851 = vld [vmem:[#allocation10 + $0x140] sm:$0xff]
    %v852 = vld [vmem:[#allocation10 + $0x148] sm:$0xff]
    %v853 = vld [vmem:[#allocation10 + $0x150] sm:$0xff]
    %v854 = vld [vmem:[#allocation10 + $0x158] sm:$0xff]
    %v855 = vld [vmem:[#allocation10 + $0x160] sm:$0xff]
    %v856 = vld [vmem:[#allocation10 + $0x168] sm:$0xff]
    %v857 = vld [vmem:[#allocation10 + $0x170] sm:$0xff]
    %v858 = vld [vmem:[#allocation10 + $0x178] sm:$0xff]
    %v859 = vld [vmem:[#allocation10 + $0x180] sm:$0xff]
    %v860 = vld [vmem:[#allocation10 + $0x188] sm:$0xff]
    %v861 = vld [vmem:[#allocation10 + $0x190] sm:$0xff]
    %v862 = vld [vmem:[#allocation10 + $0x198] sm:$0xff]
    %v863 = vld [vmem:[#allocation10 + $0x1a0] sm:$0xff]
    %v864 = vld [vmem:[#allocation10 + $0x1a8] sm:$0xff]
    %v865 = vld [vmem:[#allocation10 + $0x1b0] sm:$0xff]
    %v866 = vld [vmem:[#allocation10 + $0x1b8] sm:$0xff]
    %v867 = vld [vmem:[#allocation10 + $0x1c0] sm:$0xff]
    %v868 = vld [vmem:[#allocation10 + $0x1c8] sm:$0xff]
    %v869 = vld [vmem:[#allocation10 + $0x1d0] sm:$0xff]
    %v870 = vld [vmem:[#allocation10 + $0x1d8] sm:$0xff]
    %v871 = vld [vmem:[#allocation10 + $0x1e0] sm:$0xff]
    %v872 = vld [vmem:[#allocation10 + $0x1e8] sm:$0xff]
    %v873 = vld [vmem:[#allocation10 + $0x1f0] sm:$0xff]
    %v874 = vld [vmem:[#allocation10 + $0x1f8] sm:$0xff]
    %v875 = vld [vmem:[#allocation10 + $0x200] sm:$0xff]
    %v876 = vld [vmem:[#allocation10 + $0x208] sm:$0xff]
    %v877 = vld [vmem:[#allocation10 + $0x210] sm:$0xff]
    %v878 = vld [vmem:[#allocation10 + $0x218] sm:$0xff]
    %v879 = vld [vmem:[#allocation10 + $0x220] sm:$0xff]
    %v880 = vld [vmem:[#allocation10 + $0x228] sm:$0xff]
    %v881 = vld [vmem:[#allocation10 + $0x230] sm:$0xff]
    %v882 = vld [vmem:[#allocation10 + $0x238] sm:$0xff]
    %v883 = vld [vmem:[#allocation10 + $0x240] sm:$0xff]
    %v884 = vld [vmem:[#allocation10 + $0x248] sm:$0xff]
    %v885 = vld [vmem:[#allocation10 + $0x250] sm:$0xff]
    %v886 = vld [vmem:[#allocation10 + $0x258] sm:$0xff]
    %v887 = vld [vmem:[#allocation10 + $0x260] sm:$0xff]
    %v888 = vld [vmem:[#allocation10 + $0x268] sm:$0xff]
    %v889 = vld [vmem:[#allocation10 + $0x270] sm:$0xff]
    %v890 = vld [vmem:[#allocation10 + $0x278] sm:$0xff]
    %v891 = vld [vmem:[#allocation10 + $0x280] sm:$0xff]
    %v892 = vld [vmem:[#allocation10 + $0x288] sm:$0xff]
    %v893 = vld [vmem:[#allocation10 + $0x290] sm:$0xff]
    %v894 = vld [vmem:[#allocation10 + $0x298] sm:$0xff]
    %v895 = vld [vmem:[#allocation10 + $0x2a0] sm:$0xff]
    %v896 = vld [vmem:[#allocation10 + $0x2a8] sm:$0xff]
    %v897 = vld [vmem:[#allocation10 + $0x2b0] sm:$0xff]
    %v898 = vld [vmem:[#allocation10 + $0x2b8] sm:$0xff]
    %v899 = vld [vmem:[#allocation10 + $0x2c0] sm:$0xff]
    %v900 = vld [vmem:[#allocation10 + $0x2c8] sm:$0xff]
    %v901 = vld [vmem:[#allocation10 + $0x2d0] sm:$0xff]
    %v902 = vld [vmem:[#allocation10 + $0x2d8] sm:$0xff]
    %v903 = vld [vmem:[#allocation10 + $0x2e0] sm:$0xff]
    %v904 = vld [vmem:[#allocation10 + $0x2e8] sm:$0xff]
    %v905 = vld [vmem:[#allocation10 + $0x2f0] sm:$0xff]
    %v906 = vld [vmem:[#allocation10 + $0x2f8] sm:$0xff]
    %v907 = vld [vmem:[#allocation10 + $0x300] sm:$0xff]
    %v908 = vld [vmem:[#allocation10 + $0x308] sm:$0xff]
    %v909 = vld [vmem:[#allocation10 + $0x310] sm:$0xff]
    %v910 = vld [vmem:[#allocation10 + $0x318] sm:$0xff]
    %v911 = vld [vmem:[#allocation10 + $0x320] sm:$0xff]
    %v912 = vld [vmem:[#allocation10 + $0x328] sm:$0xff]
    %v913 = vld [vmem:[#allocation10 + $0x330] sm:$0xff]
    %v914 = vld [vmem:[#allocation10 + $0x338] sm:$0xff]
    %v915 = vld [vmem:[#allocation10 + $0x340] sm:$0xff]
    %v916 = vld [vmem:[#allocation10 + $0x348] sm:$0xff]
    %v917 = vld [vmem:[#allocation10 + $0x350] sm:$0xff]
    %v918 = vld [vmem:[#allocation10 + $0x358] sm:$0xff]
    %v919 = vld [vmem:[#allocation10 + $0x360] sm:$0xff]
    %v920 = vld [vmem:[#allocation10 + $0x368] sm:$0xff]
    %v921 = vld [vmem:[#allocation10 + $0x370] sm:$0xff]
    %v922 = vld [vmem:[#allocation10 + $0x378] sm:$0xff]
    %v923 = vld [vmem:[#allocation10 + $0x380] sm:$0xff]
    %v924 = vld [vmem:[#allocation10 + $0x388] sm:$0xff]
    %v925 = vld [vmem:[#allocation10 + $0x390] sm:$0xff]
    %v926 = vld [vmem:[#allocation10 + $0x398] sm:$0xff]
    %v927 = vld [vmem:[#allocation10 + $0x3a0] sm:$0xff]
    %v928 = vld [vmem:[#allocation10 + $0x3a8] sm:$0xff]
    %v929 = vld [vmem:[#allocation10 + $0x3b0] sm:$0xff]
    %v930 = vld [vmem:[#allocation10 + $0x3b8] sm:$0xff]
    %v931 = vld [vmem:[#allocation10 + $0x3c0] sm:$0xff]
    %v932 = vld [vmem:[#allocation10 + $0x3c8] sm:$0xff]
    %v933 = vld [vmem:[#allocation10 + $0x3d0] sm:$0xff]
    %v934 = vld [vmem:[#allocation10 + $0x3d8] sm:$0xff]
    %v935 = vld [vmem:[#allocation10 + $0x3e0] sm:$0xff]
    %v936 = vld [vmem:[#allocation10 + $0x3e8] sm:$0xff]
    %v937 = vld [vmem:[#allocation10 + $0x3f0] sm:$0xff]
    %v938 = vld [vmem:[#allocation10 + $0x3f8] sm:$0xff]
    %v939 = vld [vmem:[#allocation10 + $0x400] sm:$0xff]
    %v940 = vld [vmem:[#allocation10 + $0x408] sm:$0xff]
    %v941 = vld [vmem:[#allocation10 + $0x410] sm:$0xff]
    %v942 = vld [vmem:[#allocation10 + $0x418] sm:$0xff]
    %v943 = vld [vmem:[#allocation10 + $0x420] sm:$0xff]
    %v944 = vld [vmem:[#allocation10 + $0x428] sm:$0xff]
    %v945 = vld [vmem:[#allocation10 + $0x430] sm:$0xff]
    %v946 = vld [vmem:[#allocation10 + $0x438] sm:$0xff]
    %v947 = vld [vmem:[#allocation10 + $0x440] sm:$0xff]
    %v948 = vld [vmem:[#allocation10 + $0x448] sm:$0xff]
    %v949 = vld [vmem:[#allocation10 + $0x450] sm:$0xff]
    %v950 = vld [vmem:[#allocation10 + $0x458] sm:$0xff]
    %v951 = vld [vmem:[#allocation10 + $0x460] sm:$0xff]
    %v952 = vld [vmem:[#allocation10 + $0x468] sm:$0xff]
    %v953 = vld [vmem:[#allocation10 + $0x470] sm:$0xff]
    %v954 = vld [vmem:[#allocation10 + $0x478] sm:$0xff]
    %v955 = vld [vmem:[#allocation10 + $0x480] sm:$0xff]
    %v956 = vld [vmem:[#allocation10 + $0x488] sm:$0xff]
    %v957 = vld [vmem:[#allocation10 + $0x490] sm:$0xff]
    %v958 = vld [vmem:[#allocation10 + $0x498] sm:$0xff]
    %v959 = vld [vmem:[#allocation10 + $0x4a0] sm:$0xff]
    %v960 = vld [vmem:[#allocation10 + $0x4a8] sm:$0xff]
    %v961 = vld [vmem:[#allocation10 + $0x4b0] sm:$0xff]
    %v962 = vld [vmem:[#allocation10 + $0x4b8] sm:$0xff]
    %v963 = vld [vmem:[#allocation10 + $0x4c0] sm:$0xff]
    %v964 = vld [vmem:[#allocation10 + $0x4c8] sm:$0xff]
    %v965 = vld [vmem:[#allocation10 + $0x4d0] sm:$0xff]
    %v966 = vld [vmem:[#allocation10 + $0x4d8] sm:$0xff]
    %v967 = vld [vmem:[#allocation10 + $0x4e0] sm:$0xff]
    %v968 = vld [vmem:[#allocation10 + $0x4e8] sm:$0xff]
    %v969 = vld [vmem:[#allocation10 + $0x4f0] sm:$0xff]
    %v970 = vld [vmem:[#allocation10 + $0x4f8] sm:$0xff]
    %v971 = vld [vmem:[#allocation10 + $0x500] sm:$0xff]
    %v972 = vld [vmem:[#allocation10 + $0x508] sm:$0xff]
    %v973 = vld [vmem:[#allocation10 + $0x510] sm:$0xff]
    %v974 = vld [vmem:[#allocation10 + $0x518] sm:$0xff]
    %v975 = vld [vmem:[#allocation10 + $0x520] sm:$0xff]
    %v976 = vld [vmem:[#allocation10 + $0x528] sm:$0xff]
    %v977 = vld [vmem:[#allocation10 + $0x530] sm:$0xff]
    %v978 = vld [vmem:[#allocation10 + $0x538] sm:$0xff]
    %v979 = vld [vmem:[#allocation10 + $0x540] sm:$0xff]
    %v980 = vld [vmem:[#allocation10 + $0x548] sm:$0xff]
    %v981 = vld [vmem:[#allocation10 + $0x550] sm:$0xff]
    %v982 = vld [vmem:[#allocation10 + $0x558] sm:$0xff]
    %v983 = vld [vmem:[#allocation10 + $0x560] sm:$0xff]
    %v984 = vld [vmem:[#allocation10 + $0x568] sm:$0xff]
    %v985 = vld [vmem:[#allocation10 + $0x570] sm:$0xff]
    %v986 = vld [vmem:[#allocation10 + $0x578] sm:$0xff]
    %v987 = vld [vmem:[#allocation10 + $0x580] sm:$0xff]
    %v988 = vld [vmem:[#allocation10 + $0x588] sm:$0xff]
    %v989 = vld [vmem:[#allocation10 + $0x590] sm:$0xff]
    %v990 = vld [vmem:[#allocation10 + $0x598] sm:$0xff]
    %v991 = vld [vmem:[#allocation10 + $0x5a0] sm:$0xff]
    %v992 = vld [vmem:[#allocation10 + $0x5a8] sm:$0xff]
    %v993 = vld [vmem:[#allocation10 + $0x5b0] sm:$0xff]
    %v994 = vld [vmem:[#allocation10 + $0x5b8] sm:$0xff]
    %v995 = vld [vmem:[#allocation10 + $0x5c0] sm:$0xff]
    %v996 = vld [vmem:[#allocation10 + $0x5c8] sm:$0xff]
    %v997 = vld [vmem:[#allocation10 + $0x5d0] sm:$0xff]
    %v998 = vld [vmem:[#allocation10 + $0x5d8] sm:$0xff]
    %v999 = vld [vmem:[#allocation10 + $0x5e0] sm:$0xff]
    %v1000 = vld [vmem:[#allocation10 + $0x5e8] sm:$0xff]
    %v1001 = vld [vmem:[#allocation10 + $0x5f0] sm:$0xff]
    %v1002 = vld [vmem:[#allocation10 + $0x5f8] sm:$0xff]
    %v1003 = vld [vmem:[#allocation10 + $0x600] sm:$0xff]
    %v1004 = vld [vmem:[#allocation10 + $0x608] sm:$0xff]
    %v1005 = vld [vmem:[#allocation10 + $0x610] sm:$0xff]
    %v1006 = vld [vmem:[#allocation10 + $0x618] sm:$0xff]
    %v1007 = vld [vmem:[#allocation10 + $0x620] sm:$0xff]
    %v1008 = vld [vmem:[#allocation10 + $0x628] sm:$0xff]
    %v1009 = vld [vmem:[#allocation10 + $0x630] sm:$0xff]
    %v1010 = vld [vmem:[#allocation10 + $0x638] sm:$0xff]
    %v1011 = vld [vmem:[#allocation10 + $0x640] sm:$0xff]
    %v1012 = vld [vmem:[#allocation10 + $0x648] sm:$0xff]
    %v1013 = vld [vmem:[#allocation10 + $0x650] sm:$0xff]
    %v1014 = vld [vmem:[#allocation10 + $0x658] sm:$0xff]
    %v1015 = vld [vmem:[#allocation10 + $0x660] sm:$0xff]
    %v1016 = vld [vmem:[#allocation10 + $0x668] sm:$0xff]
    %v1017 = vld [vmem:[#allocation10 + $0x670] sm:$0xff]
    %v1018 = vld [vmem:[#allocation10 + $0x678] sm:$0xff]
    %1019 = vmatpush.msra.mxu0 %v826
    %1020 = vmatpush.msra.mxu0 %v825
    %1021 = vmatpush.msra.mxu0 %v824
    %1022 = vmatpush.msra.mxu0 %v823
    %1023 = vmatpush.msra.mxu0 %v822
    %1024 = vmatpush.msra.mxu0 %v821
    %1025 = vmatpush.msra.mxu0 %v820
    %1026 = vmatpush.msra.mxu0 %v819
    %1027 = vmatpush.msra.mxu0 %v818
    %1028 = vmatpush.msra.mxu0 %v817
    %1029 = vmatpush.msra.mxu0 %v816
    %1030 = vmatpush.msra.mxu0 %v815
    %1031 = vmatpush.msra.mxu0 %v814
    %1032 = vmatpush.msra.mxu0 %v813
    %1033 = vmatpush.msra.mxu0 %v812
    %1034 = vmatpush.msra.mxu0 %v811
    %1035 = vmatmul.f32.gmra.mxu0 %v798
    %v1036 = vpop.f32.mrf.mxu0
    %v1037 = vadd.f32 0.0, %v1036
    %1038 = vdwg.mxu0
    %1039 = vmatpush.msra.mxu0 %v842
    %1040 = vmatpush.msra.mxu0 %v841
    %1041 = vmatpush.msra.mxu0 %v840
    %1042 = vmatpush.msra.mxu0 %v839
    %1043 = vmatpush.msra.mxu0 %v838
    %1044 = vmatpush.msra.mxu0 %v837
    %1045 = vmatpush.msra.mxu0 %v836
    %1046 = vmatpush.msra.mxu0 %v835
    %1047 = vmatpush.msra.mxu0 %v834
    %1048 = vmatpush.msra.mxu0 %v833
    %1049 = vmatpush.msra.mxu0 %v832
    %1050 = vmatpush.msra.mxu0 %v831
    %1051 = vmatpush.msra.mxu0 %v830
    %1052 = vmatpush.msra.mxu0 %v829
    %1053 = vmatpush.msra.mxu0 %v828
    %1054 = vmatpush.msra.mxu0 %v827
    %1055 = vmatmul.f32.gmra.mxu0 %v799
    %v1056 = vpop.f32.mrf.mxu0
    %v1057 = vadd.f32 %v1037, %v1056
    %1058 = vdwg.mxu0
    %1059 = vmatpush.msra.mxu0 %v858
    %1060 = vmatpush.msra.mxu0 %v857
    %1061 = vmatpush.msra.mxu0 %v856
    %1062 = vmatpush.msra.mxu0 %v855
    %1063 = vmatpush.msra.mxu0 %v854
    %1064 = vmatpush.msra.mxu0 %v853
    %1065 = vmatpush.msra.mxu0 %v852
    %1066 = vmatpush.msra.mxu0 %v851
    %1067 = vmatpush.msra.mxu0 %v850
    %1068 = vmatpush.msra.mxu0 %v849
    %1069 = vmatpush.msra.mxu0 %v848
    %1070 = vmatpush.msra.mxu0 %v847
    %1071 = vmatpush.msra.mxu0 %v846
    %1072 = vmatpush.msra.mxu0 %v845
    %1073 = vmatpush.msra.mxu0 %v844
    %1074 = vmatpush.msra.mxu0 %v843
    %1075 = vmatmul.f32.gmra.mxu0 %v800
    %v1076 = vpop.f32.mrf.mxu0
    %v1077 = vadd.f32 %v1057, %v1076
    %1078 = vdwg.mxu0
    %1079 = vmatpush.msra.mxu0 %v874
    %1080 = vmatpush.msra.mxu0 %v873
    %1081 = vmatpush.msra.mxu0 %v872
    %1082 = vmatpush.msra.mxu0 %v871
    %1083 = vmatpush.msra.mxu0 %v870
    %1084 = vmatpush.msra.mxu0 %v869
    %1085 = vmatpush.msra.mxu0 %v868
    %1086 = vmatpush.msra.mxu0 %v867
    %1087 = vmatpush.msra.mxu0 %v866
    %1088 = vmatpush.msra.mxu0 %v865
    %1089 = vmatpush.msra.mxu0 %v864
    %1090 = vmatpush.msra.mxu0 %v863
    %1091 = vmatpush.msra.mxu0 %v862
    %1092 = vmatpush.msra.mxu0 %v861
    %1093 = vmatpush.msra.mxu0 %v860
    %1094 = vmatpush.msra.mxu0 %v859
    %1095 = vmatmul.f32.gmra.mxu0 %v801
    %v1096 = vpop.f32.mrf.mxu0
    %v1097 = vadd.f32 %v1077, %v1096
    %1098 = vdwg.mxu0
    %1099 = vmatpush.msra.mxu0 %v890
    %1100 = vmatpush.msra.mxu0 %v889
    %1101 = vmatpush.msra.mxu0 %v888
    %1102 = vmatpush.msra.mxu0 %v887
    %1103 = vmatpush.msra.mxu0 %v886
    %1104 = vmatpush.msra.mxu0 %v885
    %1105 = vmatpush.msra.mxu0 %v884
    %1106 = vmatpush.msra.mxu0 %v883
    %1107 = vmatpush.msra.mxu0 %v882
    %1108 = vmatpush.msra.mxu0 %v881
    %1109 = vmatpush.msra.mxu0 %v880
    %1110 = vmatpush.msra.mxu0 %v879
    %1111 = vmatpush.msra.mxu0 %v878
    %1112 = vmatpush.msra.mxu0 %v877
    %1113 = vmatpush.msra.mxu0 %v876
    %1114 = vmatpush.msra.mxu0 %v875
    %1115 = vmatmul.f32.gmra.mxu0 %v802
    %v1116 = vpop.f32.mrf.mxu0
    %v1117 = vadd.f32 %v1097, %v1116
    %1118 = vdwg.mxu0
    %1119 = vmatpush.msra.mxu0 %v906
    %1120 = vmatpush.msra.mxu0 %v905
    %1121 = vmatpush.msra.mxu0 %v904
    %1122 = vmatpush.msra.mxu0 %v903
    %1123 = vmatpush.msra.mxu0 %v902
    %1124 = vmatpush.msra.mxu0 %v901
    %1125 = vmatpush.msra.mxu0 %v900
    %1126 = vmatpush.msra.mxu0 %v899
    %1127 = vmatpush.msra.mxu0 %v898
    %1128 = vmatpush.msra.mxu0 %v897
    %1129 = vmatpush.msra.mxu0 %v896
    %1130 = vmatpush.msra.mxu0 %v895
    %1131 = vmatpush.msra.mxu0 %v894
    %1132 = vmatpush.msra.mxu0 %v893
    %1133 = vmatpush.msra.mxu0 %v892
    %1134 = vmatpush.msra.mxu0 %v891
    %1135 = vmatmul.f32.gmra.mxu0 %v803
    %v1136 = vpop.f32.mrf.mxu0
    %v1137 = vadd.f32 %v1117, %v1136
    %1138 = vdwg.mxu0
    %1139 = vmatpush.msra.mxu0 %v922
    %1140 = vmatpush.msra.mxu0 %v921
    %1141 = vmatpush.msra.mxu0 %v920
    %1142 = vmatpush.msra.mxu0 %v919
    %1143 = vmatpush.msra.mxu0 %v918
    %1144 = vmatpush.msra.mxu0 %v917
    %1145 = vmatpush.msra.mxu0 %v916
    %1146 = vmatpush.msra.mxu0 %v915
    %1147 = vmatpush.msra.mxu0 %v914
    %1148 = vmatpush.msra.mxu0 %v913
    %1149 = vmatpush.msra.mxu0 %v912
    %1150 = vmatpush.msra.mxu0 %v911
    %1151 = vmatpush.msra.mxu0 %v910
    %1152 = vmatpush.msra.mxu0 %v909
    %1153 = vmatpush.msra.mxu0 %v908
    %1154 = vmatpush.msra.mxu0 %v907
    %1155 = vmatmul.f32.gmra.mxu0 %v804
    %v1156 = vpop.f32.mrf.mxu0
    %v1157 = vadd.f32 %v1137, %v1156
    %1158 = vdwg.mxu0
    %1159 = vmatpush.msra.mxu0 %v938
    %1160 = vmatpush.msra.mxu0 %v937
    %1161 = vmatpush.msra.mxu0 %v936
    %1162 = vmatpush.msra.mxu0 %v935
    %1163 = vmatpush.msra.mxu0 %v934
    %1164 = vmatpush.msra.mxu0 %v933
    %1165 = vmatpush.msra.mxu0 %v932
    %1166 = vmatpush.msra.mxu0 %v931
    %1167 = vmatpush.msra.mxu0 %v930
    %1168 = vmatpush.msra.mxu0 %v929
    %1169 = vmatpush.msra.mxu0 %v928
    %1170 = vmatpush.msra.mxu0 %v927
    %1171 = vmatpush.msra.mxu0 %v926
    %1172 = vmatpush.msra.mxu0 %v925
    %1173 = vmatpush.msra.mxu0 %v924
    %1174 = vmatpush.msra.mxu0 %v923
    %1175 = vmatmul.f32.gmra.mxu0 %v805
    %v1176 = vpop.f32.mrf.mxu0
    %v1177 = vadd.f32 %v1157, %v1176
    %1178 = vdwg.mxu0
    %1179 = vmatpush.msra.mxu0 %v954
    %1180 = vmatpush.msra.mxu0 %v953
    %1181 = vmatpush.msra.mxu0 %v952
    %1182 = vmatpush.msra.mxu0 %v951
    %1183 = vmatpush.msra.mxu0 %v950
    %1184 = vmatpush.msra.mxu0 %v949
    %1185 = vmatpush.msra.mxu0 %v948
    %1186 = vmatpush.msra.mxu0 %v947
    %1187 = vmatpush.msra.mxu0 %v946
    %1188 = vmatpush.msra.mxu0 %v945
    %1189 = vmatpush.msra.mxu0 %v944
    %1190 = vmatpush.msra.mxu0 %v943
    %1191 = vmatpush.msra.mxu0 %v942
    %1192 = vmatpush.msra.mxu0 %v941
    %1193 = vmatpush.msra.mxu0 %v940
    %1194 = vmatpush.msra.mxu0 %v939
    %1195 = vmatmul.f32.gmra.mxu0 %v806
    %v1196 = vpop.f32.mrf.mxu0
    %v1197 = vadd.f32 %v1177, %v1196
    %1198 = vdwg.mxu0
    %1199 = vmatpush.msra.mxu0 %v970
    %1200 = vmatpush.msra.mxu0 %v969
    %1201 = vmatpush.msra.mxu0 %v968
    %1202 = vmatpush.msra.mxu0 %v967
    %1203 = vmatpush.msra.mxu0 %v966
    %1204 = vmatpush.msra.mxu0 %v965
    %1205 = vmatpush.msra.mxu0 %v964
    %1206 = vmatpush.msra.mxu0 %v963
    %1207 = vmatpush.msra.mxu0 %v962
    %1208 = vmatpush.msra.mxu0 %v961
    %1209 = vmatpush.msra.mxu0 %v960
    %1210 = vmatpush.msra.mxu0 %v959
    %1211 = vmatpush.msra.mxu0 %v958
    %1212 = vmatpush.msra.mxu0 %v957
    %1213 = vmatpush.msra.mxu0 %v956
    %1214 = vmatpush.msra.mxu0 %v955
    %1215 = vmatmul.f32.gmra.mxu0 %v807
    %v1216 = vpop.f32.mrf.mxu0
    %v1217 = vadd.f32 %v1197, %v1216
    %1218 = vdwg.mxu0
    %1219 = vmatpush.msra.mxu0 %v986
    %1220 = vmatpush.msra.mxu0 %v985
    %1221 = vmatpush.msra.mxu0 %v984
    %1222 = vmatpush.msra.mxu0 %v983
    %1223 = vmatpush.msra.mxu0 %v982
    %1224 = vmatpush.msra.mxu0 %v981
    %1225 = vmatpush.msra.mxu0 %v980
    %1226 = vmatpush.msra.mxu0 %v979
    %1227 = vmatpush.msra.mxu0 %v978
    %1228 = vmatpush.msra.mxu0 %v977
    %1229 = vmatpush.msra.mxu0 %v976
    %1230 = vmatpush.msra.mxu0 %v975
    %1231 = vmatpush.msra.mxu0 %v974
    %1232 = vmatpush.msra.mxu0 %v973
    %1233 = vmatpush.msra.mxu0 %v972
    %1234 = vmatpush.msra.mxu0 %v971
    %1235 = vmatmul.f32.gmra.mxu0 %v808
    %v1236 = vpop.f32.mrf.mxu0
    %v1237 = vadd.f32 %v1217, %v1236
    %1238 = vdwg.mxu0
    %1239 = vmatpush.msra.mxu0 %v1002
    %1240 = vmatpush.msra.mxu0 %v1001
    %1241 = vmatpush.msra.mxu0 %v1000
    %1242 = vmatpush.msra.mxu0 %v999
    %1243 = vmatpush.msra.mxu0 %v998
    %1244 = vmatpush.msra.mxu0 %v997
    %1245 = vmatpush.msra.mxu0 %v996
    %1246 = vmatpush.msra.mxu0 %v995
    %1247 = vmatpush.msra.mxu0 %v994
    %1248 = vmatpush.msra.mxu0 %v993
    %1249 = vmatpush.msra.mxu0 %v992
    %1250 = vmatpush.msra.mxu0 %v991
    %1251 = vmatpush.msra.mxu0 %v990
    %1252 = vmatpush.msra.mxu0 %v989
    %1253 = vmatpush.msra.mxu0 %v988
    %1254 = vmatpush.msra.mxu0 %v987
    %1255 = vmatmul.f32.gmra.mxu0 %v809
    %v1256 = vpop.f32.mrf.mxu0
    %v1257 = vadd.f32 %v1237, %v1256
    %1258 = vdwg.mxu0
    %1259 = vmatpush.msra.mxu0 %v1018
    %1260 = vmatpush.msra.mxu0 %v1017
    %1261 = vmatpush.msra.mxu0 %v1016
    %1262 = vmatpush.msra.mxu0 %v1015
    %1263 = vmatpush.msra.mxu0 %v1014
    %1264 = vmatpush.msra.mxu0 %v1013
    %1265 = vmatpush.msra.mxu0 %v1012
    %1266 = vmatpush.msra.mxu0 %v1011
    %1267 = vmatpush.msra.mxu0 %v1010
    %1268 = vmatpush.msra.mxu0 %v1009
    %1269 = vmatpush.msra.mxu0 %v1008
    %1270 = vmatpush.msra.mxu0 %v1007
    %1271 = vmatpush.msra.mxu0 %v1006
    %1272 = vmatpush.msra.mxu0 %v1005
    %1273 = vmatpush.msra.mxu0 %v1004
    %1274 = vmatpush.msra.mxu0 %v1003
    %1275 = vmatmul.f32.gmra.mxu0 %v810
    %v1276 = vpop.f32.mrf.mxu0
    %v1277 = vadd.f32 %v1257, %v1276
    %1278 = vdwg.mxu0
    %v1279 = vld [vmem:[#allocation12] sm:$0xff]
    %v1280 = vld [vmem:[#allocation12 + $0x8] sm:$0xff]
    %v1281 = vld [vmem:[#allocation12 + $0x10] sm:$0x1]
    %v1282 = vld [vmem:[#allocation13] sm:$0xff]
    %v1283 = vld [vmem:[#allocation13 + $0x8] sm:$0xff]
    %v1284 = vld [vmem:[#allocation13 + $0x10] sm:$0xff]
    %v1285 = vld [vmem:[#allocation13 + $0x18] sm:$0xff]
    %v1286 = vld [vmem:[#allocation13 + $0x20] sm:$0xff]
    %v1287 = vld [vmem:[#allocation13 + $0x28] sm:$0xff]
    %v1288 = vld [vmem:[#allocation13 + $0x30] sm:$0xff]
    %v1289 = vld [vmem:[#allocation13 + $0x38] sm:$0x3]
    %v1293 = vrot.slane %v1279, 1
    %v1294 = vrot.slane %v1279, 2
    %v1295 = vrot.slane %v1279, 3
    %v1296 = vrot.slane %v1279, 4
    %v1297 = vrot.slane %v1279, 5
    %v1298 = vrot.slane %v1279, 6
    %v1299 = vrot.slane %v1279, 7
    %v1300 = vrot.slane %v1280, 1
    %v1301 = vrot.slane %v1280, 2
    %v1302 = vrot.slane %v1280, 3
    %v1303 = vrot.slane %v1280, 4
    %v1304 = vrot.slane %v1280, 5
    %v1305 = vrot.slane %v1280, 6
    %v1306 = vrot.slane %v1280, 7
    %v1307 = vperm.slane %v1279, 0
    %v1308 = vperm.slane %v1293, 0
    %v1309 = vperm.slane %v1294, 0
    %v1310 = vperm.slane %v1295, 0
    %v1311 = vperm.slane %v1296, 0
    %v1312 = vperm.slane %v1297, 0
    %v1313 = vperm.slane %v1298, 0
    %v1314 = vperm.slane %v1299, 0
    %v1315 = vperm.slane %v1280, 0
    %v1316 = vperm.slane %v1300, 0
    %v1317 = vperm.slane %v1301, 0
    %v1318 = vperm.slane %v1302, 0
    %v1319 = vperm.slane %v1303, 0
    %v1320 = vperm.slane %v1304, 0
    %v1321 = vperm.slane %v1305, 0
    %v1322 = vperm.slane %v1306, 0
    %vm1339 = vcmp.ge.f32.partialorder %v1277, %v1307
    %vm1340 = vcmp.ge.f32.partialorder %v1277, %v1308
    %vm1341 = vcmp.ge.f32.partialorder %v1277, %v1309
    %vm1342 = vcmp.ge.f32.partialorder %v1277, %v1310
    %vm1343 = vcmp.ge.f32.partialorder %v1277, %v1311
    %vm1344 = vcmp.ge.f32.partialorder %v1277, %v1312
    %vm1345 = vcmp.ge.f32.partialorder %v1277, %v1313
    %vm1346 = vcmp.ge.f32.partialorder %v1277, %v1314
    %vm1347 = vcmp.ge.f32.partialorder %v1277, %v1315
    %vm1348 = vcmp.ge.f32.partialorder %v1277, %v1316
    %vm1349 = vcmp.ge.f32.partialorder %v1277, %v1317
    %vm1350 = vcmp.ge.f32.partialorder %v1277, %v1318
    %vm1351 = vcmp.ge.f32.partialorder %v1277, %v1319
    %vm1352 = vcmp.ge.f32.partialorder %v1277, %v1320
    %vm1353 = vcmp.ge.f32.partialorder %v1277, %v1321
    %vm1354 = vcmp.ge.f32.partialorder %v1277, %v1322
    %v1355 = vperm.slane %v1281, 0
    %vm1357 = vcmp.lt.f32.partialorder %v1277, %v1308
    %vm1358 = vcmp.lt.f32.partialorder %v1277, %v1309
    %vm1359 = vcmp.lt.f32.partialorder %v1277, %v1310
    %vm1360 = vcmp.lt.f32.partialorder %v1277, %v1311
    %vm1361 = vcmp.lt.f32.partialorder %v1277, %v1312
    %vm1362 = vcmp.lt.f32.partialorder %v1277, %v1313
    %vm1363 = vcmp.lt.f32.partialorder %v1277, %v1314
    %vm1364 = vcmp.lt.f32.partialorder %v1277, %v1315
    %vm1365 = vcmp.lt.f32.partialorder %v1277, %v1316
    %vm1366 = vcmp.lt.f32.partialorder %v1277, %v1317
    %vm1367 = vcmp.lt.f32.partialorder %v1277, %v1318
    %vm1368 = vcmp.lt.f32.partialorder %v1277, %v1319
    %vm1369 = vcmp.lt.f32.partialorder %v1277, %v1320
    %vm1370 = vcmp.lt.f32.partialorder %v1277, %v1321
    %vm1371 = vcmp.lt.f32.partialorder %v1277, %v1322
    %vm1372 = vcmp.lt.f32.partialorder %v1277, %v1355
    %vm1373 = vmand %vm1339, %vm1357
    %vm1374 = vmand %vm1340, %vm1358
    %vm1375 = vmand %vm1341, %vm1359
    %vm1376 = vmand %vm1342, %vm1360
    %vm1377 = vmand %vm1343, %vm1361
    %vm1378 = vmand %vm1344, %vm1362
    %vm1379 = vmand %vm1345, %vm1363
    %vm1380 = vmand %vm1346, %vm1364
    %vm1381 = vmand %vm1347, %vm1365
    %vm1382 = vmand %vm1348, %vm1366
    %vm1383 = vmand %vm1349, %vm1367
    %vm1384 = vmand %vm1350, %vm1368
    %vm1385 = vmand %vm1351, %vm1369
    %vm1386 = vmand %vm1352, %vm1370
    %vm1387 = vmand %vm1353, %vm1371
    %vm1388 = vmand %vm1354, %vm1372
    %v1389 = vsel %vm1373, 1, 0
    %v1390 = vsel %vm1374, 1, 0
    %v1391 = vsel %vm1375, 1, 0
    %v1392 = vsel %vm1376, 1, 0
    %v1393 = vsel %vm1377, 1, 0
    %v1394 = vsel %vm1378, 1, 0
    %v1395 = vsel %vm1379, 1, 0
    %v1396 = vsel %vm1380, 1, 0
    %v1397 = vsel %vm1381, 1, 0
    %v1398 = vsel %vm1382, 1, 0
    %v1399 = vsel %vm1383, 1, 0
    %v1400 = vsel %vm1384, 1, 0
    %v1401 = vsel %vm1385, 1, 0
    %v1402 = vsel %vm1386, 1, 0
    %v1403 = vsel %vm1387, 1, 0
    %v1404 = vsel %vm1388, 1, 0
    %v1405 = vcvt.s32.f32 %v1389
    %v1406 = vcvt.s32.f32 %v1390
    %v1407 = vcvt.s32.f32 %v1391
    %v1408 = vcvt.s32.f32 %v1392
    %v1409 = vcvt.s32.f32 %v1393
    %v1410 = vcvt.s32.f32 %v1394
    %v1411 = vcvt.s32.f32 %v1395
    %v1412 = vcvt.s32.f32 %v1396
    %v1413 = vcvt.s32.f32 %v1397
    %v1414 = vcvt.s32.f32 %v1398
    %v1415 = vcvt.s32.f32 %v1399
    %v1416 = vcvt.s32.f32 %v1400
    %v1417 = vcvt.s32.f32 %v1401
    %v1418 = vcvt.s32.f32 %v1402
    %v1419 = vcvt.s32.f32 %v1403
    %v1420 = vcvt.s32.f32 %v1404
    %v1423 = vrot.slane %v1282, 1
    %v1424 = vrot.slane %v1282, 2
    %v1425 = vrot.slane %v1282, 3
    %v1426 = vrot.slane %v1282, 4
    %v1427 = vrot.slane %v1282, 5
    %v1428 = vrot.slane %v1282, 6
    %v1429 = vrot.slane %v1282, 7
    %v1430 = vrot.slane %v1283, 1
    %v1431 = vrot.slane %v1283, 2
    %v1432 = vrot.slane %v1283, 3
    %v1433 = vrot.slane %v1283, 4
    %v1434 = vrot.slane %v1283, 5
    %v1435 = vrot.slane %v1283, 6
    %v1436 = vrot.slane %v1283, 7
    %v1437 = vsub.f32 %v1277, %v1307
    %v1438 = vsub.f32 %v1277, %v1308
    %v1439 = vsub.f32 %v1277, %v1309
    %v1440 = vsub.f32 %v1277, %v1310
    %v1441 = vsub.f32 %v1277, %v1311
    %v1442 = vsub.f32 %v1277, %v1312
    %v1443 = vsub.f32 %v1277, %v1313
    %v1444 = vsub.f32 %v1277, %v1314
    %v1445 = vsub.f32 %v1277, %v1315
    %v1446 = vsub.f32 %v1277, %v1316
    %v1447 = vsub.f32 %v1277, %v1317
    %v1448 = vsub.f32 %v1277, %v1318
    %v1449 = vsub.f32 %v1277, %v1319
    %v1450 = vsub.f32 %v1277, %v1320
    %v1451 = vsub.f32 %v1277, %v1321
    %v1452 = vsub.f32 %v1277, %v1322
    %v1453 = vperm.slane %v1282, 0
    %v1454 = vperm.slane %v1423, 0
    %v1455 = vperm.slane %v1424, 0
    %v1456 = vperm.slane %v1425, 0
    %v1457 = vperm.slane %v1426, 0
    %v1458 = vperm.slane %v1427, 0
    %v1459 = vperm.slane %v1428, 0
    %v1460 = vperm.slane %v1429, 0
    %v1461 = vperm.slane %v1283, 0
    %v1462 = vperm.slane %v1430, 0
    %v1463 = vperm.slane %v1431, 0
    %v1464 = vperm.slane %v1432, 0
    %v1465 = vperm.slane %v1433, 0
    %v1466 = vperm.slane %v1434, 0
    %v1467 = vperm.slane %v1435, 0
    %v1468 = vperm.slane %v1436, 0
    %v1485 = vmul.f32 %v1437, %v1453
    %v1486 = vmul.f32 %v1438, %v1454
    %v1487 = vmul.f32 %v1439, %v1455
    %v1488 = vmul.f32 %v1440, %v1456
    %v1489 = vmul.f32 %v1441, %v1457
    %v1490 = vmul.f32 %v1442, %v1458
    %v1491 = vmul.f32 %v1443, %v1459
    %v1492 = vmul.f32 %v1444, %v1460
    %v1493 = vmul.f32 %v1445, %v1461
    %v1494 = vmul.f32 %v1446, %v1462
    %v1495 = vmul.f32 %v1447, %v1463
    %v1496 = vmul.f32 %v1448, %v1464
    %v1497 = vmul.f32 %v1449, %v1465
    %v1498 = vmul.f32 %v1450, %v1466
    %v1499 = vmul.f32 %v1451, %v1467
    %v1500 = vmul.f32 %v1452, %v1468
    %v1501 = vmul.f32 %v1485, %v1405
    %v1502 = vmul.f32 %v1486, %v1406
    %v1503 = vmul.f32 %v1487, %v1407
    %v1504 = vmul.f32 %v1488, %v1408
    %v1505 = vmul.f32 %v1489, %v1409
    %v1506 = vmul.f32 %v1490, %v1410
    %v1507 = vmul.f32 %v1491, %v1411
    %v1508 = vmul.f32 %v1492, %v1412
    %v1509 = vmul.f32 %v1493, %v1413
    %v1510 = vmul.f32 %v1494, %v1414
    %v1511 = vmul.f32 %v1495, %v1415
    %v1512 = vmul.f32 %v1496, %v1416
    %v1513 = vmul.f32 %v1497, %v1417
    %v1514 = vmul.f32 %v1498, %v1418
    %v1515 = vmul.f32 %v1499, %v1419
    %v1516 = vsub.f32 1.0, %v1486
    %v1517 = vsub.f32 1.0, %v1487
    %v1518 = vsub.f32 1.0, %v1488
    %v1519 = vsub.f32 1.0, %v1489
    %v1520 = vsub.f32 1.0, %v1490
    %v1521 = vsub.f32 1.0, %v1491
    %v1522 = vsub.f32 1.0, %v1492
    %v1523 = vsub.f32 1.0, %v1493
    %v1524 = vsub.f32 1.0, %v1494
    %v1525 = vsub.f32 1.0, %v1495
    %v1526 = vsub.f32 1.0, %v1496
    %v1527 = vsub.f32 1.0, %v1497
    %v1528 = vsub.f32 1.0, %v1498
    %v1529 = vsub.f32 1.0, %v1499
    %v1530 = vsub.f32 1.0, %v1500
    %v1531 = vmul.f32 %v1516, %v1406
    %v1532 = vmul.f32 %v1517, %v1407
    %v1533 = vmul.f32 %v1518, %v1408
    %v1534 = vmul.f32 %v1519, %v1409
    %v1535 = vmul.f32 %v1520, %v1410
    %v1536 = vmul.f32 %v1521, %v1411
    %v1537 = vmul.f32 %v1522, %v1412
    %v1538 = vmul.f32 %v1523, %v1413
    %v1539 = vmul.f32 %v1524, %v1414
    %v1540 = vmul.f32 %v1525, %v1415
    %v1541 = vmul.f32 %v1526, %v1416
    %v1542 = vmul.f32 %v1527, %v1417
    %v1543 = vmul.f32 %v1528, %v1418
    %v1544 = vmul.f32 %v1529, %v1419
    %v1545 = vmul.f32 %v1530, %v1420
    %v1546 = vadd.f32 %v1501, %v1531
    %v1547 = vadd.f32 %v1502, %v1532
    %v1548 = vadd.f32 %v1503, %v1533
    %v1549 = vadd.f32 %v1504, %v1534
    %v1550 = vadd.f32 %v1505, %v1535
    %v1551 = vadd.f32 %v1506, %v1536
    %v1552 = vadd.f32 %v1507, %v1537
    %v1553 = vadd.f32 %v1508, %v1538
    %v1554 = vadd.f32 %v1509, %v1539
    %v1555 = vadd.f32 %v1510, %v1540
    %v1556 = vadd.f32 %v1511, %v1541
    %v1557 = vadd.f32 %v1512, %v1542
    %v1558 = vadd.f32 %v1513, %v1543
    %v1559 = vadd.f32 %v1514, %v1544
    %v1560 = vadd.f32 %v1515, %v1545
    %v1563 = vrot.slane %v1284, 1
    %v1564 = vrot.slane %v1284, 2
    %v1565 = vrot.slane %v1284, 3
    %v1566 = vrot.slane %v1284, 4
    %v1567 = vrot.slane %v1284, 5
    %v1568 = vrot.slane %v1284, 6
    %v1569 = vrot.slane %v1284, 7
    %v1570 = vrot.slane %v1285, 1
    %v1571 = vrot.slane %v1285, 2
    %v1572 = vrot.slane %v1285, 3
    %v1573 = vrot.slane %v1285, 4
    %v1574 = vrot.slane %v1285, 5
    %v1575 = vrot.slane %v1285, 6
    %v1576 = vperm.slane %v1284, 0
    %v1577 = vperm.slane %v1563, 0
    %v1578 = vperm.slane %v1564, 0
    %v1579 = vperm.slane %v1565, 0
    %v1580 = vperm.slane %v1566, 0
    %v1581 = vperm.slane %v1567, 0
    %v1582 = vperm.slane %v1568, 0
    %v1583 = vperm.slane %v1569, 0
    %v1584 = vperm.slane %v1285, 0
    %v1585 = vperm.slane %v1570, 0
    %v1586 = vperm.slane %v1571, 0
    %v1587 = vperm.slane %v1572, 0
    %v1588 = vperm.slane %v1573, 0
    %v1589 = vperm.slane %v1574, 0
    %v1590 = vperm.slane %v1575, 0
    %v1606 = vmul.f32 %v1437, %v1576
    %v1607 = vmul.f32 %v1438, %v1577
    %v1608 = vmul.f32 %v1439, %v1578
    %v1609 = vmul.f32 %v1440, %v1579
    %v1610 = vmul.f32 %v1441, %v1580
    %v1611 = vmul.f32 %v1442, %v1581
    %v1612 = vmul.f32 %v1443, %v1582
    %v1613 = vmul.f32 %v1444, %v1583
    %v1614 = vmul.f32 %v1445, %v1584
    %v1615 = vmul.f32 %v1446, %v1585
    %v1616 = vmul.f32 %v1447, %v1586
    %v1617 = vmul.f32 %v1448, %v1587
    %v1618 = vmul.f32 %v1449, %v1588
    %v1619 = vmul.f32 %v1450, %v1589
    %v1620 = vmul.f32 %v1451, %v1590
    %v1621 = vmul.f32 %v1606, %v1546
    %v1622 = vmul.f32 %v1607, %v1547
    %v1623 = vmul.f32 %v1608, %v1548
    %v1624 = vmul.f32 %v1609, %v1549
    %v1625 = vmul.f32 %v1610, %v1550
    %v1626 = vmul.f32 %v1611, %v1551
    %v1627 = vmul.f32 %v1612, %v1552
    %v1628 = vmul.f32 %v1613, %v1553
    %v1629 = vmul.f32 %v1614, %v1554
    %v1630 = vmul.f32 %v1615, %v1555
    %v1631 = vmul.f32 %v1616, %v1556
    %v1632 = vmul.f32 %v1617, %v1557
    %v1633 = vmul.f32 %v1618, %v1558
    %v1634 = vmul.f32 %v1619, %v1559
    %v1635 = vsub.f32 1.0, %v1607
    %v1636 = vsub.f32 1.0, %v1608
    %v1637 = vsub.f32 1.0, %v1609
    %v1638 = vsub.f32 1.0, %v1610
    %v1639 = vsub.f32 1.0, %v1611
    %v1640 = vsub.f32 1.0, %v1612
    %v1641 = vsub.f32 1.0, %v1613
    %v1642 = vsub.f32 1.0, %v1614
    %v1643 = vsub.f32 1.0, %v1615
    %v1644 = vsub.f32 1.0, %v1616
    %v1645 = vsub.f32 1.0, %v1617
    %v1646 = vsub.f32 1.0, %v1618
    %v1647 = vsub.f32 1.0, %v1619
    %v1648 = vsub.f32 1.0, %v1620
    %v1649 = vmul.f32 %v1635, %v1547
    %v1650 = vmul.f32 %v1636, %v1548
    %v1651 = vmul.f32 %v1637, %v1549
    %v1652 = vmul.f32 %v1638, %v1550
    %v1653 = vmul.f32 %v1639, %v1551
    %v1654 = vmul.f32 %v1640, %v1552
    %v1655 = vmul.f32 %v1641, %v1553
    %v1656 = vmul.f32 %v1642, %v1554
    %v1657 = vmul.f32 %v1643, %v1555
    %v1658 = vmul.f32 %v1644, %v1556
    %v1659 = vmul.f32 %v1645, %v1557
    %v1660 = vmul.f32 %v1646, %v1558
    %v1661 = vmul.f32 %v1647, %v1559
    %v1662 = vmul.f32 %v1648, %v1560
    %v1663 = vadd.f32 %v1621, %v1649
    %v1664 = vadd.f32 %v1622, %v1650
    %v1665 = vadd.f32 %v1623, %v1651
    %v1666 = vadd.f32 %v1624, %v1652
    %v1667 = vadd.f32 %v1625, %v1653
    %v1668 = vadd.f32 %v1626, %v1654
    %v1669 = vadd.f32 %v1627, %v1655
    %v1670 = vadd.f32 %v1628, %v1656
    %v1671 = vadd.f32 %v1629, %v1657
    %v1672 = vadd.f32 %v1630, %v1658
    %v1673 = vadd.f32 %v1631, %v1659
    %v1674 = vadd.f32 %v1632, %v1660
    %v1675 = vadd.f32 %v1633, %v1661
    %v1676 = vadd.f32 %v1634, %v1662
    %1679 = vst [vmem:[#allocation1] sm:$0xff] %v1285
    %s1680 = scalar_lea.vmem [#allocation1], 7
    %v1681 = vld [vmem:[%s1680] ss:$9 sm:$0xff]
    %1682 = vst [vmem:[#allocation1] sm:$0xff] %v1286
    %v1683 = vld [vmem:[#allocation1] ss:$9 sm:$0xff]
    %s1684 = scalar_lea.vmem [#allocation1], 1
    %v1685 = vld [vmem:[%s1684] ss:$9 sm:$0xff]
    %s1686 = scalar_lea.vmem [#allocation1], 2
    %v1687 = vld [vmem:[%s1686] ss:$9 sm:$0xff]
    %s1688 = scalar_lea.vmem [#allocation1], 3
    %v1689 = vld [vmem:[%s1688] ss:$9 sm:$0xff]
    %s1690 = scalar_lea.vmem [#allocation1], 4
    %v1691 = vld [vmem:[%s1690] ss:$9 sm:$0xff]
    %s1692 = scalar_lea.vmem [#allocation1], 5
    %v1693 = vld [vmem:[%s1692] ss:$9 sm:$0xff]
    %s1694 = scalar_lea.vmem [#allocation1], 6
    %v1695 = vld [vmem:[%s1694] ss:$9 sm:$0xff]
    %v1696 = vld [vmem:[%s1680] ss:$9 sm:$0xff]
    %1697 = vst [vmem:[#allocation1] sm:$0xff] %v1287
    %v1698 = vld [vmem:[#allocation1] ss:$9 sm:$0xff]
    %v1699 = vld [vmem:[%s1684] ss:$9 sm:$0xff]
    %v1700 = vld [vmem:[%s1686] ss:$9 sm:$0xff]
    %v1701 = vld [vmem:[%s1688] ss:$9 sm:$0xff]
    %v1702 = vld [vmem:[%s1690] ss:$9 sm:$0xff]
    %v1703 = vperm.slane %v1681, 0
    %v1704 = vperm.slane %v1683, 0
    %v1705 = vperm.slane %v1685, 0
    %v1706 = vperm.slane %v1687, 0
    %v1707 = vperm.slane %v1689, 0
    %v1708 = vperm.slane %v1691, 0
    %v1709 = vperm.slane %v1693, 0
    %v1710 = vperm.slane %v1695, 0
    %v1711 = vperm.slane %v1696, 0
    %v1712 = vperm.slane %v1698, 0
    %v1713 = vperm.slane %v1699, 0
    %v1714 = vperm.slane %v1700, 0
    %v1715 = vperm.slane %v1701, 0
    %v1716 = vperm.slane %v1702, 0
    %v1731 = vmul.f32 %v1437, %v1703
    %v1732 = vmul.f32 %v1438, %v1704
    %v1733 = vmul.f32 %v1439, %v1705
    %v1734 = vmul.f32 %v1440, %v1706
    %v1735 = vmul.f32 %v1441, %v1707
    %v1736 = vmul.f32 %v1442, %v1708
    %v1737 = vmul.f32 %v1443, %v1709
    %v1738 = vmul.f32 %v1444, %v1710
    %v1739 = vmul.f32 %v1445, %v1711
    %v1740 = vmul.f32 %v1446, %v1712
    %v1741 = vmul.f32 %v1447, %v1713
    %v1742 = vmul.f32 %v1448, %v1714
    %v1743 = vmul.f32 %v1449, %v1715
    %v1744 = vmul.f32 %v1450, %v1716
    %v1745 = vmul.f32 %v1731, %v1663
    %v1746 = vmul.f32 %v1732, %v1664
    %v1747 = vmul.f32 %v1733, %v1665
    %v1748 = vmul.f32 %v1734, %v1666
    %v1749 = vmul.f32 %v1735, %v1667
    %v1750 = vmul.f32 %v1736, %v1668
    %v1751 = vmul.f32 %v1737, %v1669
    %v1752 = vmul.f32 %v1738, %v1670
    %v1753 = vmul.f32 %v1739, %v1671
    %v1754 = vmul.f32 %v1740, %v1672
    %v1755 = vmul.f32 %v1741, %v1673
    %v1756 = vmul.f32 %v1742, %v1674
    %v1757 = vmul.f32 %v1743, %v1675
    %v1758 = vsub.f32 1.0, %v1732
    %v1759 = vsub.f32 1.0, %v1733
    %v1760 = vsub.f32 1.0, %v1734
    %v1761 = vsub.f32 1.0, %v1735
    %v1762 = vsub.f32 1.0, %v1736
    %v1763 = vsub.f32 1.0, %v1737
    %v1764 = vsub.f32 1.0, %v1738
    %v1765 = vsub.f32 1.0, %v1739
    %v1766 = vsub.f32 1.0, %v1740
    %v1767 = vsub.f32 1.0, %v1741
    %v1768 = vsub.f32 1.0, %v1742
    %v1769 = vsub.f32 1.0, %v1743
    %v1770 = vsub.f32 1.0, %v1744
    %v1771 = vmul.f32 %v1758, %v1664
    %v1772 = vmul.f32 %v1759, %v1665
    %v1773 = vmul.f32 %v1760, %v1666
    %v1774 = vmul.f32 %v1761, %v1667
    %v1775 = vmul.f32 %v1762, %v1668
    %v1776 = vmul.f32 %v1763, %v1669
    %v1777 = vmul.f32 %v1764, %v1670
    %v1778 = vmul.f32 %v1765, %v1671
    %v1779 = vmul.f32 %v1766, %v1672
    %v1780 = vmul.f32 %v1767, %v1673
    %v1781 = vmul.f32 %v1768, %v1674
    %v1782 = vmul.f32 %v1769, %v1675
    %v1783 = vmul.f32 %v1770, %v1676
    %v1784 = vadd.f32 %v1745, %v1771
    %v1785 = vadd.f32 %v1746, %v1772
    %v1786 = vadd.f32 %v1747, %v1773
    %v1787 = vadd.f32 %v1748, %v1774
    %v1788 = vadd.f32 %v1749, %v1775
    %v1789 = vadd.f32 %v1750, %v1776
    %v1790 = vadd.f32 %v1751, %v1777
    %v1791 = vadd.f32 %v1752, %v1778
    %v1792 = vadd.f32 %v1753, %v1779
    %v1793 = vadd.f32 %v1754, %v1780
    %v1794 = vadd.f32 %v1755, %v1781
    %v1795 = vadd.f32 %v1756, %v1782
    %v1796 = vadd.f32 %v1757, %v1783
    %1799 = vst [vmem:[#allocation1] sm:$0xff] %v1287
    %s1800 = scalar_lea.vmem [#allocation1], 5
    %v1801 = vld [vmem:[%s1800] ss:$9 sm:$0xff]
    %s1802 = scalar_lea.vmem [#allocation1], 6
    %v1803 = vld [vmem:[%s1802] ss:$9 sm:$0xff]
    %s1804 = scalar_lea.vmem [#allocation1], 7
    %v1805 = vld [vmem:[%s1804] ss:$9 sm:$0xff]
    %1806 = vst [vmem:[#allocation1] sm:$0xff] %v1288
    %v1807 = vld [vmem:[#allocation1] ss:$9 sm:$0xff]
    %s1808 = scalar_lea.vmem [#allocation1], 1
    %v1809 = vld [vmem:[%s1808] ss:$9 sm:$0xff]
    %s1810 = scalar_lea.vmem [#allocation1], 2
    %v1811 = vld [vmem:[%s1810] ss:$9 sm:$0xff]
    %s1812 = scalar_lea.vmem [#allocation1], 3
    %v1813 = vld [vmem:[%s1812] ss:$9 sm:$0xff]
    %s1814 = scalar_lea.vmem [#allocation1], 4
    %v1815 = vld [vmem:[%s1814] ss:$9 sm:$0xff]
    %v1816 = vld [vmem:[%s1800] ss:$9 sm:$0xff]
    %v1817 = vld [vmem:[%s1802] ss:$9 sm:$0xff]
    %v1818 = vld [vmem:[%s1804] ss:$9 sm:$0xff]
    %1819 = vst [vmem:[#allocation1] sm:$0xff] %v1289
    %v1820 = vld [vmem:[#allocation1] ss:$9 sm:$0xff]
    %v1821 = vld [vmem:[%s1808] ss:$9 sm:$0xff]
    %v1822 = vperm.slane %v1801, 0
    %v1823 = vperm.slane %v1803, 0
    %v1824 = vperm.slane %v1805, 0
    %v1825 = vperm.slane %v1807, 0
    %v1826 = vperm.slane %v1809, 0
    %v1827 = vperm.slane %v1811, 0
    %v1828 = vperm.slane %v1813, 0
    %v1829 = vperm.slane %v1815, 0
    %v1830 = vperm.slane %v1816, 0
    %v1831 = vperm.slane %v1817, 0
    %v1832 = vperm.slane %v1818, 0
    %v1833 = vperm.slane %v1820, 0
    %v1834 = vperm.slane %v1821, 0
    %v1848 = vmul.f32 %v1437, %v1822
    %v1849 = vmul.f32 %v1438, %v1823
    %v1850 = vmul.f32 %v1439, %v1824
    %v1851 = vmul.f32 %v1440, %v1825
    %v1852 = vmul.f32 %v1441, %v1826
    %v1853 = vmul.f32 %v1442, %v1827
    %v1854 = vmul.f32 %v1443, %v1828
    %v1855 = vmul.f32 %v1444, %v1829
    %v1856 = vmul.f32 %v1445, %v1830
    %v1857 = vmul.f32 %v1446, %v1831
    %v1858 = vmul.f32 %v1447, %v1832
    %v1859 = vmul.f32 %v1448, %v1833
    %v1860 = vmul.f32 %v1449, %v1834
    %v1861 = vmul.f32 %v1848, %v1784
    %v1862 = vmul.f32 %v1849, %v1785
    %v1863 = vmul.f32 %v1850, %v1786
    %v1864 = vmul.f32 %v1851, %v1787
    %v1865 = vmul.f32 %v1852, %v1788
    %v1866 = vmul.f32 %v1853, %v1789
    %v1867 = vmul.f32 %v1854, %v1790
    %v1868 = vmul.f32 %v1855, %v1791
    %v1869 = vmul.f32 %v1856, %v1792
    %v1870 = vmul.f32 %v1857, %v1793
    %v1871 = vmul.f32 %v1858, %v1794
    %v1872 = vmul.f32 %v1859, %v1795
    %v1873 = vsub.f32 1.0, %v1849
    %v1874 = vsub.f32 1.0, %v1850
    %v1875 = vsub.f32 1.0, %v1851
    %v1876 = vsub.f32 1.0, %v1852
    %v1877 = vsub.f32 1.0, %v1853
    %v1878 = vsub.f32 1.0, %v1854
    %v1879 = vsub.f32 1.0, %v1855
    %v1880 = vsub.f32 1.0, %v1856
    %v1881 = vsub.f32 1.0, %v1857
    %v1882 = vsub.f32 1.0, %v1858
    %v1883 = vsub.f32 1.0, %v1859
    %v1884 = vsub.f32 1.0, %v1860
    %v1885 = vmul.f32 %v1873, %v1785
    %v1886 = vmul.f32 %v1874, %v1786
    %v1887 = vmul.f32 %v1875, %v1787
    %v1888 = vmul.f32 %v1876, %v1788
    %v1889 = vmul.f32 %v1877, %v1789
    %v1890 = vmul.f32 %v1878, %v1790
    %v1891 = vmul.f32 %v1879, %v1791
    %v1892 = vmul.f32 %v1880, %v1792
    %v1893 = vmul.f32 %v1881, %v1793
    %v1894 = vmul.f32 %v1882, %v1794
    %v1895 = vmul.f32 %v1883, %v1795
    %v1896 = vmul.f32 %v1884, %v1796
    %v1897 = vadd.f32 %v1861, %v1885
    %v1898 = vadd.f32 %v1862, %v1886
    %v1899 = vadd.f32 %v1863, %v1887
    %v1900 = vadd.f32 %v1864, %v1888
    %v1901 = vadd.f32 %v1865, %v1889
    %v1902 = vadd.f32 %v1866, %v1890
    %v1903 = vadd.f32 %v1867, %v1891
    %v1904 = vadd.f32 %v1868, %v1892
    %v1905 = vadd.f32 %v1869, %v1893
    %v1906 = vadd.f32 %v1870, %v1894
    %v1907 = vadd.f32 %v1871, %v1895
    %v1908 = vadd.f32 %v1872, %v1896
    %v1909 = vxor.u32 %v1277, 2147483648
    %v1910 = vmul.f32 %v1909, 1.442695
    %v1911 = vpow.pop %v1910
    %v1912 = vadd.f32 %v1911, 1.0
    %v1913 = vrcp.pop %v1912
    %v1914 = vmul.f32 %v1912, %v1913
    %v1915 = vsub.f32 1.0, %v1914
    %v1916 = vmul.f32 %v1913, %v1915
    %v1917 = vadd.f32 %v1913, %v1916
    %vm1918 = vweird.f32 %v1912
    %vm1919 = vweird.f32 %v1913
    %vm1920 = vmor %vm1918, %vm1919
    %v1921 = vsel %vm1920, %v1913, %v1917
    %v1922 = vand.u32 2147483647, %v1912
    %vm1923 = vcmp.eq.f32.partialorder %v1922, 8.507059e+37
    %v1924 = vand.u32 %v1912, 2147483648
    %v1925 = vor.u32 1.1754944e-38, %v1924
    %v1926 = vsel %vm1923, %v1925, %v1921
    %v1927 = vmul.f32 1.0, %v1926
    %v1928 = vmul.f32 %v1277, %v1927
    %1929 = vst [vmem:[#allocation3] sm:$0xff] %v1928
    %1930 = vst [vmem:[#allocation3 + $0x8] sm:$0xff] %v1897
    %1931 = vst [vmem:[#allocation3 + $0x10] sm:$0xff] %v1898
    %1932 = vst [vmem:[#allocation3 + $0x18] sm:$0xff] %v1899
    %1933 = vst [vmem:[#allocation3 + $0x20] sm:$0xff] %v1900
    %1934 = vst [vmem:[#allocation3 + $0x28] sm:$0xff] %v1901
    %1935 = vst [vmem:[#allocation3 + $0x30] sm:$0xff] %v1902
    %1936 = vst [vmem:[#allocation3 + $0x38] sm:$0xff] %v1903
    %1937 = vst [vmem:[#allocation3 + $0x40] sm:$0xff] %v1904
    %1938 = vst [vmem:[#allocation3 + $0x48] sm:$0xff] %v1905
    %1939 = vst [vmem:[#allocation3 + $0x50] sm:$0xff] %v1906
    %1940 = vst [vmem:[#allocation3 + $0x58] sm:$0xff] %v1907
    %1941 = vst [vmem:[#allocation3 + $0x60] sm:$0xff] %v1908
    %v1942 = vld [vmem:[#allocation3] sm:$0xff]
    %v1943 = vld [vmem:[#allocation3 + $0x8] sm:$0xff]
    %v1944 = vld [vmem:[#allocation3 + $0x10] sm:$0xff]
    %v1945 = vld [vmem:[#allocation3 + $0x18] sm:$0xff]
    %v1946 = vld [vmem:[#allocation3 + $0x20] sm:$0xff]
    %v1947 = vld [vmem:[#allocation3 + $0x28] sm:$0xff]
    %v1948 = vld [vmem:[#allocation3 + $0x30] sm:$0xff]
    %v1949 = vld [vmem:[#allocation3 + $0x38] sm:$0xff]
    %v1950 = vld [vmem:[#allocation3 + $0x40] sm:$0xff]
    %v1951 = vld [vmem:[#allocation3 + $0x48] sm:$0xff]
    %v1952 = vld [vmem:[#allocation3 + $0x50] sm:$0xff]
    %v1953 = vld [vmem:[#allocation3 + $0x58] sm:$0xff]
    %v1954 = vld [vmem:[#allocation3 + $0x60] sm:$0xff]
    %v1955 = vld [vmem:[#allocation15] sm:$0xff]
    %v1956 = vld [vmem:[#allocation15 + $0x8] sm:$0xff]
    %v1957 = vld [vmem:[#allocation15 + $0x10] sm:$0xff]
    %v1958 = vld [vmem:[#allocation15 + $0x18] sm:$0xff]
    %v1959 = vld [vmem:[#allocation15 + $0x20] sm:$0xff]
    %v1960 = vld [vmem:[#allocation15 + $0x28] sm:$0xff]
    %v1961 = vld [vmem:[#allocation15 + $0x30] sm:$0xff]
    %v1962 = vld [vmem:[#allocation15 + $0x38] sm:$0xff]
    %v1963 = vld [vmem:[#allocation15 + $0x40] sm:$0xff]
    %v1964 = vld [vmem:[#allocation15 + $0x48] sm:$0xff]
    %v1965 = vld [vmem:[#allocation15 + $0x50] sm:$0xff]
    %v1966 = vld [vmem:[#allocation15 + $0x58] sm:$0xff]
    %v1967 = vld [vmem:[#allocation15 + $0x60] sm:$0xff]
    %v1968 = vld [vmem:[#allocation15 + $0x68] sm:$0xff]
    %v1969 = vld [vmem:[#allocation15 + $0x70] sm:$0xff]
    %v1970 = vld [vmem:[#allocation15 + $0x78] sm:$0xff]
    %v1971 = vld [vmem:[#allocation15 + $0x80] sm:$0xff]
    %v1972 = vld [vmem:[#allocation15 + $0x88] sm:$0xff]
    %v1973 = vld [vmem:[#allocation15 + $0x90] sm:$0xff]
    %v1974 = vld [vmem:[#allocation15 + $0x98] sm:$0xff]
    %v1975 = vld [vmem:[#allocation15 + $0xa0] sm:$0xff]
    %v1976 = vld [vmem:[#allocation15 + $0xa8] sm:$0xff]
    %v1977 = vld [vmem:[#allocation15 + $0xb0] sm:$0xff]
    %v1978 = vld [vmem:[#allocation15 + $0xb8] sm:$0xff]
    %v1979 = vld [vmem:[#allocation15 + $0xc0] sm:$0xff]
    %v1980 = vld [vmem:[#allocation15 + $0xc8] sm:$0xff]
    %v1981 = vld [vmem:[#allocation15 + $0xd0] sm:$0xff]
    %v1982 = vld [vmem:[#allocation15 + $0xd8] sm:$0xff]
    %v1983 = vld [vmem:[#allocation15 + $0xe0] sm:$0xff]
    %v1984 = vld [vmem:[#allocation15 + $0xe8] sm:$0xff]
    %v1985 = vld [vmem:[#allocation15 + $0xf0] sm:$0xff]
    %v1986 = vld [vmem:[#allocation15 + $0xf8] sm:$0xff]
    %v1987 = vld [vmem:[#allocation15 + $0x100] sm:$0xff]
    %v1988 = vld [vmem:[#allocation15 + $0x108] sm:$0xff]
    %v1989 = vld [vmem:[#allocation15 + $0x110] sm:$0xff]
    %v1990 = vld [vmem:[#allocation15 + $0x118] sm:$0xff]
    %v1991 = vld [vmem:[#allocation15 + $0x120] sm:$0xff]
    %v1992 = vld [vmem:[#allocation15 + $0x128] sm:$0xff]
    %v1993 = vld [vmem:[#allocation15 + $0x130] sm:$0xff]
    %v1994 = vld [vmem:[#allocation15 + $0x138] sm:$0xff]
    %v1995 = vld [vmem:[#allocation15 + $0x140] sm:$0xff]
    %v1996 = vld [vmem:[#allocation15 + $0x148] sm:$0xff]
    %v1997 = vld [vmem:[#allocation15 + $0x150] sm:$0xff]
    %v1998 = vld [vmem:[#allocation15 + $0x158] sm:$0xff]
    %v1999 = vld [vmem:[#allocation15 + $0x160] sm:$0xff]
    %v2000 = vld [vmem:[#allocation15 + $0x168] sm:$0xff]
    %v2001 = vld [vmem:[#allocation15 + $0x170] sm:$0xff]
    %v2002 = vld [vmem:[#allocation15 + $0x178] sm:$0xff]
    %v2003 = vld [vmem:[#allocation15 + $0x180] sm:$0xff]
    %v2004 = vld [vmem:[#allocation15 + $0x188] sm:$0xff]
    %v2005 = vld [vmem:[#allocation15 + $0x190] sm:$0xff]
    %v2006 = vld [vmem:[#allocation15 + $0x198] sm:$0xff]
    %v2007 = vld [vmem:[#allocation15 + $0x1a0] sm:$0xff]
    %v2008 = vld [vmem:[#allocation15 + $0x1a8] sm:$0xff]
    %v2009 = vld [vmem:[#allocation15 + $0x1b0] sm:$0xff]
    %v2010 = vld [vmem:[#allocation15 + $0x1b8] sm:$0xff]
    %v2011 = vld [vmem:[#allocation15 + $0x1c0] sm:$0xff]
    %v2012 = vld [vmem:[#allocation15 + $0x1c8] sm:$0xff]
    %v2013 = vld [vmem:[#allocation15 + $0x1d0] sm:$0xff]
    %v2014 = vld [vmem:[#allocation15 + $0x1d8] sm:$0xff]
    %v2015 = vld [vmem:[#allocation15 + $0x1e0] sm:$0xff]
    %v2016 = vld [vmem:[#allocation15 + $0x1e8] sm:$0xff]
    %v2017 = vld [vmem:[#allocation15 + $0x1f0] sm:$0xff]
    %v2018 = vld [vmem:[#allocation15 + $0x1f8] sm:$0xff]
    %v2019 = vld [vmem:[#allocation15 + $0x200] sm:$0xff]
    %v2020 = vld [vmem:[#allocation15 + $0x208] sm:$0xff]
    %v2021 = vld [vmem:[#allocation15 + $0x210] sm:$0xff]
    %v2022 = vld [vmem:[#allocation15 + $0x218] sm:$0xff]
    %v2023 = vld [vmem:[#allocation15 + $0x220] sm:$0xff]
    %v2024 = vld [vmem:[#allocation15 + $0x228] sm:$0xff]
    %v2025 = vld [vmem:[#allocation15 + $0x230] sm:$0xff]
    %v2026 = vld [vmem:[#allocation15 + $0x238] sm:$0xff]
    %v2027 = vld [vmem:[#allocation15 + $0x240] sm:$0xff]
    %v2028 = vld [vmem:[#allocation15 + $0x248] sm:$0xff]
    %v2029 = vld [vmem:[#allocation15 + $0x250] sm:$0xff]
    %v2030 = vld [vmem:[#allocation15 + $0x258] sm:$0xff]
    %v2031 = vld [vmem:[#allocation15 + $0x260] sm:$0xff]
    %v2032 = vld [vmem:[#allocation15 + $0x268] sm:$0xff]
    %v2033 = vld [vmem:[#allocation15 + $0x270] sm:$0xff]
    %v2034 = vld [vmem:[#allocation15 + $0x278] sm:$0xff]
    %v2035 = vld [vmem:[#allocation15 + $0x280] sm:$0xff]
    %v2036 = vld [vmem:[#allocation15 + $0x288] sm:$0xff]
    %v2037 = vld [vmem:[#allocation15 + $0x290] sm:$0xff]
    %v2038 = vld [vmem:[#allocation15 + $0x298] sm:$0xff]
    %v2039 = vld [vmem:[#allocation15 + $0x2a0] sm:$0xff]
    %v2040 = vld [vmem:[#allocation15 + $0x2a8] sm:$0xff]
    %v2041 = vld [vmem:[#allocation15 + $0x2b0] sm:$0xff]
    %v2042 = vld [vmem:[#allocation15 + $0x2b8] sm:$0xff]
    %v2043 = vld [vmem:[#allocation15 + $0x2c0] sm:$0xff]
    %v2044 = vld [vmem:[#allocation15 + $0x2c8] sm:$0xff]
    %v2045 = vld [vmem:[#allocation15 + $0x2d0] sm:$0xff]
    %v2046 = vld [vmem:[#allocation15 + $0x2d8] sm:$0xff]
    %v2047 = vld [vmem:[#allocation15 + $0x2e0] sm:$0xff]
    %v2048 = vld [vmem:[#allocation15 + $0x2e8] sm:$0xff]
    %v2049 = vld [vmem:[#allocation15 + $0x2f0] sm:$0xff]
    %v2050 = vld [vmem:[#allocation15 + $0x2f8] sm:$0xff]
    %v2051 = vld [vmem:[#allocation15 + $0x300] sm:$0xff]
    %v2052 = vld [vmem:[#allocation15 + $0x308] sm:$0xff]
    %v2053 = vld [vmem:[#allocation15 + $0x310] sm:$0xff]
    %v2054 = vld [vmem:[#allocation15 + $0x318] sm:$0xff]
    %v2055 = vld [vmem:[#allocation15 + $0x320] sm:$0xff]
    %v2056 = vld [vmem:[#allocation15 + $0x328] sm:$0xff]
    %v2057 = vld [vmem:[#allocation15 + $0x330] sm:$0xff]
    %v2058 = vld [vmem:[#allocation15 + $0x338] sm:$0xff]
    %v2059 = vld [vmem:[#allocation15 + $0x340] sm:$0xff]
    %v2060 = vld [vmem:[#allocation15 + $0x348] sm:$0xff]
    %v2061 = vld [vmem:[#allocation15 + $0x350] sm:$0xff]
    %v2062 = vld [vmem:[#allocation15 + $0x358] sm:$0xff]
    %v2063 = vld [vmem:[#allocation15 + $0x360] sm:$0xff]
    %v2064 = vld [vmem:[#allocation15 + $0x368] sm:$0xff]
    %v2065 = vld [vmem:[#allocation15 + $0x370] sm:$0xff]
    %v2066 = vld [vmem:[#allocation15 + $0x378] sm:$0xff]
    %v2067 = vld [vmem:[#allocation15 + $0x380] sm:$0xff]
    %v2068 = vld [vmem:[#allocation15 + $0x388] sm:$0xff]
    %v2069 = vld [vmem:[#allocation15 + $0x390] sm:$0xff]
    %v2070 = vld [vmem:[#allocation15 + $0x398] sm:$0xff]
    %v2071 = vld [vmem:[#allocation15 + $0x3a0] sm:$0xff]
    %v2072 = vld [vmem:[#allocation15 + $0x3a8] sm:$0xff]
    %v2073 = vld [vmem:[#allocation15 + $0x3b0] sm:$0xff]
    %v2074 = vld [vmem:[#allocation15 + $0x3b8] sm:$0xff]
    %v2075 = vld [vmem:[#allocation15 + $0x3c0] sm:$0xff]
    %v2076 = vld [vmem:[#allocation15 + $0x3c8] sm:$0xff]
    %v2077 = vld [vmem:[#allocation15 + $0x3d0] sm:$0xff]
    %v2078 = vld [vmem:[#allocation15 + $0x3d8] sm:$0xff]
    %v2079 = vld [vmem:[#allocation15 + $0x3e0] sm:$0xff]
    %v2080 = vld [vmem:[#allocation15 + $0x3e8] sm:$0xff]
    %v2081 = vld [vmem:[#allocation15 + $0x3f0] sm:$0xff]
    %v2082 = vld [vmem:[#allocation15 + $0x3f8] sm:$0xff]
    %v2083 = vld [vmem:[#allocation15 + $0x400] sm:$0xff]
    %v2084 = vld [vmem:[#allocation15 + $0x408] sm:$0xff]
    %v2085 = vld [vmem:[#allocation15 + $0x410] sm:$0xff]
    %v2086 = vld [vmem:[#allocation15 + $0x418] sm:$0xff]
    %v2087 = vld [vmem:[#allocation15 + $0x420] sm:$0xff]
    %v2088 = vld [vmem:[#allocation15 + $0x428] sm:$0xff]
    %v2089 = vld [vmem:[#allocation15 + $0x430] sm:$0xff]
    %v2090 = vld [vmem:[#allocation15 + $0x438] sm:$0xff]
    %v2091 = vld [vmem:[#allocation15 + $0x440] sm:$0xff]
    %v2092 = vld [vmem:[#allocation15 + $0x448] sm:$0xff]
    %v2093 = vld [vmem:[#allocation15 + $0x450] sm:$0xff]
    %v2094 = vld [vmem:[#allocation15 + $0x458] sm:$0xff]
    %v2095 = vld [vmem:[#allocation15 + $0x460] sm:$0xff]
    %v2096 = vld [vmem:[#allocation15 + $0x468] sm:$0xff]
    %v2097 = vld [vmem:[#allocation15 + $0x470] sm:$0xff]
    %v2098 = vld [vmem:[#allocation15 + $0x478] sm:$0xff]
    %v2099 = vld [vmem:[#allocation15 + $0x480] sm:$0xff]
    %v2100 = vld [vmem:[#allocation15 + $0x488] sm:$0xff]
    %v2101 = vld [vmem:[#allocation15 + $0x490] sm:$0xff]
    %v2102 = vld [vmem:[#allocation15 + $0x498] sm:$0xff]
    %v2103 = vld [vmem:[#allocation15 + $0x4a0] sm:$0xff]
    %v2104 = vld [vmem:[#allocation15 + $0x4a8] sm:$0xff]
    %v2105 = vld [vmem:[#allocation15 + $0x4b0] sm:$0xff]
    %v2106 = vld [vmem:[#allocation15 + $0x4b8] sm:$0xff]
    %v2107 = vld [vmem:[#allocation15 + $0x4c0] sm:$0xff]
    %v2108 = vld [vmem:[#allocation15 + $0x4c8] sm:$0xff]
    %v2109 = vld [vmem:[#allocation15 + $0x4d0] sm:$0xff]
    %v2110 = vld [vmem:[#allocation15 + $0x4d8] sm:$0xff]
    %v2111 = vld [vmem:[#allocation15 + $0x4e0] sm:$0xff]
    %v2112 = vld [vmem:[#allocation15 + $0x4e8] sm:$0xff]
    %v2113 = vld [vmem:[#allocation15 + $0x4f0] sm:$0xff]
    %v2114 = vld [vmem:[#allocation15 + $0x4f8] sm:$0xff]
    %v2115 = vld [vmem:[#allocation15 + $0x500] sm:$0xff]
    %v2116 = vld [vmem:[#allocation15 + $0x508] sm:$0xff]
    %v2117 = vld [vmem:[#allocation15 + $0x510] sm:$0xff]
    %v2118 = vld [vmem:[#allocation15 + $0x518] sm:$0xff]
    %v2119 = vld [vmem:[#allocation15 + $0x520] sm:$0xff]
    %v2120 = vld [vmem:[#allocation15 + $0x528] sm:$0xff]
    %v2121 = vld [vmem:[#allocation15 + $0x530] sm:$0xff]
    %v2122 = vld [vmem:[#allocation15 + $0x538] sm:$0xff]
    %v2123 = vld [vmem:[#allocation15 + $0x540] sm:$0xff]
    %v2124 = vld [vmem:[#allocation15 + $0x548] sm:$0xff]
    %v2125 = vld [vmem:[#allocation15 + $0x550] sm:$0xff]
    %v2126 = vld [vmem:[#allocation15 + $0x558] sm:$0xff]
    %v2127 = vld [vmem:[#allocation15 + $0x560] sm:$0xff]
    %v2128 = vld [vmem:[#allocation15 + $0x568] sm:$0xff]
    %v2129 = vld [vmem:[#allocation15 + $0x570] sm:$0xff]
    %v2130 = vld [vmem:[#allocation15 + $0x578] sm:$0xff]
    %v2131 = vld [vmem:[#allocation15 + $0x580] sm:$0xff]
    %v2132 = vld [vmem:[#allocation15 + $0x588] sm:$0xff]
    %v2133 = vld [vmem:[#allocation15 + $0x590] sm:$0xff]
    %v2134 = vld [vmem:[#allocation15 + $0x598] sm:$0xff]
    %v2135 = vld [vmem:[#allocation15 + $0x5a0] sm:$0xff]
    %v2136 = vld [vmem:[#allocation15 + $0x5a8] sm:$0xff]
    %v2137 = vld [vmem:[#allocation15 + $0x5b0] sm:$0xff]
    %v2138 = vld [vmem:[#allocation15 + $0x5b8] sm:$0xff]
    %v2139 = vld [vmem:[#allocation15 + $0x5c0] sm:$0xff]
    %v2140 = vld [vmem:[#allocation15 + $0x5c8] sm:$0xff]
    %v2141 = vld [vmem:[#allocation15 + $0x5d0] sm:$0xff]
    %v2142 = vld [vmem:[#allocation15 + $0x5d8] sm:$0xff]
    %v2143 = vld [vmem:[#allocation15 + $0x5e0] sm:$0xff]
    %v2144 = vld [vmem:[#allocation15 + $0x5e8] sm:$0xff]
    %v2145 = vld [vmem:[#allocation15 + $0x5f0] sm:$0xff]
    %v2146 = vld [vmem:[#allocation15 + $0x5f8] sm:$0xff]
    %v2147 = vld [vmem:[#allocation15 + $0x600] sm:$0xff]
    %v2148 = vld [vmem:[#allocation15 + $0x608] sm:$0xff]
    %v2149 = vld [vmem:[#allocation15 + $0x610] sm:$0xff]
    %v2150 = vld [vmem:[#allocation15 + $0x618] sm:$0xff]
    %v2151 = vld [vmem:[#allocation15 + $0x620] sm:$0xff]
    %v2152 = vld [vmem:[#allocation15 + $0x628] sm:$0xff]
    %v2153 = vld [vmem:[#allocation15 + $0x630] sm:$0xff]
    %v2154 = vld [vmem:[#allocation15 + $0x638] sm:$0xff]
    %v2155 = vld [vmem:[#allocation15 + $0x640] sm:$0xff]
    %v2156 = vld [vmem:[#allocation15 + $0x648] sm:$0xff]
    %v2157 = vld [vmem:[#allocation15 + $0x650] sm:$0xff]
    %v2158 = vld [vmem:[#allocation15 + $0x658] sm:$0xff]
    %v2159 = vld [vmem:[#allocation15 + $0x660] sm:$0xff]
    %v2160 = vld [vmem:[#allocation15 + $0x668] sm:$0xff]
    %v2161 = vld [vmem:[#allocation15 + $0x670] sm:$0xff]
    %v2162 = vld [vmem:[#allocation15 + $0x678] sm:$0xff]
    %2163 = vmatpush.msra.mxu0 %v1970
    %2164 = vmatpush.msra.mxu0 %v1969
    %2165 = vmatpush.msra.mxu0 %v1968
    %2166 = vmatpush.msra.mxu0 %v1967
    %2167 = vmatpush.msra.mxu0 %v1966
    %2168 = vmatpush.msra.mxu0 %v1965
    %2169 = vmatpush.msra.mxu0 %v1964
    %2170 = vmatpush.msra.mxu0 %v1963
    %2171 = vmatpush.msra.mxu0 %v1962
    %2172 = vmatpush.msra.mxu0 %v1961
    %2173 = vmatpush.msra.mxu0 %v1960
    %2174 = vmatpush.msra.mxu0 %v1959
    %2175 = vmatpush.msra.mxu0 %v1958
    %2176 = vmatpush.msra.mxu0 %v1957
    %2177 = vmatpush.msra.mxu0 %v1956
    %2178 = vmatpush.msra.mxu0 %v1955
    %2179 = vmatmul.f32.gmra.mxu0 %v1942
    %v2180 = vpop.f32.mrf.mxu0
    %v2181 = vadd.f32 0.0, %v2180
    %2182 = vdwg.mxu0
    %2183 = vmatpush.msra.mxu0 %v1986
    %2184 = vmatpush.msra.mxu0 %v1985
    %2185 = vmatpush.msra.mxu0 %v1984
    %2186 = vmatpush.msra.mxu0 %v1983
    %2187 = vmatpush.msra.mxu0 %v1982
    %2188 = vmatpush.msra.mxu0 %v1981
    %2189 = vmatpush.msra.mxu0 %v1980
    %2190 = vmatpush.msra.mxu0 %v1979
    %2191 = vmatpush.msra.mxu0 %v1978
    %2192 = vmatpush.msra.mxu0 %v1977
    %2193 = vmatpush.msra.mxu0 %v1976
    %2194 = vmatpush.msra.mxu0 %v1975
    %2195 = vmatpush.msra.mxu0 %v1974
    %2196 = vmatpush.msra.mxu0 %v1973
    %2197 = vmatpush.msra.mxu0 %v1972
    %2198 = vmatpush.msra.mxu0 %v1971
    %2199 = vmatmul.f32.gmra.mxu0 %v1943
    %v2200 = vpop.f32.mrf.mxu0
    %v2201 = vadd.f32 %v2181, %v2200
    %2202 = vdwg.mxu0
    %2203 = vmatpush.msra.mxu0 %v2002
    %2204 = vmatpush.msra.mxu0 %v2001
    %2205 = vmatpush.msra.mxu0 %v2000
    %2206 = vmatpush.msra.mxu0 %v1999
    %2207 = vmatpush.msra.mxu0 %v1998
    %2208 = vmatpush.msra.mxu0 %v1997
    %2209 = vmatpush.msra.mxu0 %v1996
    %2210 = vmatpush.msra.mxu0 %v1995
    %2211 = vmatpush.msra.mxu0 %v1994
    %2212 = vmatpush.msra.mxu0 %v1993
    %2213 = vmatpush.msra.mxu0 %v1992
    %2214 = vmatpush.msra.mxu0 %v1991
    %2215 = vmatpush.msra.mxu0 %v1990
    %2216 = vmatpush.msra.mxu0 %v1989
    %2217 = vmatpush.msra.mxu0 %v1988
    %2218 = vmatpush.msra.mxu0 %v1987
    %2219 = vmatmul.f32.gmra.mxu0 %v1944
    %v2220 = vpop.f32.mrf.mxu0
    %v2221 = vadd.f32 %v2201, %v2220
    %2222 = vdwg.mxu0
    %2223 = vmatpush.msra.mxu0 %v2018
    %2224 = vmatpush.msra.mxu0 %v2017
    %2225 = vmatpush.msra.mxu0 %v2016
    %2226 = vmatpush.msra.mxu0 %v2015
    %2227 = vmatpush.msra.mxu0 %v2014
    %2228 = vmatpush.msra.mxu0 %v2013
    %2229 = vmatpush.msra.mxu0 %v2012
    %2230 = vmatpush.msra.mxu0 %v2011
    %2231 = vmatpush.msra.mxu0 %v2010
    %2232 = vmatpush.msra.mxu0 %v2009
    %2233 = vmatpush.msra.mxu0 %v2008
    %2234 = vmatpush.msra.mxu0 %v2007
    %2235 = vmatpush.msra.mxu0 %v2006
    %2236 = vmatpush.msra.mxu0 %v2005
    %2237 = vmatpush.msra.mxu0 %v2004
    %2238 = vmatpush.msra.mxu0 %v2003
    %2239 = vmatmul.f32.gmra.mxu0 %v1945
    %v2240 = vpop.f32.mrf.mxu0
    %v2241 = vadd.f32 %v2221, %v2240
    %2242 = vdwg.mxu0
    %2243 = vmatpush.msra.mxu0 %v2034
    %2244 = vmatpush.msra.mxu0 %v2033
    %2245 = vmatpush.msra.mxu0 %v2032
    %2246 = vmatpush.msra.mxu0 %v2031
    %2247 = vmatpush.msra.mxu0 %v2030
    %2248 = vmatpush.msra.mxu0 %v2029
    %2249 = vmatpush.msra.mxu0 %v2028
    %2250 = vmatpush.msra.mxu0 %v2027
    %2251 = vmatpush.msra.mxu0 %v2026
    %2252 = vmatpush.msra.mxu0 %v2025
    %2253 = vmatpush.msra.mxu0 %v2024
    %2254 = vmatpush.msra.mxu0 %v2023
    %2255 = vmatpush.msra.mxu0 %v2022
    %2256 = vmatpush.msra.mxu0 %v2021
    %2257 = vmatpush.msra.mxu0 %v2020
    %2258 = vmatpush.msra.mxu0 %v2019
    %2259 = vmatmul.f32.gmra.mxu0 %v1946
    %v2260 = vpop.f32.mrf.mxu0
    %v2261 = vadd.f32 %v2241, %v2260
    %2262 = vdwg.mxu0
    %2263 = vmatpush.msra.mxu0 %v2050
    %2264 = vmatpush.msra.mxu0 %v2049
    %2265 = vmatpush.msra.mxu0 %v2048
    %2266 = vmatpush.msra.mxu0 %v2047
    %2267 = vmatpush.msra.mxu0 %v2046
    %2268 = vmatpush.msra.mxu0 %v2045
    %2269 = vmatpush.msra.mxu0 %v2044
    %2270 = vmatpush.msra.mxu0 %v2043
    %2271 = vmatpush.msra.mxu0 %v2042
    %2272 = vmatpush.msra.mxu0 %v2041
    %2273 = vmatpush.msra.mxu0 %v2040
    %2274 = vmatpush.msra.mxu0 %v2039
    %2275 = vmatpush.msra.mxu0 %v2038
    %2276 = vmatpush.msra.mxu0 %v2037
    %2277 = vmatpush.msra.mxu0 %v2036
    %2278 = vmatpush.msra.mxu0 %v2035
    %2279 = vmatmul.f32.gmra.mxu0 %v1947
    %v2280 = vpop.f32.mrf.mxu0
    %v2281 = vadd.f32 %v2261, %v2280
    %2282 = vdwg.mxu0
    %2283 = vmatpush.msra.mxu0 %v2066
    %2284 = vmatpush.msra.mxu0 %v2065
    %2285 = vmatpush.msra.mxu0 %v2064
    %2286 = vmatpush.msra.mxu0 %v2063
    %2287 = vmatpush.msra.mxu0 %v2062
    %2288 = vmatpush.msra.mxu0 %v2061
    %2289 = vmatpush.msra.mxu0 %v2060
    %2290 = vmatpush.msra.mxu0 %v2059
    %2291 = vmatpush.msra.mxu0 %v2058
    %2292 = vmatpush.msra.mxu0 %v2057
    %2293 = vmatpush.msra.mxu0 %v2056
    %2294 = vmatpush.msra.mxu0 %v2055
    %2295 = vmatpush.msra.mxu0 %v2054
    %2296 = vmatpush.msra.mxu0 %v2053
    %2297 = vmatpush.msra.mxu0 %v2052
    %2298 = vmatpush.msra.mxu0 %v2051
    %2299 = vmatmul.f32.gmra.mxu0 %v1948
    %v2300 = vpop.f32.mrf.mxu0
    %v2301 = vadd.f32 %v2281, %v2300
    %2302 = vdwg.mxu0
    %2303 = vmatpush.msra.mxu0 %v2082
    %2304 = vmatpush.msra.mxu0 %v2081
    %2305 = vmatpush.msra.mxu0 %v2080
    %2306 = vmatpush.msra.mxu0 %v2079
    %2307 = vmatpush.msra.mxu0 %v2078
    %2308 = vmatpush.msra.mxu0 %v2077
    %2309 = vmatpush.msra.mxu0 %v2076
    %2310 = vmatpush.msra.mxu0 %v2075
    %2311 = vmatpush.msra.mxu0 %v2074
    %2312 = vmatpush.msra.mxu0 %v2073
    %2313 = vmatpush.msra.mxu0 %v2072
    %2314 = vmatpush.msra.mxu0 %v2071
    %2315 = vmatpush.msra.mxu0 %v2070
    %2316 = vmatpush.msra.mxu0 %v2069
    %2317 = vmatpush.msra.mxu0 %v2068
    %2318 = vmatpush.msra.mxu0 %v2067
    %2319 = vmatmul.f32.gmra.mxu0 %v1949
    %v2320 = vpop.f32.mrf.mxu0
    %v2321 = vadd.f32 %v2301, %v2320
    %2322 = vdwg.mxu0
    %2323 = vmatpush.msra.mxu0 %v2098
    %2324 = vmatpush.msra.mxu0 %v2097
    %2325 = vmatpush.msra.mxu0 %v2096
    %2326 = vmatpush.msra.mxu0 %v2095
    %2327 = vmatpush.msra.mxu0 %v2094
    %2328 = vmatpush.msra.mxu0 %v2093
    %2329 = vmatpush.msra.mxu0 %v2092
    %2330 = vmatpush.msra.mxu0 %v2091
    %2331 = vmatpush.msra.mxu0 %v2090
    %2332 = vmatpush.msra.mxu0 %v2089
    %2333 = vmatpush.msra.mxu0 %v2088
    %2334 = vmatpush.msra.mxu0 %v2087
    %2335 = vmatpush.msra.mxu0 %v2086
    %2336 = vmatpush.msra.mxu0 %v2085
    %2337 = vmatpush.msra.mxu0 %v2084
    %2338 = vmatpush.msra.mxu0 %v2083
    %2339 = vmatmul.f32.gmra.mxu0 %v1950
    %v2340 = vpop.f32.mrf.mxu0
    %v2341 = vadd.f32 %v2321, %v2340
    %2342 = vdwg.mxu0
    %2343 = vmatpush.msra.mxu0 %v2114
    %2344 = vmatpush.msra.mxu0 %v2113
    %2345 = vmatpush.msra.mxu0 %v2112
    %2346 = vmatpush.msra.mxu0 %v2111
    %2347 = vmatpush.msra.mxu0 %v2110
    %2348 = vmatpush.msra.mxu0 %v2109
    %2349 = vmatpush.msra.mxu0 %v2108
    %2350 = vmatpush.msra.mxu0 %v2107
    %2351 = vmatpush.msra.mxu0 %v2106
    %2352 = vmatpush.msra.mxu0 %v2105
    %2353 = vmatpush.msra.mxu0 %v2104
    %2354 = vmatpush.msra.mxu0 %v2103
    %2355 = vmatpush.msra.mxu0 %v2102
    %2356 = vmatpush.msra.mxu0 %v2101
    %2357 = vmatpush.msra.mxu0 %v2100
    %2358 = vmatpush.msra.mxu0 %v2099
    %2359 = vmatmul.f32.gmra.mxu0 %v1951
    %v2360 = vpop.f32.mrf.mxu0
    %v2361 = vadd.f32 %v2341, %v2360
    %2362 = vdwg.mxu0
    %2363 = vmatpush.msra.mxu0 %v2130
    %2364 = vmatpush.msra.mxu0 %v2129
    %2365 = vmatpush.msra.mxu0 %v2128
    %2366 = vmatpush.msra.mxu0 %v2127
    %2367 = vmatpush.msra.mxu0 %v2126
    %2368 = vmatpush.msra.mxu0 %v2125
    %2369 = vmatpush.msra.mxu0 %v2124
    %2370 = vmatpush.msra.mxu0 %v2123
    %2371 = vmatpush.msra.mxu0 %v2122
    %2372 = vmatpush.msra.mxu0 %v2121
    %2373 = vmatpush.msra.mxu0 %v2120
    %2374 = vmatpush.msra.mxu0 %v2119
    %2375 = vmatpush.msra.mxu0 %v2118
    %2376 = vmatpush.msra.mxu0 %v2117
    %2377 = vmatpush.msra.mxu0 %v2116
    %2378 = vmatpush.msra.mxu0 %v2115
    %2379 = vmatmul.f32.gmra.mxu0 %v1952
    %v2380 = vpop.f32.mrf.mxu0
    %v2381 = vadd.f32 %v2361, %v2380
    %2382 = vdwg.mxu0
    %2383 = vmatpush.msra.mxu0 %v2146
    %2384 = vmatpush.msra.mxu0 %v2145
    %2385 = vmatpush.msra.mxu0 %v2144
    %2386 = vmatpush.msra.mxu0 %v2143
    %2387 = vmatpush.msra.mxu0 %v2142
    %2388 = vmatpush.msra.mxu0 %v2141
    %2389 = vmatpush.msra.mxu0 %v2140
    %2390 = vmatpush.msra.mxu0 %v2139
    %2391 = vmatpush.msra.mxu0 %v2138
    %2392 = vmatpush.msra.mxu0 %v2137
    %2393 = vmatpush.msra.mxu0 %v2136
    %2394 = vmatpush.msra.mxu0 %v2135
    %2395 = vmatpush.msra.mxu0 %v2134
    %2396 = vmatpush.msra.mxu0 %v2133
    %2397 = vmatpush.msra.mxu0 %v2132
    %2398 = vmatpush.msra.mxu0 %v2131
    %2399 = vmatmul.f32.gmra.mxu0 %v1953
    %v2400 = vpop.f32.mrf.mxu0
    %v2401 = vadd.f32 %v2381, %v2400
    %2402 = vdwg.mxu0
    %2403 = vmatpush.msra.mxu0 %v2162
    %2404 = vmatpush.msra.mxu0 %v2161
    %2405 = vmatpush.msra.mxu0 %v2160
    %2406 = vmatpush.msra.mxu0 %v2159
    %2407 = vmatpush.msra.mxu0 %v2158
    %2408 = vmatpush.msra.mxu0 %v2157
    %2409 = vmatpush.msra.mxu0 %v2156
    %2410 = vmatpush.msra.mxu0 %v2155
    %2411 = vmatpush.msra.mxu0 %v2154
    %2412 = vmatpush.msra.mxu0 %v2153
    %2413 = vmatpush.msra.mxu0 %v2152
    %2414 = vmatpush.msra.mxu0 %v2151
    %2415 = vmatpush.msra.mxu0 %v2150
    %2416 = vmatpush.msra.mxu0 %v2149
    %2417 = vmatpush.msra.mxu0 %v2148
    %2418 = vmatpush.msra.mxu0 %v2147
    %2419 = vmatmul.f32.gmra.mxu0 %v1954
    %v2420 = vpop.f32.mrf.mxu0
    %v2421 = vadd.f32 %v2401, %v2420
    %2422 = vdwg.mxu0
    %2423 = vst [vmem:[#allocation16] sm:$0xff] %v2421
    // Predicated region
    $region58: #{tpu_custom_call.1} parent=1 // pred_check
      _
    $region59: #{tpu_custom_call.1} parent=1 // pred_check_branch
      %2425 = sbr.rel (0) target = $region61
    $region60: #{tpu_custom_call.1} parent=1 // pred_region
      %2427 = vsyncadd [#allocation6], 0
      %s2429 = sshll.u32 [#allocation16], 4
      %s2430 = int_to_ptr.vmem [resolvable:$true] %s2429
      %s2431 = sshll.u32 %s7, 4
      %s2432 = int_to_ptr.hbm [resolvable:$true] %s2431
      %2434 = dma.vmem_to_hbm [thread:$0]  %s2430, 128, %s2432, [#allocation6]
    $region61: #{tpu_custom_call.1} parent=1 // pred_fallthru
      _
    // Predicated region
    $region62: #{tpu_custom_call.1} parent=1 // pred_check
      _
    $region63: #{tpu_custom_call.1} parent=1 // pred_check_branch
      %2436 = sbr.rel (0) target = $region65
    $region64: #{tpu_custom_call.1} parent=1 // pred_region
      %2438 = dma.done [#allocation6], 128
    $region65: #{tpu_custom_call.1} parent=1 // pred_fallthru
      _
    %2439 = vsyncpa [#allocation5], 1
    %2440 = vsyncpa [#allocation8], 1
    %2441 = vsyncpa [#allocation11], 1
    %2442 = vsyncpa [#allocation14], 1
    %2443 = vsyncpa [#allocation6], 1

</llo_original>
